<compile_context>
chip_gen: v7x
topology: tpu7x:2x2x1
jax: 0.10.0
libtpu: 0.0.40
codegen_flags: <defaults>
</compile_context>

<pallas_src>
import functools

import jax
import jax.numpy as jnp
from jax.experimental import pallas as pl
from jax.experimental.pallas import tpu as pltpu

# ---------------------------------------------------------------------------
# Config (small, but shape-consistent with an ELECTRA-style Longformer)
# ---------------------------------------------------------------------------
CFG = dict(
    vocab_size=100,
    hidden=32,
    num_heads=4,
    intermediate=64,
    num_layers=2,
    max_pos=128 * 8,        # max_position_embeddings * 8 (conversion repeats pos emb 8x)
    type_vocab=2,
    attention_window=8,
    num_labels=3,
    pad_token_id=0,
    layer_norm_eps=1e-12,
)

NL_PAD = 128   # lane-dense classifier output width (real logits in lanes [0, num_labels))
CLS_ROWS = 8   # sublane-dense classifier tile height (CLS token is row 0)


# ---------------------------------------------------------------------------
# Single fused Pallas kernel: grid = (batch [parallel], layer [arbitrary])
# ---------------------------------------------------------------------------
def _model_kernel(
    # --- inputs ---
    emb_ref,            # (1, S, D)  f32   pre-LN embedding sum       (index = b)
    kb_ref,             # (1, 1, S)  f32   key-padding bias 0/-1e9    (index = b)
    eg_ref, eb_ref,     # (1, D)     f32   embedding LayerNorm gamma / beta
    wq_ref, bq_ref,     # (1, D, D) bf16 / (1, 1, D) f32  (1/sqrt(Dh) folded in)
    wk_ref, bk_ref,     # (1, D, D) bf16 / (1, 1, D) f32
    wv_ref, bv_ref,     # (1, D, D) bf16 / (1, 1, D) f32
    woh_ref, bo_ref,    # (1, H, Dh, D) bf16 / (1, 1, D) f32
    g1_ref, b1_ref,     # (1, 1, D) f32
    wi_ref, bi_ref,     # (1, D, I) bf16 / (1, 1, I) f32
    wo2_ref, bo2_ref,   # (1, I, D) bf16 / (1, 1, D) f32
    g2_ref, b2_ref,     # (1, 1, D) f32
    cw_ref, cb_ref,     # (D, D) f32 / (1, D) f32        classifier dense
    ow_ref, ob_ref,     # (D, NL_PAD) f32 / (1, NL_PAD)  classifier out_proj (lane-padded)
    # --- output ---
    logits_ref,         # (1, CLS_ROWS, NL_PAD)
    # --- scratch ---
    x_scr,              # VMEM (S, D) f32 : hidden state, resident across layers
    mask_scr,           # VMEM (S, S) f32 : band|global + key-padding bias (layer-invariant)
    *, S, H, Dh, L, eps, one_sided):

    l = pl.program_id(1)

    def ln(x, g, b):
        m = jnp.mean(x, axis=-1, keepdims=True)
        d = x - m
        var = jnp.mean(d * d, axis=-1, keepdims=True)
        return d * jax.lax.rsqrt(var + eps) * g + b

    # ---- first layer step for this batch element: embedding LN + mask build ----
    @pl.when(l == 0)
    def _():
        x_scr[...] = ln(emb_ref[0].astype(jnp.float32), eg_ref[...], eb_ref[...])
        # layer-invariant Longformer mask, built once per batch element
        qi = jax.lax.broadcasted_iota(jnp.int32, (S, S), 0)
        ki = jax.lax.broadcasted_iota(jnp.int32, (S, S), 1)
        band = ((ki - qi) <= one_sided) & ((qi - ki) <= one_sided)   # sliding window
        glob = (qi == 0) | (ki == 0)                                 # CLS global row/col
        geo = jnp.where(band | glob, 0.0, -1e9).astype(jnp.float32)  # (S, S)
        mask_scr[...] = geo + kb_ref[0]                              # + (1, S) key padding
        # TODO(synk): HF Longformer's chunked implementation can double-count a
        #             global key that also lies inside a query's local window;
        #             not reproduced here.

    x = x_scr[...]                                                   # (S, D) f32
    xb = x.astype(jnp.bfloat16)

    # ---- Q/K/V projections (bf16 operands, f32 accumulate, scale folded in) ----
    q = jnp.dot(xb, wq_ref[0], preferred_element_type=jnp.float32) + bq_ref[0]
    k = jnp.dot(xb, wk_ref[0], preferred_element_type=jnp.float32) + bk_ref[0]
    v = jnp.dot(xb, wv_ref[0], preferred_element_type=jnp.float32) + bv_ref[0]

    # head-batched layout (H, S, Dh): one relayout per tensor instead of
    # per-head 8-lane slicing inside an unrolled loop.
    qh = jnp.swapaxes(q.reshape(S, H, Dh), 0, 1).astype(jnp.bfloat16)
    kh = jnp.swapaxes(k.reshape(S, H, Dh), 0, 1).astype(jnp.bfloat16)
    vh = jnp.swapaxes(v.reshape(S, H, Dh), 0, 1).astype(jnp.bfloat16)

    # ---- attention: batched over heads ----
    s = jnp.einsum('hqd,hkd->hqk', qh, kh,
                   preferred_element_type=jnp.float32)               # (H, S, S)
    s = s + mask_scr[...]                                            # broadcast over H
    m = jnp.max(s, axis=-1, keepdims=True)
    p = jnp.exp(s - m)
    p = p * pl.reciprocal(jnp.sum(p, axis=-1, keepdims=True), approx=True)

    ctx = jnp.einsum('hqk,hkd->hqd', p.astype(jnp.bfloat16), vh,
                     preferred_element_type=jnp.float32)             # (H, S, Dh)

    # per-head output projection folded in (no head concat): sum_h ctx_h @ Wo_h
    proj = jnp.einsum('hqd,hdf->hqf', ctx.astype(jnp.bfloat16), woh_ref[0],
                      preferred_element_type=jnp.float32)            # (H, S, D)
    attn = jnp.sum(proj, axis=0) + bo_ref[0]                         # (S, D)

    # ---- residual + LN (f32) ----
    x = ln(attn + x, g1_ref[0], b1_ref[0])

    # ---- FFN: dense + GELU + dense + residual + LN ----
    inter = jnp.dot(x.astype(jnp.bfloat16), wi_ref[0],
                    preferred_element_type=jnp.float32) + bi_ref[0]
    # TODO(synk): HF default is exact erf-GELU; tanh approximation used here.
    inter = 0.5 * inter * (1.0 + jnp.tanh(
        0.7978845608028654 * (inter + 0.044715 * inter * inter * inter)))
    ffn = jnp.dot(inter.astype(jnp.bfloat16), wo2_ref[0],
                  preferred_element_type=jnp.float32) + bo2_ref[0]
    x = ln(ffn + x, g2_ref[0], b2_ref[0])

    x_scr[...] = x                                                   # carry to next layer

    # ---- classification head fused into the last layer step ----
    @pl.when(l == L - 1)
    def _():
        # only the first CLS_ROWS rows (CLS is row 0); output tile is (8, 128)
        # lane/sublane dense -> unmasked stores.  Real logits live in lanes [0, NL).
        xc = x[0:CLS_ROWS, :]
        h = jnp.tanh(jnp.dot(xc, cw_ref[...], preferred_element_type=jnp.float32)
                     + cb_ref[...])
        out = jnp.dot(h, ow_ref[...], preferred_element_type=jnp.float32) + ob_ref[...]
        logits_ref[0] = out.astype(logits_ref.dtype)


# ---------------------------------------------------------------------------
# Parameter init (deterministic, synthetic)
# ---------------------------------------------------------------------------
def init_params(key, cfg):
    D, I, V = cfg["hidden"], cfg["intermediate"], cfg["vocab_size"]

    def nrm(k, shape):
        return (0.02 * jax.random.normal(k, shape)).astype(jnp.float32)

    keys = iter(jax.random.split(key, 256))
    p = dict(
        word_emb=nrm(next(keys), (V, D)),
        pos_emb=nrm(next(keys), (cfg["max_pos"], D)),
        tok_type_emb=nrm(next(keys), (cfg["type_vocab"], D)),
        emb_ln_g=jnp.ones((D,), jnp.float32),
        emb_ln_b=jnp.zeros((D,), jnp.float32),
        cls_dense_w=nrm(next(keys), (D, D)),
        cls_dense_b=jnp.zeros((D,), jnp.float32),
        cls_out_w=nrm(next(keys), (D, cfg["num_labels"])),
        cls_out_b=jnp.zeros((cfg["num_labels"],), jnp.float32),
        layers=[],
    )
    for _ in range(cfg["num_layers"]):
        p["layers"].append(dict(
            wq=nrm(next(keys), (D, D)), bq=jnp.zeros((D,), jnp.float32),
            wk=nrm(next(keys), (D, D)), bk=jnp.zeros((D,), jnp.float32),
            wv=nrm(next(keys), (D, D)), bv=jnp.zeros((D,), jnp.float32),
            wo=nrm(next(keys), (D, D)), bo=jnp.zeros((D,), jnp.float32),
            ln1_g=jnp.ones((D,), jnp.float32), ln1_b=jnp.zeros((D,), jnp.float32),
            wi=nrm(next(keys), (D, I)), bi=jnp.zeros((I,), jnp.float32),
            wo2=nrm(next(keys), (I, D)), bo2=jnp.zeros((D,), jnp.float32),
            ln2_g=jnp.ones((D,), jnp.float32), ln2_b=jnp.zeros((D,), jnp.float32),
        ))
    return p


# ---------------------------------------------------------------------------
# Forward pass: embedding gathers in JAX, everything else in one pallas_call
# ---------------------------------------------------------------------------
def longformer_forward(params, input_ids, attention_mask, cfg):
    B, S = input_ids.shape
    D = cfg["hidden"]
    H = cfg["num_heads"]
    Dh = D // H
    I = cfg["intermediate"]
    L = cfg["num_layers"]
    NL = cfg["num_labels"]
    eps = cfg["layer_norm_eps"]
    pad_id = cfg["pad_token_id"]
    scale = 1.0 / (Dh ** 0.5)
    one_sided = cfg["attention_window"] // 2
    assert D == H * Dh and S >= CLS_ROWS and NL <= NL_PAD

    # --- embeddings (gathers left in plain JAX; RoBERTa-style position ids) ---
    not_pad = (input_ids != pad_id).astype(jnp.int32)
    position_ids = jnp.cumsum(not_pad, axis=1) * not_pad + pad_id
    emb = (params["word_emb"][input_ids]
           + params["pos_emb"][position_ids]
           + params["tok_type_emb"][jnp.zeros_like(input_ids)]).astype(jnp.float32)  # (B,S,D)

    # additive key-padding bias: 0 for real tokens, -1e9 for pads  (B, 1, S)
    key_bias = ((attention_mask.astype(jnp.float32) - 1.0) * 1e9).reshape(B, 1, S)

    # --- per-layer weights stacked along a leading layer axis; bf16 for matmuls ---
    bf = jnp.bfloat16
    lyrs = params["layers"]
    stack = lambda f: jnp.stack([f(ly) for ly in lyrs])
    wq = stack(lambda ly: (ly["wq"] * scale).astype(bf))               # (L,D,D)  scale folded
    bq = stack(lambda ly: (ly["bq"] * scale).reshape(1, D))            # (L,1,D)  f32
    wk = stack(lambda ly: ly["wk"].astype(bf))
    bk = stack(lambda ly: ly["bk"].reshape(1, D))
    wv = stack(lambda ly: ly["wv"].astype(bf))
    bv = stack(lambda ly: ly["bv"].reshape(1, D))
    woh = stack(lambda ly: ly["wo"].reshape(H, Dh, D).astype(bf))      # (L,H,Dh,D)
    bo = stack(lambda ly: ly["bo"].reshape(1, D))
    g1 = stack(lambda ly: ly["ln1_g"].reshape(1, D))
    b1 = stack(lambda ly: ly["ln1_b"].reshape(1, D))
    wi = stack(lambda ly: ly["wi"].astype(bf))                         # (L,D,I)
    bi = stack(lambda ly: ly["bi"].reshape(1, I))
    wo2 = stack(lambda ly: ly["wo2"].astype(bf))                       # (L,I,D)
    bo2 = stack(lambda ly: ly["bo2"].reshape(1, D))
    g2 = stack(lambda ly: ly["ln2_g"].reshape(1, D))
    b2 = stack(lambda ly: ly["ln2_b"].reshape(1, D))

    eg = params["emb_ln_g"].reshape(1, D)
    eb = params["emb_ln_b"].reshape(1, D)
    cw = params["cls_dense_w"]
    cb = params["cls_dense_b"].reshape(1, D)
    # lane-pad out_proj to 128 lanes so the final store is lane-dense
    ow = jnp.zeros((D, NL_PAD), jnp.float32).at[:, :NL].set(params["cls_out_w"])
    ob = jnp.zeros((1, NL_PAD), jnp.float32).at[:, :NL].set(params["cls_out_b"].reshape(1, NL))

    per_batch = lambda b, l: (b, 0, 0)
    const2 = lambda b, l: (0, 0)
    lyr3 = lambda b, l: (l, 0, 0)
    lyr4 = lambda b, l: (l, 0, 0, 0)

    grid_spec = pltpu.PrefetchScalarGridSpec(
        num_scalar_prefetch=0,
        grid=(B, L),                                    # batch parallel, layers serial
        in_specs=[
            pl.BlockSpec((1, S, D), per_batch),         # emb
            pl.BlockSpec((1, 1, S), per_batch),         # key_bias
            pl.BlockSpec((1, D), const2),               # emb LN gamma
            pl.BlockSpec((1, D), const2),               # emb LN beta
            pl.BlockSpec((1, D, D), lyr3),              # wq
            pl.BlockSpec((1, 1, D), lyr3),              # bq
            pl.BlockSpec((1, D, D), lyr3),              # wk
            pl.BlockSpec((1, 1, D), lyr3),              # bk
            pl.BlockSpec((1, D, D), lyr3),              # wv
            pl.BlockSpec((1, 1, D), lyr3),              # bv
            pl.BlockSpec((1, H, Dh, D), lyr4),          # woh
            pl.BlockSpec((1, 1, D), lyr3),              # bo
            pl.BlockSpec((1, 1, D), lyr3),              # ln1 gamma
            pl.BlockSpec((1, 1, D), lyr3),              # ln1 beta
            pl.BlockSpec((1, D, I), lyr3),              # wi
            pl.BlockSpec((1, 1, I), lyr3),              # bi
            pl.BlockSpec((1, I, D), lyr3),              # wo2
            pl.BlockSpec((1, 1, D), lyr3),              # bo2
            pl.BlockSpec((1, 1, D), lyr3),              # ln2 gamma
            pl.BlockSpec((1, 1, D), lyr3),              # ln2 beta
            pl.BlockSpec((D, D), const2),               # cls dense W
            pl.BlockSpec((1, D), const2),               # cls dense b
            pl.BlockSpec((D, NL_PAD), const2),          # out_proj W (lane-padded)
            pl.BlockSpec((1, NL_PAD), const2),          # out_proj b (lane-padded)
        ],
        out_specs=pl.BlockSpec((1, CLS_ROWS, NL_PAD), per_batch),
        scratch_shapes=[pltpu.VMEM((S, D), jnp.float32),     # resident hidden state
                        pltpu.VMEM((S, S), jnp.float32)],    # layer-invariant mask
    )

    logits_pad = pl.pallas_call(
        functools.partial(_model_kernel, S=S, H=H, Dh=Dh, L=L,
                          eps=eps, one_sided=one_sided),
        out_shape=jax.ShapeDtypeStruct((B, CLS_ROWS, NL_PAD), jnp.float32),
        grid_spec=grid_spec,
        compiler_params=pltpu.CompilerParams(
            dimension_semantics=("parallel", "arbitrary")),
    )(emb, key_bias, eg, eb,
      wq, bq, wk, bk, wv, bv, woh, bo, g1, b1, wi, bi, wo2, bo2, g2, b2,
      cw, cb, ow, ob)

    # classification is on the <s>/CLS token (row 0); real logits in lanes [0, NL)
    return logits_pad[:, 0, :NL]


# ---------------------------------------------------------------------------
if __name__ == "__main__":
    key = jax.random.PRNGKey(0)
    k_param, k_ids = jax.random.split(key)

    params = init_params(k_param, CFG)

    B, S = 2, 16   # seq is a multiple of attention_window, so no window padding needed
    input_ids = jax.random.randint(k_ids, (B, S), 1, CFG["vocab_size"], dtype=jnp.int32)
    # pad the tail of the second example to exercise the key-padding mask
    input_ids = input_ids.at[1, 12:].set(CFG["pad_token_id"])
    attention_mask = (input_ids != CFG["pad_token_id"]).astype(jnp.int32)

    fwd = jax.jit(functools.partial(longformer_forward, cfg=CFG))
    logits = fwd(params, input_ids, attention_mask)
    logits = jax.block_until_ready(logits)

    assert logits.shape == (B, CFG["num_labels"])
    assert bool(jnp.all(jnp.isfinite(logits)))
    print("KERNEL_OK")
</pallas_src>

<mosaic_0001>
module attributes {stable_mosaic.version = 11 : i64} {
  func.func @_model_kernel(%arg0: i32, %arg1: i32, %arg2: memref<1x16x32xf32, #tpu.memory_space<vmem>>, %arg3: memref<1x1x16xf32, #tpu.memory_space<vmem>>, %arg4: memref<1x32xf32, #tpu.memory_space<vmem>>, %arg5: memref<1x32xf32, #tpu.memory_space<vmem>>, %arg6: memref<1x32x32xbf16, #tpu.memory_space<vmem>>, %arg7: memref<1x1x32xf32, #tpu.memory_space<vmem>>, %arg8: memref<1x32x32xbf16, #tpu.memory_space<vmem>>, %arg9: memref<1x1x32xf32, #tpu.memory_space<vmem>>, %arg10: memref<1x32x32xbf16, #tpu.memory_space<vmem>>, %arg11: memref<1x1x32xf32, #tpu.memory_space<vmem>>, %arg12: memref<1x4x8x32xbf16, #tpu.memory_space<vmem>>, %arg13: memref<1x1x32xf32, #tpu.memory_space<vmem>>, %arg14: memref<1x1x32xf32, #tpu.memory_space<vmem>>, %arg15: memref<1x1x32xf32, #tpu.memory_space<vmem>>, %arg16: memref<1x32x64xbf16, #tpu.memory_space<vmem>>, %arg17: memref<1x1x64xf32, #tpu.memory_space<vmem>>, %arg18: memref<1x64x32xbf16, #tpu.memory_space<vmem>>, %arg19: memref<1x1x32xf32, #tpu.memory_space<vmem>>, %arg20: memref<1x1x32xf32, #tpu.memory_space<vmem>>, %arg21: memref<1x1x32xf32, #tpu.memory_space<vmem>>, %arg22: memref<32x32xf32, #tpu.memory_space<vmem>>, %arg23: memref<1x32xf32, #tpu.memory_space<vmem>>, %arg24: memref<32x128xf32, #tpu.memory_space<vmem>>, %arg25: memref<1x128xf32, #tpu.memory_space<vmem>>, %arg26: memref<1x8x128xf32, #tpu.memory_space<vmem>>, %arg27: memref<16x32xf32, #tpu.memory_space<vmem>>, %arg28: memref<16x16xf32, #tpu.memory_space<vmem>>) attributes {dimension_semantics = [#tpu.dimension_semantics<parallel>, #tpu.dimension_semantics<arbitrary>], iteration_bounds = array<i64: 2, 2>, scalar_prefetch = 0 : i64, scratch_operands = 2 : i64, tpu.core_type = #tpu.core_type<tc>, window_params = [{transform_indices = @transform_0, window_bounds = array<i64: 1, 16, 32>}, {transform_indices = @transform_1, window_bounds = array<i64: 1, 1, 16>}, {pipeline_mode = #tpu.pipeline_mode<synchronous>, transform_indices = @transform_2, window_bounds = array<i64: 1, 32>}, {pipeline_mode = #tpu.pipeline_mode<synchronous>, transform_indices = @transform_3, window_bounds = array<i64: 1, 32>}, {transform_indices = @transform_4, window_bounds = array<i64: 1, 32, 32>}, {transform_indices = @transform_5, window_bounds = array<i64: 1, 1, 32>}, {transform_indices = @transform_6, window_bounds = array<i64: 1, 32, 32>}, {transform_indices = @transform_7, window_bounds = array<i64: 1, 1, 32>}, {transform_indices = @transform_8, window_bounds = array<i64: 1, 32, 32>}, {transform_indices = @transform_9, window_bounds = array<i64: 1, 1, 32>}, {transform_indices = @transform_10, window_bounds = array<i64: 1, 4, 8, 32>}, {transform_indices = @transform_11, window_bounds = array<i64: 1, 1, 32>}, {transform_indices = @transform_12, window_bounds = array<i64: 1, 1, 32>}, {transform_indices = @transform_13, window_bounds = array<i64: 1, 1, 32>}, {transform_indices = @transform_14, window_bounds = array<i64: 1, 32, 64>}, {transform_indices = @transform_15, window_bounds = array<i64: 1, 1, 64>}, {transform_indices = @transform_16, window_bounds = array<i64: 1, 64, 32>}, {transform_indices = @transform_17, window_bounds = array<i64: 1, 1, 32>}, {transform_indices = @transform_18, window_bounds = array<i64: 1, 1, 32>}, {transform_indices = @transform_19, window_bounds = array<i64: 1, 1, 32>}, {pipeline_mode = #tpu.pipeline_mode<synchronous>, transform_indices = @transform_20, window_bounds = array<i64: 32, 32>}, {pipeline_mode = #tpu.pipeline_mode<synchronous>, transform_indices = @transform_21, window_bounds = array<i64: 1, 32>}, {pipeline_mode = #tpu.pipeline_mode<synchronous>, transform_indices = @transform_22, window_bounds = array<i64: 32, 128>}, {pipeline_mode = #tpu.pipeline_mode<synchronous>, transform_indices = @transform_23, window_bounds = array<i64: 1, 128>}, {transform_indices = @transform_24, window_bounds = array<i64: 1, 8, 128>}]} {
    %c0_i32 = arith.constant 0 : i32
    %0 = arith.cmpi eq, %arg1, %c0_i32 : i32
    %1 = arith.extui %0 : i1 to i32
    %c0_i32_0 = arith.constant 0 : i32
    %2 = arith.cmpi ne, %1, %c0_i32_0 : i32
    scf.if %2 {
      %c0_80 = arith.constant 0 : index
      %c0_81 = arith.constant 0 : index
      %c0_82 = arith.constant 0 : index
      %144 = vector.load %arg2[%c0_80, %c0_81, %c0_82] : memref<1x16x32xf32, #tpu.memory_space<vmem>>, vector<1x16x32xf32>
      %145 = vector.shape_cast %144 : vector<1x16x32xf32> to vector<16x32xf32>
      %c0_83 = arith.constant 0 : index
      %c0_84 = arith.constant 0 : index
      %146 = vector.load %arg4[%c0_83, %c0_84] : memref<1x32xf32, #tpu.memory_space<vmem>>, vector<1x32xf32>
      %c0_85 = arith.constant 0 : index
      %c0_86 = arith.constant 0 : index
      %147 = vector.load %arg5[%c0_85, %c0_86] : memref<1x32xf32, #tpu.memory_space<vmem>>, vector<1x32xf32>
      %cst_87 = arith.constant dense<0.000000e+00> : vector<16xf32>
      %148 = vector.multi_reduction <add>, %145, %cst_87 [1] : vector<16x32xf32> to vector<16xf32>
      %149 = vector.shape_cast %148 : vector<16xf32> to vector<16x1xf32>
      %cst_88 = arith.constant 3.200000e+01 : f32
      %150 = vector.broadcast %cst_88 : f32 to vector<16x1xf32>
      %151 = arith.divf %149, %150 : vector<16x1xf32>
      %152 = vector.broadcast %151 : vector<16x1xf32> to vector<16x32xf32>
      %153 = arith.subf %145, %152 : vector<16x32xf32>
      %154 = arith.mulf %153, %153 : vector<16x32xf32>
      %cst_89 = arith.constant dense<0.000000e+00> : vector<16xf32>
      %155 = vector.multi_reduction <add>, %154, %cst_89 [1] : vector<16x32xf32> to vector<16xf32>
      %156 = vector.shape_cast %155 : vector<16xf32> to vector<16x1xf32>
      %cst_90 = arith.constant 3.200000e+01 : f32
      %157 = vector.broadcast %cst_90 : f32 to vector<16x1xf32>
      %158 = arith.divf %156, %157 : vector<16x1xf32>
      %cst_91 = arith.constant 9.99999996E-13 : f32
      %159 = vector.broadcast %cst_91 : f32 to vector<16x1xf32>
      %160 = arith.addf %158, %159 : vector<16x1xf32>
      %161 = math.rsqrt %160 : vector<16x1xf32>
      %162 = vector.broadcast %161 : vector<16x1xf32> to vector<16x32xf32>
      %163 = arith.mulf %153, %162 : vector<16x32xf32>
      %164 = vector.broadcast %146 : vector<1x32xf32> to vector<16x32xf32>
      %165 = arith.mulf %163, %164 : vector<16x32xf32>
      %166 = vector.broadcast %147 : vector<1x32xf32> to vector<16x32xf32>
      %167 = arith.addf %165, %166 : vector<16x32xf32>
      %c0_92 = arith.constant 0 : index
      %c0_93 = arith.constant 0 : index
      %168 = vector.load %arg27[%c0_92, %c0_93] : memref<16x32xf32, #tpu.memory_space<vmem>>, vector<16x32xf32>
      tpu.vector_store %arg27[%c0_92, %c0_93], %167 {strides = array<i32>} : memref<16x32xf32, #tpu.memory_space<vmem>>, vector<16x32xf32>,
      %169 = tpu.iota {dimensions = array<i32: 0>} : vector<16x16xi32>
      %170 = tpu.iota {dimensions = array<i32: 1>} : vector<16x16xi32>
      %171 = arith.subi %170, %169 : vector<16x16xi32>
      %c4_i32 = arith.constant 4 : i32
      %172 = vector.broadcast %c4_i32 : i32 to vector<16x16xi32>
      %173 = arith.cmpi sle, %171, %172 : vector<16x16xi32>
      %174 = arith.subi %169, %170 : vector<16x16xi32>
      %c4_i32_94 = arith.constant 4 : i32
      %175 = vector.broadcast %c4_i32_94 : i32 to vector<16x16xi32>
      %176 = arith.cmpi sle, %174, %175 : vector<16x16xi32>
      %177 = arith.andi %173, %176 : vector<16x16xi1>
      %c0_i32_95 = arith.constant 0 : i32
      %178 = vector.broadcast %c0_i32_95 : i32 to vector<16x16xi32>
      %179 = arith.cmpi eq, %169, %178 : vector<16x16xi32>
      %c0_i32_96 = arith.constant 0 : i32
      %180 = vector.broadcast %c0_i32_96 : i32 to vector<16x16xi32>
      %181 = arith.cmpi eq, %170, %180 : vector<16x16xi32>
      %182 = arith.ori %179, %181 : vector<16x16xi1>
      %183 = arith.ori %177, %182 : vector<16x16xi1>
      %cst_97 = arith.constant 0.000000e+00 : f32
      %cst_98 = arith.constant -1.000000e+09 : f32
      %184 = vector.broadcast %cst_97 : f32 to vector<16x16xf32>
      %185 = vector.broadcast %cst_98 : f32 to vector<16x16xf32>
      %186 = arith.select %183, %184, %185 : vector<16x16xi1>, vector<16x16xf32>
      %c0_99 = arith.constant 0 : index
      %c0_100 = arith.constant 0 : index
      %c0_101 = arith.constant 0 : index
      %187 = vector.load %arg3[%c0_99, %c0_100, %c0_101] : memref<1x1x16xf32, #tpu.memory_space<vmem>>, vector<1x1x16xf32>
      %188 = vector.shape_cast %187 : vector<1x1x16xf32> to vector<1x16xf32>
      %189 = vector.broadcast %188 : vector<1x16xf32> to vector<16x16xf32>
      %190 = arith.addf %186, %189 : vector<16x16xf32>
      %c0_102 = arith.constant 0 : index
      %c0_103 = arith.constant 0 : index
      %191 = vector.load %arg28[%c0_102, %c0_103] : memref<16x16xf32, #tpu.memory_space<vmem>>, vector<16x16xf32>
      tpu.vector_store %arg28[%c0_102, %c0_103], %190 {strides = array<i32>} : memref<16x16xf32, #tpu.memory_space<vmem>>, vector<16x16xf32>,
    } else {
    }
    %c0 = arith.constant 0 : index
    %c0_1 = arith.constant 0 : index
    %3 = vector.load %arg27[%c0, %c0_1] : memref<16x32xf32, #tpu.memory_space<vmem>>, vector<16x32xf32>
    %4 = arith.truncf %3 : vector<16x32xf32> to vector<16x32xbf16>
    %c0_2 = arith.constant 0 : index
    %c0_3 = arith.constant 0 : index
    %c0_4 = arith.constant 0 : index
    %5 = vector.load %arg6[%c0_2, %c0_3, %c0_4] : memref<1x32x32xbf16, #tpu.memory_space<vmem>>, vector<1x32x32xbf16>
    %6 = vector.shape_cast %5 : vector<1x32x32xbf16> to vector<32x32xbf16>
    %cst = arith.constant dense<0.000000e+00> : vector<16x32xf32>
    %7 = tpu.matmul %4, %6, %cst {dimension_numbers = #tpu.dot_dimension_numbers<[1], [0], [0], [1], [0, 0, 1, 1], [], []>} : vector<16x32xbf16>, vector<32x32xbf16>, vector<16x32xf32> -> vector<16x32xf32>
    %c0_5 = arith.constant 0 : index
    %c0_6 = arith.constant 0 : index
    %c0_7 = arith.constant 0 : index
    %8 = vector.load %arg7[%c0_5, %c0_6, %c0_7] : memref<1x1x32xf32, #tpu.memory_space<vmem>>, vector<1x1x32xf32>
    %9 = vector.shape_cast %8 : vector<1x1x32xf32> to vector<1x32xf32>
    %10 = vector.broadcast %9 : vector<1x32xf32> to vector<16x32xf32>
    %11 = arith.addf %7, %10 : vector<16x32xf32>
    %c0_8 = arith.constant 0 : index
    %c0_9 = arith.constant 0 : index
    %c0_10 = arith.constant 0 : index
    %12 = vector.load %arg8[%c0_8, %c0_9, %c0_10] : memref<1x32x32xbf16, #tpu.memory_space<vmem>>, vector<1x32x32xbf16>
    %13 = vector.shape_cast %12 : vector<1x32x32xbf16> to vector<32x32xbf16>
    %cst_11 = arith.constant dense<0.000000e+00> : vector<16x32xf32>
    %14 = tpu.matmul %4, %13, %cst_11 {dimension_numbers = #tpu.dot_dimension_numbers<[1], [0], [0], [1], [0, 0, 1, 1], [], []>} : vector<16x32xbf16>, vector<32x32xbf16>, vector<16x32xf32> -> vector<16x32xf32>
    %c0_12 = arith.constant 0 : index
    %c0_13 = arith.constant 0 : index
    %c0_14 = arith.constant 0 : index
    %15 = vector.load %arg9[%c0_12, %c0_13, %c0_14] : memref<1x1x32xf32, #tpu.memory_space<vmem>>, vector<1x1x32xf32>
    %16 = vector.shape_cast %15 : vector<1x1x32xf32> to vector<1x32xf32>
    %17 = vector.broadcast %16 : vector<1x32xf32> to vector<16x32xf32>
    %18 = arith.addf %14, %17 : vector<16x32xf32>
    %c0_15 = arith.constant 0 : index
    %c0_16 = arith.constant 0 : index
    %c0_17 = arith.constant 0 : index
    %19 = vector.load %arg10[%c0_15, %c0_16, %c0_17] : memref<1x32x32xbf16, #tpu.memory_space<vmem>>, vector<1x32x32xbf16>
    %20 = vector.shape_cast %19 : vector<1x32x32xbf16> to vector<32x32xbf16>
    %cst_18 = arith.constant dense<0.000000e+00> : vector<16x32xf32>
    %21 = tpu.matmul %4, %20, %cst_18 {dimension_numbers = #tpu.dot_dimension_numbers<[1], [0], [0], [1], [0, 0, 1, 1], [], []>} : vector<16x32xbf16>, vector<32x32xbf16>, vector<16x32xf32> -> vector<16x32xf32>
    %c0_19 = arith.constant 0 : index
    %c0_20 = arith.constant 0 : index
    %c0_21 = arith.constant 0 : index
    %22 = vector.load %arg11[%c0_19, %c0_20, %c0_21] : memref<1x1x32xf32, #tpu.memory_space<vmem>>, vector<1x1x32xf32>
    %23 = vector.shape_cast %22 : vector<1x1x32xf32> to vector<1x32xf32>
    %24 = vector.broadcast %23 : vector<1x32xf32> to vector<16x32xf32>
    %25 = arith.addf %21, %24 : vector<16x32xf32>
    %26 = vector.shape_cast %11 : vector<16x32xf32> to vector<16x4x8xf32>
    %27 = tpu.transpose %26, [1, 0, 2] : vector<16x4x8xf32> -> vector<4x16x8xf32>
    %28 = arith.truncf %27 : vector<4x16x8xf32> to vector<4x16x8xbf16>
    %29 = vector.shape_cast %18 : vector<16x32xf32> to vector<16x4x8xf32>
    %30 = tpu.transpose %29, [1, 0, 2] : vector<16x4x8xf32> -> vector<4x16x8xf32>
    %31 = arith.truncf %30 : vector<4x16x8xf32> to vector<4x16x8xbf16>
    %32 = vector.shape_cast %25 : vector<16x32xf32> to vector<16x4x8xf32>
    %33 = tpu.transpose %32, [1, 0, 2] : vector<16x4x8xf32> -> vector<4x16x8xf32>
    %34 = arith.truncf %33 : vector<4x16x8xf32> to vector<4x16x8xbf16>
    "tpu.trace_start"() <{level = 10 : i32, message = "hqd,hkd->hqk"}> : () -> ()
    %cst_22 = arith.constant dense<0.000000e+00> : vector<4x16x16xf32>
    %35 = tpu.matmul %28, %31, %cst_22 {dimension_numbers = #tpu.dot_dimension_numbers<[2], [2], [1], [1], [0, 0, 0, 1, 1, 1], [0], [0]>} : vector<4x16x8xbf16>, vector<4x16x8xbf16>, vector<4x16x16xf32> -> vector<4x16x16xf32>
    "tpu.trace_stop"() : () -> ()
    %c0_23 = arith.constant 0 : index
    %c0_24 = arith.constant 0 : index
    %36 = vector.load %arg28[%c0_23, %c0_24] : memref<16x16xf32, #tpu.memory_space<vmem>>, vector<16x16xf32>
    %37 = vector.shape_cast %36 : vector<16x16xf32> to vector<1x16x16xf32>
    %38 = vector.broadcast %37 : vector<1x16x16xf32> to vector<4x16x16xf32>
    %39 = arith.addf %35, %38 : vector<4x16x16xf32>
    %cst_25 = arith.constant dense<0xFF800000> : vector<4x16xf32>
    %40 = vector.multi_reduction <maximumf>, %39, %cst_25 [2] : vector<4x16x16xf32> to vector<4x16xf32>
    %41 = vector.shape_cast %40 : vector<4x16xf32> to vector<4x16x1xf32>
    %42 = vector.broadcast %41 : vector<4x16x1xf32> to vector<4x16x16xf32>
    %43 = arith.subf %39, %42 : vector<4x16x16xf32>
    %44 = math.exp %43 : vector<4x16x16xf32>
    %cst_26 = arith.constant dense<0.000000e+00> : vector<4x16xf32>
    %45 = vector.multi_reduction <add>, %44, %cst_26 [2] : vector<4x16x16xf32> to vector<4x16xf32>
    %46 = vector.shape_cast %45 : vector<4x16xf32> to vector<4x16x1xf32>
    %47 = tpu.reciprocal %46 {approx = true} : vector<4x16x1xf32> -> vector<4x16x1xf32>
    %48 = vector.broadcast %47 : vector<4x16x1xf32> to vector<4x16x16xf32>
    %49 = arith.mulf %44, %48 : vector<4x16x16xf32>
    %50 = arith.truncf %49 : vector<4x16x16xf32> to vector<4x16x16xbf16>
    "tpu.trace_start"() <{level = 10 : i32, message = "hqk,hkd->hqd"}> : () -> ()
    %cst_27 = arith.constant dense<0.000000e+00> : vector<4x16x8xf32>
    %51 = tpu.matmul %50, %34, %cst_27 {dimension_numbers = #tpu.dot_dimension_numbers<[2], [1], [1], [2], [0, 0, 0, 1, 1, 2], [0], [0]>} : vector<4x16x16xbf16>, vector<4x16x8xbf16>, vector<4x16x8xf32> -> vector<4x16x8xf32>
    "tpu.trace_stop"() : () -> ()
    %52 = arith.truncf %51 : vector<4x16x8xf32> to vector<4x16x8xbf16>
    %c0_28 = arith.constant 0 : index
    %c0_29 = arith.constant 0 : index
    %c0_30 = arith.constant 0 : index
    %c0_31 = arith.constant 0 : index
    %53 = vector.load %arg12[%c0_28, %c0_29, %c0_30, %c0_31] : memref<1x4x8x32xbf16, #tpu.memory_space<vmem>>, vector<1x4x8x32xbf16>
    %54 = vector.shape_cast %53 : vector<1x4x8x32xbf16> to vector<4x8x32xbf16>
    "tpu.trace_start"() <{level = 10 : i32, message = "hqd,hdf->hqf"}> : () -> ()
    %cst_32 = arith.constant dense<0.000000e+00> : vector<4x16x32xf32>
    %55 = tpu.matmul %52, %54, %cst_32 {dimension_numbers = #tpu.dot_dimension_numbers<[2], [1], [1], [2], [0, 0, 0, 1, 1, 2], [0], [0]>} : vector<4x16x8xbf16>, vector<4x8x32xbf16>, vector<4x16x32xf32> -> vector<4x16x32xf32>
    "tpu.trace_stop"() : () -> ()
    %cst_33 = arith.constant dense<0.000000e+00> : vector<16x32xf32>
    %56 = vector.multi_reduction <add>, %55, %cst_33 [0] : vector<4x16x32xf32> to vector<16x32xf32>
    %c0_34 = arith.constant 0 : index
    %c0_35 = arith.constant 0 : index
    %c0_36 = arith.constant 0 : index
    %57 = vector.load %arg13[%c0_34, %c0_35, %c0_36] : memref<1x1x32xf32, #tpu.memory_space<vmem>>, vector<1x1x32xf32>
    %58 = vector.shape_cast %57 : vector<1x1x32xf32> to vector<1x32xf32>
    %59 = vector.broadcast %58 : vector<1x32xf32> to vector<16x32xf32>
    %60 = arith.addf %56, %59 : vector<16x32xf32>
    %61 = arith.addf %60, %3 : vector<16x32xf32>
    %c0_37 = arith.constant 0 : index
    %c0_38 = arith.constant 0 : index
    %c0_39 = arith.constant 0 : index
    %62 = vector.load %arg14[%c0_37, %c0_38, %c0_39] : memref<1x1x32xf32, #tpu.memory_space<vmem>>, vector<1x1x32xf32>
    %63 = vector.shape_cast %62 : vector<1x1x32xf32> to vector<1x32xf32>
    %c0_40 = arith.constant 0 : index
    %c0_41 = arith.constant 0 : index
    %c0_42 = arith.constant 0 : index
    %64 = vector.load %arg15[%c0_40, %c0_41, %c0_42] : memref<1x1x32xf32, #tpu.memory_space<vmem>>, vector<1x1x32xf32>
    %65 = vector.shape_cast %64 : vector<1x1x32xf32> to vector<1x32xf32>
    %cst_43 = arith.constant dense<0.000000e+00> : vector<16xf32>
    %66 = vector.multi_reduction <add>, %61, %cst_43 [1] : vector<16x32xf32> to vector<16xf32>
    %67 = vector.shape_cast %66 : vector<16xf32> to vector<16x1xf32>
    %cst_44 = arith.constant 3.200000e+01 : f32
    %68 = vector.broadcast %cst_44 : f32 to vector<16x1xf32>
    %69 = arith.divf %67, %68 : vector<16x1xf32>
    %70 = vector.broadcast %69 : vector<16x1xf32> to vector<16x32xf32>
    %71 = arith.subf %61, %70 : vector<16x32xf32>
    %72 = arith.mulf %71, %71 : vector<16x32xf32>
    %cst_45 = arith.constant dense<0.000000e+00> : vector<16xf32>
    %73 = vector.multi_reduction <add>, %72, %cst_45 [1] : vector<16x32xf32> to vector<16xf32>
    %74 = vector.shape_cast %73 : vector<16xf32> to vector<16x1xf32>
    %cst_46 = arith.constant 3.200000e+01 : f32
    %75 = vector.broadcast %cst_46 : f32 to vector<16x1xf32>
    %76 = arith.divf %74, %75 : vector<16x1xf32>
    %cst_47 = arith.constant 9.99999996E-13 : f32
    %77 = vector.broadcast %cst_47 : f32 to vector<16x1xf32>
    %78 = arith.addf %76, %77 : vector<16x1xf32>
    %79 = math.rsqrt %78 : vector<16x1xf32>
    %80 = vector.broadcast %79 : vector<16x1xf32> to vector<16x32xf32>
    %81 = arith.mulf %71, %80 : vector<16x32xf32>
    %82 = vector.broadcast %63 : vector<1x32xf32> to vector<16x32xf32>
    %83 = arith.mulf %81, %82 : vector<16x32xf32>
    %84 = vector.broadcast %65 : vector<1x32xf32> to vector<16x32xf32>
    %85 = arith.addf %83, %84 : vector<16x32xf32>
    %86 = arith.truncf %85 : vector<16x32xf32> to vector<16x32xbf16>
    %c0_48 = arith.constant 0 : index
    %c0_49 = arith.constant 0 : index
    %c0_50 = arith.constant 0 : index
    %87 = vector.load %arg16[%c0_48, %c0_49, %c0_50] : memref<1x32x64xbf16, #tpu.memory_space<vmem>>, vector<1x32x64xbf16>
    %88 = vector.shape_cast %87 : vector<1x32x64xbf16> to vector<32x64xbf16>
    %cst_51 = arith.constant dense<0.000000e+00> : vector<16x64xf32>
    %89 = tpu.matmul %86, %88, %cst_51 {dimension_numbers = #tpu.dot_dimension_numbers<[1], [0], [0], [1], [0, 0, 1, 1], [], []>} : vector<16x32xbf16>, vector<32x64xbf16>, vector<16x64xf32> -> vector<16x64xf32>
    %c0_52 = arith.constant 0 : index
    %c0_53 = arith.constant 0 : index
    %c0_54 = arith.constant 0 : index
    %90 = vector.load %arg17[%c0_52, %c0_53, %c0_54] : memref<1x1x64xf32, #tpu.memory_space<vmem>>, vector<1x1x64xf32>
    %91 = vector.shape_cast %90 : vector<1x1x64xf32> to vector<1x64xf32>
    %92 = vector.broadcast %91 : vector<1x64xf32> to vector<16x64xf32>
    %93 = arith.addf %89, %92 : vector<16x64xf32>
    %cst_55 = arith.constant 5.000000e-01 : f32
    %94 = vector.broadcast %cst_55 : f32 to vector<16x64xf32>
    %95 = arith.mulf %94, %93 : vector<16x64xf32>
    %cst_56 = arith.constant 4.471500e-02 : f32
    %96 = vector.broadcast %cst_56 : f32 to vector<16x64xf32>
    %97 = arith.mulf %96, %93 : vector<16x64xf32>
    %98 = arith.mulf %97, %93 : vector<16x64xf32>
    %99 = arith.mulf %98, %93 : vector<16x64xf32>
    %100 = arith.addf %93, %99 : vector<16x64xf32>
    %cst_57 = arith.constant 0.797884583 : f32
    %101 = vector.broadcast %cst_57 : f32 to vector<16x64xf32>
    %102 = arith.mulf %101, %100 : vector<16x64xf32>
    %103 = math.tanh %102 : vector<16x64xf32>
    %cst_58 = arith.constant 1.000000e+00 : f32
    %104 = vector.broadcast %cst_58 : f32 to vector<16x64xf32>
    %105 = arith.addf %104, %103 : vector<16x64xf32>
    %106 = arith.mulf %95, %105 : vector<16x64xf32>
    %107 = arith.truncf %106 : vector<16x64xf32> to vector<16x64xbf16>
    %c0_59 = arith.constant 0 : index
    %c0_60 = arith.constant 0 : index
    %c0_61 = arith.constant 0 : index
    %108 = vector.load %arg18[%c0_59, %c0_60, %c0_61] : memref<1x64x32xbf16, #tpu.memory_space<vmem>>, vector<1x64x32xbf16>
    %109 = vector.shape_cast %108 : vector<1x64x32xbf16> to vector<64x32xbf16>
    %cst_62 = arith.constant dense<0.000000e+00> : vector<16x32xf32>
    %110 = tpu.matmul %107, %109, %cst_62 {dimension_numbers = #tpu.dot_dimension_numbers<[1], [0], [0], [1], [0, 0, 1, 1], [], []>} : vector<16x64xbf16>, vector<64x32xbf16>, vector<16x32xf32> -> vector<16x32xf32>
    %c0_63 = arith.constant 0 : index
    %c0_64 = arith.constant 0 : index
    %c0_65 = arith.constant 0 : index
    %111 = vector.load %arg19[%c0_63, %c0_64, %c0_65] : memref<1x1x32xf32, #tpu.memory_space<vmem>>, vector<1x1x32xf32>
    %112 = vector.shape_cast %111 : vector<1x1x32xf32> to vector<1x32xf32>
    %113 = vector.broadcast %112 : vector<1x32xf32> to vector<16x32xf32>
    %114 = arith.addf %110, %113 : vector<16x32xf32>
    %115 = arith.addf %114, %85 : vector<16x32xf32>
    %c0_66 = arith.constant 0 : index
    %c0_67 = arith.constant 0 : index
    %c0_68 = arith.constant 0 : index
    %116 = vector.load %arg20[%c0_66, %c0_67, %c0_68] : memref<1x1x32xf32, #tpu.memory_space<vmem>>, vector<1x1x32xf32>
    %117 = vector.shape_cast %116 : vector<1x1x32xf32> to vector<1x32xf32>
    %c0_69 = arith.constant 0 : index
    %c0_70 = arith.constant 0 : index
    %c0_71 = arith.constant 0 : index
    %118 = vector.load %arg21[%c0_69, %c0_70, %c0_71] : memref<1x1x32xf32, #tpu.memory_space<vmem>>, vector<1x1x32xf32>
    %119 = vector.shape_cast %118 : vector<1x1x32xf32> to vector<1x32xf32>
    %cst_72 = arith.constant dense<0.000000e+00> : vector<16xf32>
    %120 = vector.multi_reduction <add>, %115, %cst_72 [1] : vector<16x32xf32> to vector<16xf32>
    %121 = vector.shape_cast %120 : vector<16xf32> to vector<16x1xf32>
    %cst_73 = arith.constant 3.200000e+01 : f32
    %122 = vector.broadcast %cst_73 : f32 to vector<16x1xf32>
    %123 = arith.divf %121, %122 : vector<16x1xf32>
    %124 = vector.broadcast %123 : vector<16x1xf32> to vector<16x32xf32>
    %125 = arith.subf %115, %124 : vector<16x32xf32>
    %126 = arith.mulf %125, %125 : vector<16x32xf32>
    %cst_74 = arith.constant dense<0.000000e+00> : vector<16xf32>
    %127 = vector.multi_reduction <add>, %126, %cst_74 [1] : vector<16x32xf32> to vector<16xf32>
    %128 = vector.shape_cast %127 : vector<16xf32> to vector<16x1xf32>
    %cst_75 = arith.constant 3.200000e+01 : f32
    %129 = vector.broadcast %cst_75 : f32 to vector<16x1xf32>
    %130 = arith.divf %128, %129 : vector<16x1xf32>
    %cst_76 = arith.constant 9.99999996E-13 : f32
    %131 = vector.broadcast %cst_76 : f32 to vector<16x1xf32>
    %132 = arith.addf %130, %131 : vector<16x1xf32>
    %133 = math.rsqrt %132 : vector<16x1xf32>
    %134 = vector.broadcast %133 : vector<16x1xf32> to vector<16x32xf32>
    %135 = arith.mulf %125, %134 : vector<16x32xf32>
    %136 = vector.broadcast %117 : vector<1x32xf32> to vector<16x32xf32>
    %137 = arith.mulf %135, %136 : vector<16x32xf32>
    %138 = vector.broadcast %119 : vector<1x32xf32> to vector<16x32xf32>
    %139 = arith.addf %137, %138 : vector<16x32xf32>
    %c0_77 = arith.constant 0 : index
    %c0_78 = arith.constant 0 : index
    %140 = vector.load %arg27[%c0_77, %c0_78] : memref<16x32xf32, #tpu.memory_space<vmem>>, vector<16x32xf32>
    tpu.vector_store %arg27[%c0_77, %c0_78], %139 {strides = array<i32>} : memref<16x32xf32, #tpu.memory_space<vmem>>, vector<16x32xf32>,
    %c1_i32 = arith.constant 1 : i32
    %141 = arith.cmpi eq, %arg1, %c1_i32 : i32
    %142 = arith.extui %141 : i1 to i32
    %c0_i32_79 = arith.constant 0 : i32
    %143 = arith.cmpi ne, %142, %c0_i32_79 : i32
    scf.if %143 {
      %144 = vector.extract_strided_slice %139 {offsets = [0, 0], sizes = [8, 32], strides = [1, 1]} : vector<16x32xf32> to vector<8x32xf32>
      %c0_80 = arith.constant 0 : index
      %c0_81 = arith.constant 0 : index
      %145 = vector.load %arg22[%c0_80, %c0_81] : memref<32x32xf32, #tpu.memory_space<vmem>>, vector<32x32xf32>
      %cst_82 = arith.constant dense<0.000000e+00> : vector<8x32xf32>
      %146 = tpu.matmul %144, %145, %cst_82 {dimension_numbers = #tpu.dot_dimension_numbers<[1], [0], [0], [1], [0, 0, 1, 1], [], []>} : vector<8x32xf32>, vector<32x32xf32>, vector<8x32xf32> -> vector<8x32xf32>
      %c0_83 = arith.constant 0 : index
      %c0_84 = arith.constant 0 : index
      %147 = vector.load %arg23[%c0_83, %c0_84] : memref<1x32xf32, #tpu.memory_space<vmem>>, vector<1x32xf32>
      %148 = vector.broadcast %147 : vector<1x32xf32> to vector<8x32xf32>
      %149 = arith.addf %146, %148 : vector<8x32xf32>
      %150 = math.tanh %149 : vector<8x32xf32>
      %c0_85 = arith.constant 0 : index
      %c0_86 = arith.constant 0 : index
      %151 = vector.load %arg24[%c0_85, %c0_86] : memref<32x128xf32, #tpu.memory_space<vmem>>, vector<32x128xf32>
      %cst_87 = arith.constant dense<0.000000e+00> : vector<8x128xf32>
      %152 = tpu.matmul %150, %151, %cst_87 {dimension_numbers = #tpu.dot_dimension_numbers<[1], [0], [0], [1], [0, 0, 1, 1], [], []>} : vector<8x32xf32>, vector<32x128xf32>, vector<8x128xf32> -> vector<8x128xf32>
      %c0_88 = arith.constant 0 : index
      %c0_89 = arith.constant 0 : index
      %153 = vector.load %arg25[%c0_88, %c0_89] : memref<1x128xf32, #tpu.memory_space<vmem>>, vector<1x128xf32>
      %154 = vector.broadcast %153 : vector<1x128xf32> to vector<8x128xf32>
      %155 = arith.addf %152, %154 : vector<8x128xf32>
      %c0_90 = arith.constant 0 : index
      %c0_91 = arith.constant 0 : index
      %c0_92 = arith.constant 0 : index
      %156 = vector.load %arg26[%c0_90, %c0_91, %c0_92] : memref<1x8x128xf32, #tpu.memory_space<vmem>>, vector<1x8x128xf32>
      %157 = vector.shape_cast %156 : vector<1x8x128xf32> to vector<8x128xf32>
      %158 = vector.shape_cast %155 : vector<8x128xf32> to vector<1x8x128xf32>
      tpu.vector_store %arg26[%c0_90, %c0_91, %c0_92], %158 {strides = array<i32>} : memref<1x8x128xf32, #tpu.memory_space<vmem>>, vector<1x8x128xf32>,
    } else {
    }
    return
  }
  func.func @transform_0(%arg0: i32, %arg1: i32) -> (i32, i32, i32) {
    %c0_i32 = arith.constant 0 : i32
    %c0_i32_0 = arith.constant 0 : i32
    %c0_i32_1 = arith.constant 0 : i32
    return %arg0, %c0_i32, %c0_i32_0 : i32, i32, i32
  }
  func.func @transform_1(%arg0: i32, %arg1: i32) -> (i32, i32, i32) {
    %c0_i32 = arith.constant 0 : i32
    %c0_i32_0 = arith.constant 0 : i32
    %c0_i32_1 = arith.constant 0 : i32
    return %arg0, %c0_i32, %c0_i32_0 : i32, i32, i32
  }
  func.func @transform_2(%arg0: i32, %arg1: i32) -> (i32, i32) {
    %c0_i32 = arith.constant 0 : i32
    %c0_i32_0 = arith.constant 0 : i32
    %c0_i32_1 = arith.constant 0 : i32
    return %c0_i32, %c0_i32_0 : i32, i32
  }
  func.func @transform_3(%arg0: i32, %arg1: i32) -> (i32, i32) {
    %c0_i32 = arith.constant 0 : i32
    %c0_i32_0 = arith.constant 0 : i32
    %c0_i32_1 = arith.constant 0 : i32
    return %c0_i32, %c0_i32_0 : i32, i32
  }
  func.func @transform_4(%arg0: i32, %arg1: i32) -> (i32, i32, i32) {
    %c0_i32 = arith.constant 0 : i32
    %c0_i32_0 = arith.constant 0 : i32
    %c0_i32_1 = arith.constant 0 : i32
    return %arg1, %c0_i32, %c0_i32_0 : i32, i32, i32
  }
  func.func @transform_5(%arg0: i32, %arg1: i32) -> (i32, i32, i32) {
    %c0_i32 = arith.constant 0 : i32
    %c0_i32_0 = arith.constant 0 : i32
    %c0_i32_1 = arith.constant 0 : i32
    return %arg1, %c0_i32, %c0_i32_0 : i32, i32, i32
  }
  func.func @transform_6(%arg0: i32, %arg1: i32) -> (i32, i32, i32) {
    %c0_i32 = arith.constant 0 : i32
    %c0_i32_0 = arith.constant 0 : i32
    %c0_i32_1 = arith.constant 0 : i32
    return %arg1, %c0_i32, %c0_i32_0 : i32, i32, i32
  }
  func.func @transform_7(%arg0: i32, %arg1: i32) -> (i32, i32, i32) {
    %c0_i32 = arith.constant 0 : i32
    %c0_i32_0 = arith.constant 0 : i32
    %c0_i32_1 = arith.constant 0 : i32
    return %arg1, %c0_i32, %c0_i32_0 : i32, i32, i32
  }
  func.func @transform_8(%arg0: i32, %arg1: i32) -> (i32, i32, i32) {
    %c0_i32 = arith.constant 0 : i32
    %c0_i32_0 = arith.constant 0 : i32
    %c0_i32_1 = arith.constant 0 : i32
    return %arg1, %c0_i32, %c0_i32_0 : i32, i32, i32
  }
  func.func @transform_9(%arg0: i32, %arg1: i32) -> (i32, i32, i32) {
    %c0_i32 = arith.constant 0 : i32
    %c0_i32_0 = arith.constant 0 : i32
    %c0_i32_1 = arith.constant 0 : i32
    return %arg1, %c0_i32, %c0_i32_0 : i32, i32, i32
  }
  func.func @transform_10(%arg0: i32, %arg1: i32) -> (i32, i32, i32, i32) {
    %c0_i32 = arith.constant 0 : i32
    %c0_i32_0 = arith.constant 0 : i32
    %c0_i32_1 = arith.constant 0 : i32
    %c0_i32_2 = arith.constant 0 : i32
    return %arg1, %c0_i32, %c0_i32_0, %c0_i32_1 : i32, i32, i32, i32
  }
  func.func @transform_11(%arg0: i32, %arg1: i32) -> (i32, i32, i32) {
    %c0_i32 = arith.constant 0 : i32
    %c0_i32_0 = arith.constant 0 : i32
    %c0_i32_1 = arith.constant 0 : i32
    return %arg1, %c0_i32, %c0_i32_0 : i32, i32, i32
  }
  func.func @transform_12(%arg0: i32, %arg1: i32) -> (i32, i32, i32) {
    %c0_i32 = arith.constant 0 : i32
    %c0_i32_0 = arith.constant 0 : i32
    %c0_i32_1 = arith.constant 0 : i32
    return %arg1, %c0_i32, %c0_i32_0 : i32, i32, i32
  }
  func.func @transform_13(%arg0: i32, %arg1: i32) -> (i32, i32, i32) {
    %c0_i32 = arith.constant 0 : i32
    %c0_i32_0 = arith.constant 0 : i32
    %c0_i32_1 = arith.constant 0 : i32
    return %arg1, %c0_i32, %c0_i32_0 : i32, i32, i32
  }
  func.func @transform_14(%arg0: i32, %arg1: i32) -> (i32, i32, i32) {
    %c0_i32 = arith.constant 0 : i32
    %c0_i32_0 = arith.constant 0 : i32
    %c0_i32_1 = arith.constant 0 : i32
    return %arg1, %c0_i32, %c0_i32_0 : i32, i32, i32
  }
  func.func @transform_15(%arg0: i32, %arg1: i32) -> (i32, i32, i32) {
    %c0_i32 = arith.constant 0 : i32
    %c0_i32_0 = arith.constant 0 : i32
    %c0_i32_1 = arith.constant 0 : i32
    return %arg1, %c0_i32, %c0_i32_0 : i32, i32, i32
  }
  func.func @transform_16(%arg0: i32, %arg1: i32) -> (i32, i32, i32) {
    %c0_i32 = arith.constant 0 : i32
    %c0_i32_0 = arith.constant 0 : i32
    %c0_i32_1 = arith.constant 0 : i32
    return %arg1, %c0_i32, %c0_i32_0 : i32, i32, i32
  }
  func.func @transform_17(%arg0: i32, %arg1: i32) -> (i32, i32, i32) {
    %c0_i32 = arith.constant 0 : i32
    %c0_i32_0 = arith.constant 0 : i32
    %c0_i32_1 = arith.constant 0 : i32
    return %arg1, %c0_i32, %c0_i32_0 : i32, i32, i32
  }
  func.func @transform_18(%arg0: i32, %arg1: i32) -> (i32, i32, i32) {
    %c0_i32 = arith.constant 0 : i32
    %c0_i32_0 = arith.constant 0 : i32
    %c0_i32_1 = arith.constant 0 : i32
    return %arg1, %c0_i32, %c0_i32_0 : i32, i32, i32
  }
  func.func @transform_19(%arg0: i32, %arg1: i32) -> (i32, i32, i32) {
    %c0_i32 = arith.constant 0 : i32
    %c0_i32_0 = arith.constant 0 : i32
    %c0_i32_1 = arith.constant 0 : i32
    return %arg1, %c0_i32, %c0_i32_0 : i32, i32, i32
  }
  func.func @transform_20(%arg0: i32, %arg1: i32) -> (i32, i32) {
    %c0_i32 = arith.constant 0 : i32
    %c0_i32_0 = arith.constant 0 : i32
    %c0_i32_1 = arith.constant 0 : i32
    return %c0_i32, %c0_i32_0 : i32, i32
  }
  func.func @transform_21(%arg0: i32, %arg1: i32) -> (i32, i32) {
    %c0_i32 = arith.constant 0 : i32
    %c0_i32_0 = arith.constant 0 : i32
    %c0_i32_1 = arith.constant 0 : i32
    return %c0_i32, %c0_i32_0 : i32, i32
  }
  func.func @transform_22(%arg0: i32, %arg1: i32) -> (i32, i32) {
    %c0_i32 = arith.constant 0 : i32
    %c0_i32_0 = arith.constant 0 : i32
    %c0_i32_1 = arith.constant 0 : i32
    return %c0_i32, %c0_i32_0 : i32, i32
  }
  func.func @transform_23(%arg0: i32, %arg1: i32) -> (i32, i32) {
    %c0_i32 = arith.constant 0 : i32
    %c0_i32_0 = arith.constant 0 : i32
    %c0_i32_1 = arith.constant 0 : i32
    return %c0_i32, %c0_i32_0 : i32, i32
  }
  func.func @transform_24(%arg0: i32, %arg1: i32) -> (i32, i32, i32) {
    %c0_i32 = arith.constant 0 : i32
    %c0_i32_0 = arith.constant 0 : i32
    %c0_i32_1 = arith.constant 0 : i32
    return %arg0, %c0_i32, %c0_i32_0 : i32, i32, i32
  }
}

</mosaic_0001>

<llo_original>
// kernel: longformer_forward.1
$region0: #{longformer_forward.1}
  #allocation0 [shape = 'u32[]', space=smem, size = 0x4, offset = 0x4, fixed_abs, tag = 'smem constant byte address 0x4 - core index']
  #allocation1 [shape = 'u32[144,128]{1,0:T(1,128)}', space=vmem, size = 0x12000, scoped, tag = 'internal scratch']
  #allocation2 [shape = 'f32[16,32]{1,0:T(8,128)}', space=vmem, size = 0x2000, scoped, tag = 'scratch operand']
  #allocation3 [shape = 'f32[16,16]{1,0:T(8,128)}', space=vmem, size = 0x2000, scoped, tag = 'scratch operand']
  %s0 = inlined_call_operand.vmem [shape: f32[2,16,32], index: 0, kind: input, shape index: {}]
  %s1 = inlined_call_operand.vmem [shape: f32[2,1,16], index: 1, kind: input, shape index: {}]
  %s2 = inlined_call_operand.vmem [shape: f32[1,32], index: 2, kind: input, shape index: {}]
  %s3 = inlined_call_operand.vmem [shape: f32[1,32], index: 3, kind: input, shape index: {}]
  %s4 = inlined_call_operand.vmem [shape: bf16[2,32,32], index: 4, kind: input, shape index: {}]
  %s5 = inlined_call_operand.vmem [shape: f32[2,1,32], index: 5, kind: input, shape index: {}]
  %s6 = inlined_call_operand.vmem [shape: bf16[2,32,32], index: 6, kind: input, shape index: {}]
  %s7 = inlined_call_operand.vmem [shape: f32[2,1,32], index: 7, kind: input, shape index: {}]
  %s8 = inlined_call_operand.vmem [shape: bf16[2,32,32], index: 8, kind: input, shape index: {}]
  %s9 = inlined_call_operand.vmem [shape: f32[2,1,32], index: 9, kind: input, shape index: {}]
  %s10 = inlined_call_operand.vmem [shape: bf16[2,4,8,32], index: 10, kind: input, shape index: {}]
  %s11 = inlined_call_operand.vmem [shape: f32[2,1,32], index: 11, kind: input, shape index: {}]
  %s12 = inlined_call_operand.vmem [shape: f32[2,1,32], index: 12, kind: input, shape index: {}]
  %s13 = inlined_call_operand.vmem [shape: f32[2,1,32], index: 13, kind: input, shape index: {}]
  %s14 = inlined_call_operand.vmem [shape: bf16[2,32,64], index: 14, kind: input, shape index: {}]
  %s15 = inlined_call_operand.vmem [shape: f32[2,1,64], index: 15, kind: input, shape index: {}]
  %s16 = inlined_call_operand.vmem [shape: bf16[2,64,32], index: 16, kind: input, shape index: {}]
  %s17 = inlined_call_operand.vmem [shape: f32[2,1,32], index: 17, kind: input, shape index: {}]
  %s18 = inlined_call_operand.vmem [shape: f32[2,1,32], index: 18, kind: input, shape index: {}]
  %s19 = inlined_call_operand.vmem [shape: f32[2,1,32], index: 19, kind: input, shape index: {}]
  %s20 = inlined_call_operand.vmem [shape: f32[32,32], index: 20, kind: input, shape index: {}]
  %s21 = inlined_call_operand.vmem [shape: f32[1,32], index: 21, kind: input, shape index: {}]
  %s22 = inlined_call_operand.vmem [shape: f32[32,128], index: 22, kind: input, shape index: {}]
  %s23 = inlined_call_operand.vmem [shape: f32[1,128], index: 23, kind: input, shape index: {}]
  %s24 = inlined_call_operand.vmem [shape: f32[2,8,128], index: 24, kind: output, shape index: {}]
  %s25 = sld [smem:[#allocation0]]
  $region137: #{longformer_forward.1} parent=0
    _
  %s27 = ssub.s32 1, %s25
  %s28 = scalar_select 0, %s27, %s25
  loop: start=0, step=1, limit=6
  $region2: #{longformer_forward.1} parent=0 // loop_pre_header
    _
  $region3: #{longformer_forward.1} parent=0 // loop_header
    %s30 = sphi 0, %s34
    %p31 = scmp.ge.s32.totalorder %s30, 6
    %s37 = sphi 0, %s49
    %s38 = sphi 0, %s45
    %s39 = sphi 0, %s37
    %s40 = sphi 0, %s38
    %s41 = sphi 0, %s39
    %s42 = sphi 0, %s40
    %s52 = sphi 0, %s54
    %s55 = sphi 0, %s52
    %s56 = sphi 0, %s55
    %s72 = sphi 0, %s56
    %s78 = sphi 0, %s80
    %s81 = sphi 0, %s78
    %s82 = sphi 0, %s81
    %s98 = sphi 0, %s82
    %s102 = sphi 0, %s102
    %s104 = sphi 0, %s102
    %s105 = sphi 0, %s104
    %s119 = sphi 0, %s105
    %s123 = sphi 0, %s123
    %s125 = sphi 0, %s123
    %s126 = sphi 0, %s125
    %s140 = sphi 0, %s126
    %s146 = sphi 0, %s148
    %s149 = sphi 0, %s146
    %s150 = sphi 0, %s149
    %s166 = sphi 0, %s150
    %s172 = sphi 0, %s174
    %s175 = sphi 0, %s172
    %s176 = sphi 0, %s175
    %s192 = sphi 0, %s176
    %s198 = sphi 0, %s200
    %s201 = sphi 0, %s198
    %s202 = sphi 0, %s201
    %s218 = sphi 0, %s202
    %s224 = sphi 0, %s226
    %s227 = sphi 0, %s224
    %s228 = sphi 0, %s227
    %s244 = sphi 0, %s228
    %s250 = sphi 0, %s252
    %s253 = sphi 0, %s250
    %s254 = sphi 0, %s253
    %s270 = sphi 0, %s254
    %s276 = sphi 0, %s278
    %s279 = sphi 0, %s276
    %s280 = sphi 0, %s279
    %s296 = sphi 0, %s280
    %s302 = sphi 0, %s304
    %s305 = sphi 0, %s302
    %s306 = sphi 0, %s305
    %s322 = sphi 0, %s306
    %s328 = sphi 0, %s330
    %s331 = sphi 0, %s328
    %s332 = sphi 0, %s331
    %s348 = sphi 0, %s332
    %s354 = sphi 0, %s356
    %s357 = sphi 0, %s354
    %s358 = sphi 0, %s357
    %s374 = sphi 0, %s358
    %s380 = sphi 0, %s382
    %s383 = sphi 0, %s380
    %s384 = sphi 0, %s383
    %s400 = sphi 0, %s384
    %s406 = sphi 0, %s408
    %s409 = sphi 0, %s406
    %s410 = sphi 0, %s409
    %s426 = sphi 0, %s410
    %s432 = sphi 0, %s434
    %s435 = sphi 0, %s432
    %s436 = sphi 0, %s435
    %s452 = sphi 0, %s436
    %s458 = sphi 0, %s460
    %s461 = sphi 0, %s458
    %s462 = sphi 0, %s461
    %s478 = sphi 0, %s462
    %s484 = sphi 0, %s486
    %s487 = sphi 0, %s484
    %s488 = sphi 0, %s487
    %s504 = sphi 0, %s488
    %s510 = sphi 0, %s512
    %s513 = sphi 0, %s510
    %s514 = sphi 0, %s513
    %s530 = sphi 0, %s514
    %s536 = sphi 0, %s538
    %s539 = sphi 0, %s536
    %s540 = sphi 0, %s539
    %s556 = sphi 0, %s540
    %s560 = sphi 0, %s560
    %s562 = sphi 0, %s560
    %s563 = sphi 0, %s562
    %s577 = sphi 0, %s563
    %s581 = sphi 0, %s581
    %s583 = sphi 0, %s581
    %s584 = sphi 0, %s583
    %s598 = sphi 0, %s584
    %s602 = sphi 0, %s602
    %s604 = sphi 0, %s602
    %s605 = sphi 0, %s604
    %s619 = sphi 0, %s605
    %s623 = sphi 0, %s623
    %s625 = sphi 0, %s623
    %s626 = sphi 0, %s625
    %s640 = sphi 0, %s626
    %s646 = sphi 0, %s648
    %s649 = sphi 0, %s646
    %s650 = sphi 0, %s649
    %s666 = sphi 0, %s650
  $region4: #{longformer_forward.1} parent=0 // loop_header_branch
    %33 = sbr.rel (%p31) target = $region8
  $region5: #{longformer_forward.1} parent=0 // loop_body
    %s35 = ssub.s32 %s30, 1
    %s36 = ssub.s32 %s30, 2
    %s43 = sadd.s32 1, %s38
    %p44 = scmp.ge.s32.totalorder %s43, 2
    %s45 = scalar_select %p44, 0, %s43
    %s46 = sadd.s32 1, %s37
    %s47 = scalar_select %p44, %s46, %s37
    %p48 = scmp.ge.s32.totalorder %s47, 2
    %s49 = scalar_select %p48, 0, %s47
    %s50 = ssub.s32 %s37, %s49
    %p51 = scmp.eq.s32.totalorder %s50, 0
    %s53 = sadd.s32 %s52, 1
    %s54 = scalar_select %p51, %s52, %s53
    %p57 = pneg %p51
    %p58 = scmp.eq.s32.totalorder %s30, 3
    %p59 = por %p57, %p58
    %p60 = scmp.ne.s32.totalorder %s52, %s55
    %p61 = scmp.eq.s32.totalorder %s30, 0
    %p62 = por %p60, %p61
    %p63 = scmp.ne.s32.totalorder %s52, %s55
    %p64 = scmp.eq.s32.totalorder %s35, 3
    %p65 = por %p63, %p64
    %p66 = scmp.ne.s32.totalorder %s55, %s56
    %p67 = scmp.eq.s32.totalorder %s35, 0
    %p68 = por %p66, %p67
    %p69 = scmp.ne.s32.totalorder %s55, %s56
    %p70 = scmp.eq.s32.totalorder %s36, 3
    %p71 = por %p69, %p70
    %p73 = scmp.ne.s32.totalorder %s56, %s72
    %p74 = scmp.eq.s32.totalorder %s36, 0
    %p75 = por %p73, %p74
    %s76 = ssub.s32 %s37, %s49
    %p77 = scmp.eq.s32.totalorder %s76, 0
    %s79 = sadd.s32 %s78, 1
    %s80 = scalar_select %p77, %s78, %s79
    %p83 = pneg %p77
    %p84 = scmp.eq.s32.totalorder %s30, 3
    %p85 = por %p83, %p84
    %p86 = scmp.ne.s32.totalorder %s78, %s81
    %p87 = scmp.eq.s32.totalorder %s30, 0
    %p88 = por %p86, %p87
    %p89 = scmp.ne.s32.totalorder %s78, %s81
    %p90 = scmp.eq.s32.totalorder %s35, 3
    %p91 = por %p89, %p90
    %p92 = scmp.ne.s32.totalorder %s81, %s82
    %p93 = scmp.eq.s32.totalorder %s35, 0
    %p94 = por %p92, %p93
    %p95 = scmp.ne.s32.totalorder %s81, %s82
    %p96 = scmp.eq.s32.totalorder %s36, 3
    %p97 = por %p95, %p96
    %p99 = scmp.ne.s32.totalorder %s82, %s98
    %p100 = scmp.eq.s32.totalorder %s36, 0
    %p101 = por %p99, %p100
    %s103 = sadd.s32 %s102, 1
    %p106 = scmp.eq.s32.totalorder %s30, 3
    %p107 = scmp.ne.s32.totalorder %s102, %s104
    %p108 = scmp.eq.s32.totalorder %s30, 0
    %p109 = por %p107, %p108
    %p110 = scmp.ne.s32.totalorder %s102, %s104
    %p111 = scmp.eq.s32.totalorder %s35, 3
    %p112 = por %p110, %p111
    %p113 = scmp.ne.s32.totalorder %s104, %s105
    %p114 = scmp.eq.s32.totalorder %s35, 0
    %p115 = por %p113, %p114
    %p116 = scmp.ne.s32.totalorder %s104, %s105
    %p117 = scmp.eq.s32.totalorder %s36, 3
    %p118 = por %p116, %p117
    %p120 = scmp.ne.s32.totalorder %s105, %s119
    %p121 = scmp.eq.s32.totalorder %s36, 0
    %p122 = por %p120, %p121
    %s124 = sadd.s32 %s123, 1
    %p127 = scmp.eq.s32.totalorder %s30, 3
    %p128 = scmp.ne.s32.totalorder %s123, %s125
    %p129 = scmp.eq.s32.totalorder %s30, 0
    %p130 = por %p128, %p129
    %p131 = scmp.ne.s32.totalorder %s123, %s125
    %p132 = scmp.eq.s32.totalorder %s35, 3
    %p133 = por %p131, %p132
    %p134 = scmp.ne.s32.totalorder %s125, %s126
    %p135 = scmp.eq.s32.totalorder %s35, 0
    %p136 = por %p134, %p135
    %p137 = scmp.ne.s32.totalorder %s125, %s126
    %p138 = scmp.eq.s32.totalorder %s36, 3
    %p139 = por %p137, %p138
    %p141 = scmp.ne.s32.totalorder %s126, %s140
    %p142 = scmp.eq.s32.totalorder %s36, 0
    %p143 = por %p141, %p142
    %s144 = ssub.s32 %s38, %s45
    %p145 = scmp.eq.s32.totalorder %s144, 0
    %s147 = sadd.s32 %s146, 1
    %s148 = scalar_select %p145, %s146, %s147
    %p151 = pneg %p145
    %p152 = scmp.eq.s32.totalorder %s30, 3
    %p153 = por %p151, %p152
    %p154 = scmp.ne.s32.totalorder %s146, %s149
    %p155 = scmp.eq.s32.totalorder %s30, 0
    %p156 = por %p154, %p155
    %p157 = scmp.ne.s32.totalorder %s146, %s149
    %p158 = scmp.eq.s32.totalorder %s35, 3
    %p159 = por %p157, %p158
    %p160 = scmp.ne.s32.totalorder %s149, %s150
    %p161 = scmp.eq.s32.totalorder %s35, 0
    %p162 = por %p160, %p161
    %p163 = scmp.ne.s32.totalorder %s149, %s150
    %p164 = scmp.eq.s32.totalorder %s36, 3
    %p165 = por %p163, %p164
    %p167 = scmp.ne.s32.totalorder %s150, %s166
    %p168 = scmp.eq.s32.totalorder %s36, 0
    %p169 = por %p167, %p168
    %s170 = ssub.s32 %s38, %s45
    %p171 = scmp.eq.s32.totalorder %s170, 0
    %s173 = sadd.s32 %s172, 1
    %s174 = scalar_select %p171, %s172, %s173
    %p177 = pneg %p171
    %p178 = scmp.eq.s32.totalorder %s30, 3
    %p179 = por %p177, %p178
    %p180 = scmp.ne.s32.totalorder %s172, %s175
    %p181 = scmp.eq.s32.totalorder %s30, 0
    %p182 = por %p180, %p181
    %p183 = scmp.ne.s32.totalorder %s172, %s175
    %p184 = scmp.eq.s32.totalorder %s35, 3
    %p185 = por %p183, %p184
    %p186 = scmp.ne.s32.totalorder %s175, %s176
    %p187 = scmp.eq.s32.totalorder %s35, 0
    %p188 = por %p186, %p187
    %p189 = scmp.ne.s32.totalorder %s175, %s176
    %p190 = scmp.eq.s32.totalorder %s36, 3
    %p191 = por %p189, %p190
    %p193 = scmp.ne.s32.totalorder %s176, %s192
    %p194 = scmp.eq.s32.totalorder %s36, 0
    %p195 = por %p193, %p194
    %s196 = ssub.s32 %s38, %s45
    %p197 = scmp.eq.s32.totalorder %s196, 0
    %s199 = sadd.s32 %s198, 1
    %s200 = scalar_select %p197, %s198, %s199
    %p203 = pneg %p197
    %p204 = scmp.eq.s32.totalorder %s30, 3
    %p205 = por %p203, %p204
    %p206 = scmp.ne.s32.totalorder %s198, %s201
    %p207 = scmp.eq.s32.totalorder %s30, 0
    %p208 = por %p206, %p207
    %p209 = scmp.ne.s32.totalorder %s198, %s201
    %p210 = scmp.eq.s32.totalorder %s35, 3
    %p211 = por %p209, %p210
    %p212 = scmp.ne.s32.totalorder %s201, %s202
    %p213 = scmp.eq.s32.totalorder %s35, 0
    %p214 = por %p212, %p213
    %p215 = scmp.ne.s32.totalorder %s201, %s202
    %p216 = scmp.eq.s32.totalorder %s36, 3
    %p217 = por %p215, %p216
    %p219 = scmp.ne.s32.totalorder %s202, %s218
    %p220 = scmp.eq.s32.totalorder %s36, 0
    %p221 = por %p219, %p220
    %s222 = ssub.s32 %s38, %s45
    %p223 = scmp.eq.s32.totalorder %s222, 0
    %s225 = sadd.s32 %s224, 1
    %s226 = scalar_select %p223, %s224, %s225
    %p229 = pneg %p223
    %p230 = scmp.eq.s32.totalorder %s30, 3
    %p231 = por %p229, %p230
    %p232 = scmp.ne.s32.totalorder %s224, %s227
    %p233 = scmp.eq.s32.totalorder %s30, 0
    %p234 = por %p232, %p233
    %p235 = scmp.ne.s32.totalorder %s224, %s227
    %p236 = scmp.eq.s32.totalorder %s35, 3
    %p237 = por %p235, %p236
    %p238 = scmp.ne.s32.totalorder %s227, %s228
    %p239 = scmp.eq.s32.totalorder %s35, 0
    %p240 = por %p238, %p239
    %p241 = scmp.ne.s32.totalorder %s227, %s228
    %p242 = scmp.eq.s32.totalorder %s36, 3
    %p243 = por %p241, %p242
    %p245 = scmp.ne.s32.totalorder %s228, %s244
    %p246 = scmp.eq.s32.totalorder %s36, 0
    %p247 = por %p245, %p246
    %s248 = ssub.s32 %s38, %s45
    %p249 = scmp.eq.s32.totalorder %s248, 0
    %s251 = sadd.s32 %s250, 1
    %s252 = scalar_select %p249, %s250, %s251
    %p255 = pneg %p249
    %p256 = scmp.eq.s32.totalorder %s30, 3
    %p257 = por %p255, %p256
    %p258 = scmp.ne.s32.totalorder %s250, %s253
    %p259 = scmp.eq.s32.totalorder %s30, 0
    %p260 = por %p258, %p259
    %p261 = scmp.ne.s32.totalorder %s250, %s253
    %p262 = scmp.eq.s32.totalorder %s35, 3
    %p263 = por %p261, %p262
    %p264 = scmp.ne.s32.totalorder %s253, %s254
    %p265 = scmp.eq.s32.totalorder %s35, 0
    %p266 = por %p264, %p265
    %p267 = scmp.ne.s32.totalorder %s253, %s254
    %p268 = scmp.eq.s32.totalorder %s36, 3
    %p269 = por %p267, %p268
    %p271 = scmp.ne.s32.totalorder %s254, %s270
    %p272 = scmp.eq.s32.totalorder %s36, 0
    %p273 = por %p271, %p272
    %s274 = ssub.s32 %s38, %s45
    %p275 = scmp.eq.s32.totalorder %s274, 0
    %s277 = sadd.s32 %s276, 1
    %s278 = scalar_select %p275, %s276, %s277
    %p281 = pneg %p275
    %p282 = scmp.eq.s32.totalorder %s30, 3
    %p283 = por %p281, %p282
    %p284 = scmp.ne.s32.totalorder %s276, %s279
    %p285 = scmp.eq.s32.totalorder %s30, 0
    %p286 = por %p284, %p285
    %p287 = scmp.ne.s32.totalorder %s276, %s279
    %p288 = scmp.eq.s32.totalorder %s35, 3
    %p289 = por %p287, %p288
    %p290 = scmp.ne.s32.totalorder %s279, %s280
    %p291 = scmp.eq.s32.totalorder %s35, 0
    %p292 = por %p290, %p291
    %p293 = scmp.ne.s32.totalorder %s279, %s280
    %p294 = scmp.eq.s32.totalorder %s36, 3
    %p295 = por %p293, %p294
    %p297 = scmp.ne.s32.totalorder %s280, %s296
    %p298 = scmp.eq.s32.totalorder %s36, 0
    %p299 = por %p297, %p298
    %s300 = ssub.s32 %s38, %s45
    %p301 = scmp.eq.s32.totalorder %s300, 0
    %s303 = sadd.s32 %s302, 1
    %s304 = scalar_select %p301, %s302, %s303
    %p307 = pneg %p301
    %p308 = scmp.eq.s32.totalorder %s30, 3
    %p309 = por %p307, %p308
    %p310 = scmp.ne.s32.totalorder %s302, %s305
    %p311 = scmp.eq.s32.totalorder %s30, 0
    %p312 = por %p310, %p311
    %p313 = scmp.ne.s32.totalorder %s302, %s305
    %p314 = scmp.eq.s32.totalorder %s35, 3
    %p315 = por %p313, %p314
    %p316 = scmp.ne.s32.totalorder %s305, %s306
    %p317 = scmp.eq.s32.totalorder %s35, 0
    %p318 = por %p316, %p317
    %p319 = scmp.ne.s32.totalorder %s305, %s306
    %p320 = scmp.eq.s32.totalorder %s36, 3
    %p321 = por %p319, %p320
    %p323 = scmp.ne.s32.totalorder %s306, %s322
    %p324 = scmp.eq.s32.totalorder %s36, 0
    %p325 = por %p323, %p324
    %s326 = ssub.s32 %s38, %s45
    %p327 = scmp.eq.s32.totalorder %s326, 0
    %s329 = sadd.s32 %s328, 1
    %s330 = scalar_select %p327, %s328, %s329
    %p333 = pneg %p327
    %p334 = scmp.eq.s32.totalorder %s30, 3
    %p335 = por %p333, %p334
    %p336 = scmp.ne.s32.totalorder %s328, %s331
    %p337 = scmp.eq.s32.totalorder %s30, 0
    %p338 = por %p336, %p337
    %p339 = scmp.ne.s32.totalorder %s328, %s331
    %p340 = scmp.eq.s32.totalorder %s35, 3
    %p341 = por %p339, %p340
    %p342 = scmp.ne.s32.totalorder %s331, %s332
    %p343 = scmp.eq.s32.totalorder %s35, 0
    %p344 = por %p342, %p343
    %p345 = scmp.ne.s32.totalorder %s331, %s332
    %p346 = scmp.eq.s32.totalorder %s36, 3
    %p347 = por %p345, %p346
    %p349 = scmp.ne.s32.totalorder %s332, %s348
    %p350 = scmp.eq.s32.totalorder %s36, 0
    %p351 = por %p349, %p350
    %s352 = ssub.s32 %s38, %s45
    %p353 = scmp.eq.s32.totalorder %s352, 0
    %s355 = sadd.s32 %s354, 1
    %s356 = scalar_select %p353, %s354, %s355
    %p359 = pneg %p353
    %p360 = scmp.eq.s32.totalorder %s30, 3
    %p361 = por %p359, %p360
    %p362 = scmp.ne.s32.totalorder %s354, %s357
    %p363 = scmp.eq.s32.totalorder %s30, 0
    %p364 = por %p362, %p363
    %p365 = scmp.ne.s32.totalorder %s354, %s357
    %p366 = scmp.eq.s32.totalorder %s35, 3
    %p367 = por %p365, %p366
    %p368 = scmp.ne.s32.totalorder %s357, %s358
    %p369 = scmp.eq.s32.totalorder %s35, 0
    %p370 = por %p368, %p369
    %p371 = scmp.ne.s32.totalorder %s357, %s358
    %p372 = scmp.eq.s32.totalorder %s36, 3
    %p373 = por %p371, %p372
    %p375 = scmp.ne.s32.totalorder %s358, %s374
    %p376 = scmp.eq.s32.totalorder %s36, 0
    %p377 = por %p375, %p376
    %s378 = ssub.s32 %s38, %s45
    %p379 = scmp.eq.s32.totalorder %s378, 0
    %s381 = sadd.s32 %s380, 1
    %s382 = scalar_select %p379, %s380, %s381
    %p385 = pneg %p379
    %p386 = scmp.eq.s32.totalorder %s30, 3
    %p387 = por %p385, %p386
    %p388 = scmp.ne.s32.totalorder %s380, %s383
    %p389 = scmp.eq.s32.totalorder %s30, 0
    %p390 = por %p388, %p389
    %p391 = scmp.ne.s32.totalorder %s380, %s383
    %p392 = scmp.eq.s32.totalorder %s35, 3
    %p393 = por %p391, %p392
    %p394 = scmp.ne.s32.totalorder %s383, %s384
    %p395 = scmp.eq.s32.totalorder %s35, 0
    %p396 = por %p394, %p395
    %p397 = scmp.ne.s32.totalorder %s383, %s384
    %p398 = scmp.eq.s32.totalorder %s36, 3
    %p399 = por %p397, %p398
    %p401 = scmp.ne.s32.totalorder %s384, %s400
    %p402 = scmp.eq.s32.totalorder %s36, 0
    %p403 = por %p401, %p402
    %s404 = ssub.s32 %s38, %s45
    %p405 = scmp.eq.s32.totalorder %s404, 0
    %s407 = sadd.s32 %s406, 1
    %s408 = scalar_select %p405, %s406, %s407
    %p411 = pneg %p405
    %p412 = scmp.eq.s32.totalorder %s30, 3
    %p413 = por %p411, %p412
    %p414 = scmp.ne.s32.totalorder %s406, %s409
    %p415 = scmp.eq.s32.totalorder %s30, 0
    %p416 = por %p414, %p415
    %p417 = scmp.ne.s32.totalorder %s406, %s409
    %p418 = scmp.eq.s32.totalorder %s35, 3
    %p419 = por %p417, %p418
    %p420 = scmp.ne.s32.totalorder %s409, %s410
    %p421 = scmp.eq.s32.totalorder %s35, 0
    %p422 = por %p420, %p421
    %p423 = scmp.ne.s32.totalorder %s409, %s410
    %p424 = scmp.eq.s32.totalorder %s36, 3
    %p425 = por %p423, %p424
    %p427 = scmp.ne.s32.totalorder %s410, %s426
    %p428 = scmp.eq.s32.totalorder %s36, 0
    %p429 = por %p427, %p428
    %s430 = ssub.s32 %s38, %s45
    %p431 = scmp.eq.s32.totalorder %s430, 0
    %s433 = sadd.s32 %s432, 1
    %s434 = scalar_select %p431, %s432, %s433
    %p437 = pneg %p431
    %p438 = scmp.eq.s32.totalorder %s30, 3
    %p439 = por %p437, %p438
    %p440 = scmp.ne.s32.totalorder %s432, %s435
    %p441 = scmp.eq.s32.totalorder %s30, 0
    %p442 = por %p440, %p441
    %p443 = scmp.ne.s32.totalorder %s432, %s435
    %p444 = scmp.eq.s32.totalorder %s35, 3
    %p445 = por %p443, %p444
    %p446 = scmp.ne.s32.totalorder %s435, %s436
    %p447 = scmp.eq.s32.totalorder %s35, 0
    %p448 = por %p446, %p447
    %p449 = scmp.ne.s32.totalorder %s435, %s436
    %p450 = scmp.eq.s32.totalorder %s36, 3
    %p451 = por %p449, %p450
    %p453 = scmp.ne.s32.totalorder %s436, %s452
    %p454 = scmp.eq.s32.totalorder %s36, 0
    %p455 = por %p453, %p454
    %s456 = ssub.s32 %s38, %s45
    %p457 = scmp.eq.s32.totalorder %s456, 0
    %s459 = sadd.s32 %s458, 1
    %s460 = scalar_select %p457, %s458, %s459
    %p463 = pneg %p457
    %p464 = scmp.eq.s32.totalorder %s30, 3
    %p465 = por %p463, %p464
    %p466 = scmp.ne.s32.totalorder %s458, %s461
    %p467 = scmp.eq.s32.totalorder %s30, 0
    %p468 = por %p466, %p467
    %p469 = scmp.ne.s32.totalorder %s458, %s461
    %p470 = scmp.eq.s32.totalorder %s35, 3
    %p471 = por %p469, %p470
    %p472 = scmp.ne.s32.totalorder %s461, %s462
    %p473 = scmp.eq.s32.totalorder %s35, 0
    %p474 = por %p472, %p473
    %p475 = scmp.ne.s32.totalorder %s461, %s462
    %p476 = scmp.eq.s32.totalorder %s36, 3
    %p477 = por %p475, %p476
    %p479 = scmp.ne.s32.totalorder %s462, %s478
    %p480 = scmp.eq.s32.totalorder %s36, 0
    %p481 = por %p479, %p480
    %s482 = ssub.s32 %s38, %s45
    %p483 = scmp.eq.s32.totalorder %s482, 0
    %s485 = sadd.s32 %s484, 1
    %s486 = scalar_select %p483, %s484, %s485
    %p489 = pneg %p483
    %p490 = scmp.eq.s32.totalorder %s30, 3
    %p491 = por %p489, %p490
    %p492 = scmp.ne.s32.totalorder %s484, %s487
    %p493 = scmp.eq.s32.totalorder %s30, 0
    %p494 = por %p492, %p493
    %p495 = scmp.ne.s32.totalorder %s484, %s487
    %p496 = scmp.eq.s32.totalorder %s35, 3
    %p497 = por %p495, %p496
    %p498 = scmp.ne.s32.totalorder %s487, %s488
    %p499 = scmp.eq.s32.totalorder %s35, 0
    %p500 = por %p498, %p499
    %p501 = scmp.ne.s32.totalorder %s487, %s488
    %p502 = scmp.eq.s32.totalorder %s36, 3
    %p503 = por %p501, %p502
    %p505 = scmp.ne.s32.totalorder %s488, %s504
    %p506 = scmp.eq.s32.totalorder %s36, 0
    %p507 = por %p505, %p506
    %s508 = ssub.s32 %s38, %s45
    %p509 = scmp.eq.s32.totalorder %s508, 0
    %s511 = sadd.s32 %s510, 1
    %s512 = scalar_select %p509, %s510, %s511
    %p515 = pneg %p509
    %p516 = scmp.eq.s32.totalorder %s30, 3
    %p517 = por %p515, %p516
    %p518 = scmp.ne.s32.totalorder %s510, %s513
    %p519 = scmp.eq.s32.totalorder %s30, 0
    %p520 = por %p518, %p519
    %p521 = scmp.ne.s32.totalorder %s510, %s513
    %p522 = scmp.eq.s32.totalorder %s35, 3
    %p523 = por %p521, %p522
    %p524 = scmp.ne.s32.totalorder %s513, %s514
    %p525 = scmp.eq.s32.totalorder %s35, 0
    %p526 = por %p524, %p525
    %p527 = scmp.ne.s32.totalorder %s513, %s514
    %p528 = scmp.eq.s32.totalorder %s36, 3
    %p529 = por %p527, %p528
    %p531 = scmp.ne.s32.totalorder %s514, %s530
    %p532 = scmp.eq.s32.totalorder %s36, 0
    %p533 = por %p531, %p532
    %s534 = ssub.s32 %s38, %s45
    %p535 = scmp.eq.s32.totalorder %s534, 0
    %s537 = sadd.s32 %s536, 1
    %s538 = scalar_select %p535, %s536, %s537
    %p541 = pneg %p535
    %p542 = scmp.eq.s32.totalorder %s30, 3
    %p543 = por %p541, %p542
    %p544 = scmp.ne.s32.totalorder %s536, %s539
    %p545 = scmp.eq.s32.totalorder %s30, 0
    %p546 = por %p544, %p545
    %p547 = scmp.ne.s32.totalorder %s536, %s539
    %p548 = scmp.eq.s32.totalorder %s35, 3
    %p549 = por %p547, %p548
    %p550 = scmp.ne.s32.totalorder %s539, %s540
    %p551 = scmp.eq.s32.totalorder %s35, 0
    %p552 = por %p550, %p551
    %p553 = scmp.ne.s32.totalorder %s539, %s540
    %p554 = scmp.eq.s32.totalorder %s36, 3
    %p555 = por %p553, %p554
    %p557 = scmp.ne.s32.totalorder %s540, %s556
    %p558 = scmp.eq.s32.totalorder %s36, 0
    %p559 = por %p557, %p558
    %s561 = sadd.s32 %s560, 1
    %p564 = scmp.eq.s32.totalorder %s30, 3
    %p565 = scmp.ne.s32.totalorder %s560, %s562
    %p566 = scmp.eq.s32.totalorder %s30, 0
    %p567 = por %p565, %p566
    %p568 = scmp.ne.s32.totalorder %s560, %s562
    %p569 = scmp.eq.s32.totalorder %s35, 3
    %p570 = por %p568, %p569
    %p571 = scmp.ne.s32.totalorder %s562, %s563
    %p572 = scmp.eq.s32.totalorder %s35, 0
    %p573 = por %p571, %p572
    %p574 = scmp.ne.s32.totalorder %s562, %s563
    %p575 = scmp.eq.s32.totalorder %s36, 3
    %p576 = por %p574, %p575
    %p578 = scmp.ne.s32.totalorder %s563, %s577
    %p579 = scmp.eq.s32.totalorder %s36, 0
    %p580 = por %p578, %p579
    %s582 = sadd.s32 %s581, 1
    %p585 = scmp.eq.s32.totalorder %s30, 3
    %p586 = scmp.ne.s32.totalorder %s581, %s583
    %p587 = scmp.eq.s32.totalorder %s30, 0
    %p588 = por %p586, %p587
    %p589 = scmp.ne.s32.totalorder %s581, %s583
    %p590 = scmp.eq.s32.totalorder %s35, 3
    %p591 = por %p589, %p590
    %p592 = scmp.ne.s32.totalorder %s583, %s584
    %p593 = scmp.eq.s32.totalorder %s35, 0
    %p594 = por %p592, %p593
    %p595 = scmp.ne.s32.totalorder %s583, %s584
    %p596 = scmp.eq.s32.totalorder %s36, 3
    %p597 = por %p595, %p596
    %p599 = scmp.ne.s32.totalorder %s584, %s598
    %p600 = scmp.eq.s32.totalorder %s36, 0
    %p601 = por %p599, %p600
    %s603 = sadd.s32 %s602, 1
    %p606 = scmp.eq.s32.totalorder %s30, 3
    %p607 = scmp.ne.s32.totalorder %s602, %s604
    %p608 = scmp.eq.s32.totalorder %s30, 0
    %p609 = por %p607, %p608
    %p610 = scmp.ne.s32.totalorder %s602, %s604
    %p611 = scmp.eq.s32.totalorder %s35, 3
    %p612 = por %p610, %p611
    %p613 = scmp.ne.s32.totalorder %s604, %s605
    %p614 = scmp.eq.s32.totalorder %s35, 0
    %p615 = por %p613, %p614
    %p616 = scmp.ne.s32.totalorder %s604, %s605
    %p617 = scmp.eq.s32.totalorder %s36, 3
    %p618 = por %p616, %p617
    %p620 = scmp.ne.s32.totalorder %s605, %s619
    %p621 = scmp.eq.s32.totalorder %s36, 0
    %p622 = por %p620, %p621
    %s624 = sadd.s32 %s623, 1
    %p627 = scmp.eq.s32.totalorder %s30, 3
    %p628 = scmp.ne.s32.totalorder %s623, %s625
    %p629 = scmp.eq.s32.totalorder %s30, 0
    %p630 = por %p628, %p629
    %p631 = scmp.ne.s32.totalorder %s623, %s625
    %p632 = scmp.eq.s32.totalorder %s35, 3
    %p633 = por %p631, %p632
    %p634 = scmp.ne.s32.totalorder %s625, %s626
    %p635 = scmp.eq.s32.totalorder %s35, 0
    %p636 = por %p634, %p635
    %p637 = scmp.ne.s32.totalorder %s625, %s626
    %p638 = scmp.eq.s32.totalorder %s36, 3
    %p639 = por %p637, %p638
    %p641 = scmp.ne.s32.totalorder %s626, %s640
    %p642 = scmp.eq.s32.totalorder %s36, 0
    %p643 = por %p641, %p642
    %s644 = ssub.s32 %s37, %s49
    %p645 = scmp.eq.s32.totalorder %s644, 0
    %s647 = sadd.s32 %s646, 1
    %s648 = scalar_select %p645, %s646, %s647
    %p651 = pneg %p645
    %p652 = scmp.eq.s32.totalorder %s30, 3
    %p653 = por %p651, %p652
    %p654 = scmp.ne.s32.totalorder %s646, %s649
    %p655 = scmp.eq.s32.totalorder %s30, 0
    %p656 = por %p654, %p655
    %p657 = scmp.ne.s32.totalorder %s646, %s649
    %p658 = scmp.eq.s32.totalorder %s35, 3
    %p659 = por %p657, %p658
    %p660 = scmp.ne.s32.totalorder %s649, %s650
    %p661 = scmp.eq.s32.totalorder %s35, 0
    %p662 = por %p660, %p661
    %p663 = scmp.ne.s32.totalorder %s649, %s650
    %p664 = scmp.eq.s32.totalorder %s36, 3
    %p665 = por %p663, %p664
    %p667 = scmp.ne.s32.totalorder %s650, %s666
    %p668 = scmp.eq.s32.totalorder %s36, 0
    %p669 = por %p667, %p668
    %p670 = scmp.le.s32.totalorder 1, %s30
    %p671 = scmp.lt.s32.totalorder %s30, 5
    %p672 = pnand %p670, %p671
    %p673 = pneg %p672
    // Predicated region
    $region9: #{longformer_forward.1} parent=5 // pred_check
      _
    $region10: #{longformer_forward.1} parent=5 // pred_check_branch
      %675 = sbr.rel (%p672) target = $region12
    $region11: #{longformer_forward.1} parent=5 // pred_region
      %s676 = ssub.s32 %s30, 1
      // Predicated region
      $region13: #{longformer_forward.1} parent=11 // pred_check
        %p677 = pneg %p115
      $region14: #{longformer_forward.1} parent=11 // pred_check_branch
        %679 = sbr.rel (%p677) target = $region16
      $region15: #{longformer_forward.1} parent=11 // pred_region
        _
      $region16: #{longformer_forward.1} parent=11 // pred_fallthru
        _
      // Predicated region
      $region17: #{longformer_forward.1} parent=11 // pred_check
        %p680 = pneg %p136
      $region18: #{longformer_forward.1} parent=11 // pred_check_branch
        %682 = sbr.rel (%p680) target = $region20
      $region19: #{longformer_forward.1} parent=11 // pred_region
        _
      $region20: #{longformer_forward.1} parent=11 // pred_fallthru
        _
      // Predicated region
      $region21: #{longformer_forward.1} parent=11 // pred_check
        %p683 = pneg %p573
      $region22: #{longformer_forward.1} parent=11 // pred_check_branch
        %685 = sbr.rel (%p683) target = $region24
      $region23: #{longformer_forward.1} parent=11 // pred_region
        _
      $region24: #{longformer_forward.1} parent=11 // pred_fallthru
        _
      // Predicated region
      $region25: #{longformer_forward.1} parent=11 // pred_check
        %p686 = pneg %p594
      $region26: #{longformer_forward.1} parent=11 // pred_check_branch
        %688 = sbr.rel (%p686) target = $region28
      $region27: #{longformer_forward.1} parent=11 // pred_region
        _
      $region28: #{longformer_forward.1} parent=11 // pred_fallthru
        _
      // Predicated region
      $region29: #{longformer_forward.1} parent=11 // pred_check
        %p689 = pneg %p615
      $region30: #{longformer_forward.1} parent=11 // pred_check_branch
        %691 = sbr.rel (%p689) target = $region32
      $region31: #{longformer_forward.1} parent=11 // pred_region
        _
      $region32: #{longformer_forward.1} parent=11 // pred_fallthru
        _
      // Predicated region
      $region33: #{longformer_forward.1} parent=11 // pred_check
        %p692 = pneg %p636
      $region34: #{longformer_forward.1} parent=11 // pred_check_branch
        %694 = sbr.rel (%p692) target = $region36
      $region35: #{longformer_forward.1} parent=11 // pred_region
        _
      $region36: #{longformer_forward.1} parent=11 // pred_fallthru
        _
    $region12: #{longformer_forward.1} parent=5 // pred_fallthru
      _
    %p695 = scmp.lt.s32.totalorder %s30, 4
    // Predicated region
    $region37: #{longformer_forward.1} parent=5 // pred_check
      %p696 = pneg %p695
    $region38: #{longformer_forward.1} parent=5 // pred_check_branch
      %698 = sbr.rel (%p696) target = $region40
    $region39: #{longformer_forward.1} parent=5 // pred_region
      // Predicated region
      $region41: #{longformer_forward.1} parent=39 // pred_check
        %p699 = pneg %p62
      $region42: #{longformer_forward.1} parent=39 // pred_check_branch
        %701 = sbr.rel (%p699) target = $region44
      $region43: #{longformer_forward.1} parent=39 // pred_region
        %p702 = scmp.lt.s32.totalorder %s37, 1
        %s703 = scalar_select %p702, %s37, 1
        %s704 = smul.addr %s703, 2
        %s705 = smul.addr %s704, 8
        %s706 = scalar_lea.vmem %s0, %s705
      $region44: #{longformer_forward.1} parent=39 // pred_fallthru
        _
      // Predicated region
      $region45: #{longformer_forward.1} parent=39 // pred_check
        %p707 = pneg %p88
      $region46: #{longformer_forward.1} parent=39 // pred_check_branch
        %709 = sbr.rel (%p707) target = $region48
      $region47: #{longformer_forward.1} parent=39 // pred_region
        %p710 = scmp.lt.s32.totalorder %s37, 1
        %s711 = scalar_select %p710, %s37, 1
        %s712 = scalar_lea.vmem %s1, %s711
      $region48: #{longformer_forward.1} parent=39 // pred_fallthru
        _
      // Predicated region
      $region49: #{longformer_forward.1} parent=39 // pred_check
        %p713 = pneg %p156
      $region50: #{longformer_forward.1} parent=39 // pred_check_branch
        %715 = sbr.rel (%p713) target = $region52
      $region51: #{longformer_forward.1} parent=39 // pred_region
        %p716 = scmp.lt.s32.totalorder %s38, 1
        %s717 = scalar_select %p716, %s38, 1
        %s718 = smul.addr %s717, 4
        %s719 = smul.addr %s718, 4
        %s720 = scalar_lea.vmem %s4, %s719
      $region52: #{longformer_forward.1} parent=39 // pred_fallthru
        _
      // Predicated region
      $region53: #{longformer_forward.1} parent=39 // pred_check
        %p721 = pneg %p182
      $region54: #{longformer_forward.1} parent=39 // pred_check_branch
        %723 = sbr.rel (%p721) target = $region56
      $region55: #{longformer_forward.1} parent=39 // pred_region
        %p724 = scmp.lt.s32.totalorder %s38, 1
        %s725 = scalar_select %p724, %s38, 1
        %s726 = scalar_lea.vmem %s5, %s725
      $region56: #{longformer_forward.1} parent=39 // pred_fallthru
        _
      // Predicated region
      $region57: #{longformer_forward.1} parent=39 // pred_check
        %p727 = pneg %p208
      $region58: #{longformer_forward.1} parent=39 // pred_check_branch
        %729 = sbr.rel (%p727) target = $region60
      $region59: #{longformer_forward.1} parent=39 // pred_region
        %p730 = scmp.lt.s32.totalorder %s38, 1
        %s731 = scalar_select %p730, %s38, 1
        %s732 = smul.addr %s731, 4
        %s733 = smul.addr %s732, 4
        %s734 = scalar_lea.vmem %s6, %s733
      $region60: #{longformer_forward.1} parent=39 // pred_fallthru
        _
      // Predicated region
      $region61: #{longformer_forward.1} parent=39 // pred_check
        %p735 = pneg %p234
      $region62: #{longformer_forward.1} parent=39 // pred_check_branch
        %737 = sbr.rel (%p735) target = $region64
      $region63: #{longformer_forward.1} parent=39 // pred_region
        %p738 = scmp.lt.s32.totalorder %s38, 1
        %s739 = scalar_select %p738, %s38, 1
        %s740 = scalar_lea.vmem %s7, %s739
      $region64: #{longformer_forward.1} parent=39 // pred_fallthru
        _
      // Predicated region
      $region65: #{longformer_forward.1} parent=39 // pred_check
        %p741 = pneg %p260
      $region66: #{longformer_forward.1} parent=39 // pred_check_branch
        %743 = sbr.rel (%p741) target = $region68
      $region67: #{longformer_forward.1} parent=39 // pred_region
        %p744 = scmp.lt.s32.totalorder %s38, 1
        %s745 = scalar_select %p744, %s38, 1
        %s746 = smul.addr %s745, 4
        %s747 = smul.addr %s746, 4
        %s748 = scalar_lea.vmem %s8, %s747
      $region68: #{longformer_forward.1} parent=39 // pred_fallthru
        _
      // Predicated region
      $region69: #{longformer_forward.1} parent=39 // pred_check
        %p749 = pneg %p286
      $region70: #{longformer_forward.1} parent=39 // pred_check_branch
        %751 = sbr.rel (%p749) target = $region72
      $region71: #{longformer_forward.1} parent=39 // pred_region
        %p752 = scmp.lt.s32.totalorder %s38, 1
        %s753 = scalar_select %p752, %s38, 1
        %s754 = scalar_lea.vmem %s9, %s753
      $region72: #{longformer_forward.1} parent=39 // pred_fallthru
        _
      // Predicated region
      $region73: #{longformer_forward.1} parent=39 // pred_check
        %p755 = pneg %p312
      $region74: #{longformer_forward.1} parent=39 // pred_check_branch
        %757 = sbr.rel (%p755) target = $region76
      $region75: #{longformer_forward.1} parent=39 // pred_region
        %p758 = scmp.lt.s32.totalorder %s38, 1
        %s759 = scalar_select %p758, %s38, 1
        %s760 = smul.addr %s759, 4
        %s761 = smul.addr %s760, 4
        %s762 = scalar_lea.vmem %s10, %s761
      $region76: #{longformer_forward.1} parent=39 // pred_fallthru
        _
      // Predicated region
      $region77: #{longformer_forward.1} parent=39 // pred_check
        %p763 = pneg %p338
      $region78: #{longformer_forward.1} parent=39 // pred_check_branch
        %765 = sbr.rel (%p763) target = $region80
      $region79: #{longformer_forward.1} parent=39 // pred_region
        %p766 = scmp.lt.s32.totalorder %s38, 1
        %s767 = scalar_select %p766, %s38, 1
        %s768 = scalar_lea.vmem %s11, %s767
      $region80: #{longformer_forward.1} parent=39 // pred_fallthru
        _
      // Predicated region
      $region81: #{longformer_forward.1} parent=39 // pred_check
        %p769 = pneg %p364
      $region82: #{longformer_forward.1} parent=39 // pred_check_branch
        %771 = sbr.rel (%p769) target = $region84
      $region83: #{longformer_forward.1} parent=39 // pred_region
        %p772 = scmp.lt.s32.totalorder %s38, 1
        %s773 = scalar_select %p772, %s38, 1
        %s774 = scalar_lea.vmem %s12, %s773
      $region84: #{longformer_forward.1} parent=39 // pred_fallthru
        _
      // Predicated region
      $region85: #{longformer_forward.1} parent=39 // pred_check
        %p775 = pneg %p390
      $region86: #{longformer_forward.1} parent=39 // pred_check_branch
        %777 = sbr.rel (%p775) target = $region88
      $region87: #{longformer_forward.1} parent=39 // pred_region
        %p778 = scmp.lt.s32.totalorder %s38, 1
        %s779 = scalar_select %p778, %s38, 1
        %s780 = scalar_lea.vmem %s13, %s779
      $region88: #{longformer_forward.1} parent=39 // pred_fallthru
        _
      // Predicated region
      $region89: #{longformer_forward.1} parent=39 // pred_check
        %p781 = pneg %p416
      $region90: #{longformer_forward.1} parent=39 // pred_check_branch
        %783 = sbr.rel (%p781) target = $region92
      $region91: #{longformer_forward.1} parent=39 // pred_region
        %p784 = scmp.lt.s32.totalorder %s38, 1
        %s785 = scalar_select %p784, %s38, 1
        %s786 = smul.addr %s785, 4
        %s787 = smul.addr %s786, 4
        %s788 = scalar_lea.vmem %s14, %s787
      $region92: #{longformer_forward.1} parent=39 // pred_fallthru
        _
      // Predicated region
      $region93: #{longformer_forward.1} parent=39 // pred_check
        %p789 = pneg %p442
      $region94: #{longformer_forward.1} parent=39 // pred_check_branch
        %791 = sbr.rel (%p789) target = $region96
      $region95: #{longformer_forward.1} parent=39 // pred_region
        %p792 = scmp.lt.s32.totalorder %s38, 1
        %s793 = scalar_select %p792, %s38, 1
        %s794 = scalar_lea.vmem %s15, %s793
      $region96: #{longformer_forward.1} parent=39 // pred_fallthru
        _
      // Predicated region
      $region97: #{longformer_forward.1} parent=39 // pred_check
        %p795 = pneg %p468
      $region98: #{longformer_forward.1} parent=39 // pred_check_branch
        %797 = sbr.rel (%p795) target = $region100
      $region99: #{longformer_forward.1} parent=39 // pred_region
        %p798 = scmp.lt.s32.totalorder %s38, 1
        %s799 = scalar_select %p798, %s38, 1
        %s800 = smul.addr %s799, 8
        %s801 = smul.addr %s800, 4
        %s802 = scalar_lea.vmem %s16, %s801
      $region100: #{longformer_forward.1} parent=39 // pred_fallthru
        _
      // Predicated region
      $region101: #{longformer_forward.1} parent=39 // pred_check
        %p803 = pneg %p494
      $region102: #{longformer_forward.1} parent=39 // pred_check_branch
        %805 = sbr.rel (%p803) target = $region104
      $region103: #{longformer_forward.1} parent=39 // pred_region
        %p806 = scmp.lt.s32.totalorder %s38, 1
        %s807 = scalar_select %p806, %s38, 1
        %s808 = scalar_lea.vmem %s17, %s807
      $region104: #{longformer_forward.1} parent=39 // pred_fallthru
        _
      // Predicated region
      $region105: #{longformer_forward.1} parent=39 // pred_check
        %p809 = pneg %p520
      $region106: #{longformer_forward.1} parent=39 // pred_check_branch
        %811 = sbr.rel (%p809) target = $region108
      $region107: #{longformer_forward.1} parent=39 // pred_region
        %p812 = scmp.lt.s32.totalorder %s38, 1
        %s813 = scalar_select %p812, %s38, 1
        %s814 = scalar_lea.vmem %s18, %s813
      $region108: #{longformer_forward.1} parent=39 // pred_fallthru
        _
      // Predicated region
      $region109: #{longformer_forward.1} parent=39 // pred_check
        %p815 = pneg %p546
      $region110: #{longformer_forward.1} parent=39 // pred_check_branch
        %817 = sbr.rel (%p815) target = $region112
      $region111: #{longformer_forward.1} parent=39 // pred_region
        %p818 = scmp.lt.s32.totalorder %s38, 1
        %s819 = scalar_select %p818, %s38, 1
        %s820 = scalar_lea.vmem %s19, %s819
      $region112: #{longformer_forward.1} parent=39 // pred_fallthru
        _
    $region40: #{longformer_forward.1} parent=5 // pred_fallthru
      _
    %p821 = scmp.le.s32.totalorder 1, %s30
    %p822 = scmp.lt.s32.totalorder %s30, 5
    %p823 = pnand %p821, %p822
    %p824 = pneg %p823
    // Predicated region
    $region113: #{longformer_forward.1} parent=5 // pred_check
      _
    $region114: #{longformer_forward.1} parent=5 // pred_check_branch
      %826 = sbr.rel (%p823) target = $region116
    $region115: #{longformer_forward.1} parent=5 // pred_region
      %s827 = ssub.s32 %s30, 1
      %p828 = scmp.lt.s32.totalorder %s39, 1
      %s829 = scalar_select %p828, %s39, 1
      %s830 = smul.addr %s829, 2
      %s831 = smul.addr %s830, 8
      %s832 = scalar_lea.vmem %s0, %s831
      %p833 = pneg %p68
      %p834 = pneg %p65
      %p835 = scmp.lt.s32.totalorder %s39, 1
      %s836 = scalar_select %p835, %s39, 1
      %s837 = scalar_lea.vmem %s1, %s836
      %p838 = pneg %p94
      %p839 = pneg %p91
      %p840 = pneg %p115
      %p841 = pneg %p112
      %p842 = pneg %p136
      %p843 = pneg %p133
      %p844 = scmp.lt.s32.totalorder %s40, 1
      %s845 = scalar_select %p844, %s40, 1
      %s846 = smul.addr %s845, 4
      %s847 = smul.addr %s846, 4
      %s848 = scalar_lea.vmem %s4, %s847
      %p849 = pneg %p162
      %p850 = pneg %p159
      %p851 = scmp.lt.s32.totalorder %s40, 1
      %s852 = scalar_select %p851, %s40, 1
      %s853 = scalar_lea.vmem %s5, %s852
      %p854 = pneg %p188
      %p855 = pneg %p185
      %p856 = scmp.lt.s32.totalorder %s40, 1
      %s857 = scalar_select %p856, %s40, 1
      %s858 = smul.addr %s857, 4
      %s859 = smul.addr %s858, 4
      %s860 = scalar_lea.vmem %s6, %s859
      %p861 = pneg %p214
      %p862 = pneg %p211
      %p863 = scmp.lt.s32.totalorder %s40, 1
      %s864 = scalar_select %p863, %s40, 1
      %s865 = scalar_lea.vmem %s7, %s864
      %p866 = pneg %p240
      %p867 = pneg %p237
      %p868 = scmp.lt.s32.totalorder %s40, 1
      %s869 = scalar_select %p868, %s40, 1
      %s870 = smul.addr %s869, 4
      %s871 = smul.addr %s870, 4
      %s872 = scalar_lea.vmem %s8, %s871
      %p873 = pneg %p266
      %p874 = pneg %p263
      %p875 = scmp.lt.s32.totalorder %s40, 1
      %s876 = scalar_select %p875, %s40, 1
      %s877 = scalar_lea.vmem %s9, %s876
      %p878 = pneg %p292
      %p879 = pneg %p289
      %p880 = scmp.lt.s32.totalorder %s40, 1
      %s881 = scalar_select %p880, %s40, 1
      %s882 = smul.addr %s881, 4
      %s883 = smul.addr %s882, 4
      %s884 = scalar_lea.vmem %s10, %s883
      %p885 = pneg %p318
      %p886 = pneg %p315
      %p887 = scmp.lt.s32.totalorder %s40, 1
      %s888 = scalar_select %p887, %s40, 1
      %s889 = scalar_lea.vmem %s11, %s888
      %p890 = pneg %p344
      %p891 = pneg %p341
      %p892 = scmp.lt.s32.totalorder %s40, 1
      %s893 = scalar_select %p892, %s40, 1
      %s894 = scalar_lea.vmem %s12, %s893
      %p895 = pneg %p370
      %p896 = pneg %p367
      %p897 = scmp.lt.s32.totalorder %s40, 1
      %s898 = scalar_select %p897, %s40, 1
      %s899 = scalar_lea.vmem %s13, %s898
      %p900 = pneg %p396
      %p901 = pneg %p393
      %p902 = scmp.lt.s32.totalorder %s40, 1
      %s903 = scalar_select %p902, %s40, 1
      %s904 = smul.addr %s903, 4
      %s905 = smul.addr %s904, 4
      %s906 = scalar_lea.vmem %s14, %s905
      %p907 = pneg %p422
      %p908 = pneg %p419
      %p909 = scmp.lt.s32.totalorder %s40, 1
      %s910 = scalar_select %p909, %s40, 1
      %s911 = scalar_lea.vmem %s15, %s910
      %p912 = pneg %p448
      %p913 = pneg %p445
      %p914 = scmp.lt.s32.totalorder %s40, 1
      %s915 = scalar_select %p914, %s40, 1
      %s916 = smul.addr %s915, 8
      %s917 = smul.addr %s916, 4
      %s918 = scalar_lea.vmem %s16, %s917
      %p919 = pneg %p474
      %p920 = pneg %p471
      %p921 = scmp.lt.s32.totalorder %s40, 1
      %s922 = scalar_select %p921, %s40, 1
      %s923 = scalar_lea.vmem %s17, %s922
      %p924 = pneg %p500
      %p925 = pneg %p497
      %p926 = scmp.lt.s32.totalorder %s40, 1
      %s927 = scalar_select %p926, %s40, 1
      %s928 = scalar_lea.vmem %s18, %s927
      %p929 = pneg %p526
      %p930 = pneg %p523
      %p931 = scmp.lt.s32.totalorder %s40, 1
      %s932 = scalar_select %p931, %s40, 1
      %s933 = scalar_lea.vmem %s19, %s932
      %p934 = pneg %p552
      %p935 = pneg %p549
      %p936 = pneg %p573
      %p937 = pneg %p570
      %p938 = pneg %p594
      %p939 = pneg %p591
      %p940 = pneg %p615
      %p941 = pneg %p612
      %p942 = pneg %p636
      %p943 = pneg %p633
      %p944 = pneg %p662
      %p945 = pneg %p659
      %p946 = scmp.lt.s32.totalorder %s39, 1
      %s947 = scalar_select %p946, %s39, 1
      %s948 = smul.addr %s947, 8
      %s949 = scalar_lea.vmem %s24, %s948
      %p950 = scmp.lt.s32.totalorder %s39, 1
      %s951 = scalar_select %p950, %s39, 1
      %s952 = smul.addr %s951, 2
      %s953 = smul.addr %s952, 8
      %s954 = scalar_lea.vmem %s0, %s953
      %p955 = scmp.lt.s32.totalorder %s39, 1
      %s956 = scalar_select %p955, %s39, 1
      %s957 = scalar_lea.vmem %s1, %s956
      %p958 = scmp.lt.s32.totalorder %s40, 1
      %s959 = scalar_select %p958, %s40, 1
      %s960 = smul.addr %s959, 4
      %s961 = smul.addr %s960, 4
      %s962 = scalar_lea.vmem %s4, %s961
      %p963 = scmp.lt.s32.totalorder %s40, 1
      %s964 = scalar_select %p963, %s40, 1
      %s965 = scalar_lea.vmem %s5, %s964
      %p966 = scmp.lt.s32.totalorder %s40, 1
      %s967 = scalar_select %p966, %s40, 1
      %s968 = smul.addr %s967, 4
      %s969 = smul.addr %s968, 4
      %s970 = scalar_lea.vmem %s6, %s969
      %p971 = scmp.lt.s32.totalorder %s40, 1
      %s972 = scalar_select %p971, %s40, 1
      %s973 = scalar_lea.vmem %s7, %s972
      %p974 = scmp.lt.s32.totalorder %s40, 1
      %s975 = scalar_select %p974, %s40, 1
      %s976 = smul.addr %s975, 4
      %s977 = smul.addr %s976, 4
      %s978 = scalar_lea.vmem %s8, %s977
      %p979 = scmp.lt.s32.totalorder %s40, 1
      %s980 = scalar_select %p979, %s40, 1
      %s981 = scalar_lea.vmem %s9, %s980
      %p982 = scmp.lt.s32.totalorder %s40, 1
      %s983 = scalar_select %p982, %s40, 1
      %s984 = smul.addr %s983, 4
      %s985 = smul.addr %s984, 4
      %s986 = scalar_lea.vmem %s10, %s985
      %p987 = scmp.lt.s32.totalorder %s40, 1
      %s988 = scalar_select %p987, %s40, 1
      %s989 = scalar_lea.vmem %s11, %s988
      %p990 = scmp.lt.s32.totalorder %s40, 1
      %s991 = scalar_select %p990, %s40, 1
      %s992 = scalar_lea.vmem %s12, %s991
      %p993 = scmp.lt.s32.totalorder %s40, 1
      %s994 = scalar_select %p993, %s40, 1
      %s995 = scalar_lea.vmem %s13, %s994
      %p996 = scmp.lt.s32.totalorder %s40, 1
      %s997 = scalar_select %p996, %s40, 1
      %s998 = smul.addr %s997, 4
      %s999 = smul.addr %s998, 4
      %s1000 = scalar_lea.vmem %s14, %s999
      %p1001 = scmp.lt.s32.totalorder %s40, 1
      %s1002 = scalar_select %p1001, %s40, 1
      %s1003 = scalar_lea.vmem %s15, %s1002
      %p1004 = scmp.lt.s32.totalorder %s40, 1
      %s1005 = scalar_select %p1004, %s40, 1
      %s1006 = smul.addr %s1005, 8
      %s1007 = smul.addr %s1006, 4
      %s1008 = scalar_lea.vmem %s16, %s1007
      %p1009 = scmp.lt.s32.totalorder %s40, 1
      %s1010 = scalar_select %p1009, %s40, 1
      %s1011 = scalar_lea.vmem %s17, %s1010
      %p1012 = scmp.lt.s32.totalorder %s40, 1
      %s1013 = scalar_select %p1012, %s40, 1
      %s1014 = scalar_lea.vmem %s18, %s1013
      %p1015 = scmp.lt.s32.totalorder %s40, 1
      %s1016 = scalar_select %p1015, %s40, 1
      %s1017 = scalar_lea.vmem %s19, %s1016
      %p1018 = scmp.lt.s32.totalorder %s39, 1
      %s1019 = scalar_select %p1018, %s39, 1
      %s1020 = smul.addr %s1019, 8
      %s1021 = scalar_lea.vmem %s24, %s1020
      %p1023 = scmp.eq.s32.totalorder %s40, 0
      // Predicated region
      $region117: #{longformer_forward.1} parent=115 // pred_check
        %p1024 = pneg %p1023
      $region118: #{longformer_forward.1} parent=115 // pred_check_branch
        %1026 = sbr.rel (%p1024) target = $region120
      $region119: #{longformer_forward.1} parent=115 // pred_region
        %v1027 = vld [vmem:[%s954] sm:$0xff]
        %v1028 = vld [vmem:[%s954 + $0x8] sm:$0xff]
        %v1029 = vld [vmem:[%s2] sm:$0x1]
        %v1030 = vld [vmem:[%s3] sm:$0x1]
        %vm1031 = vcmask 261120
        %v1032 = vsel %vm1031, %v1027, 0.0
        %1033 = vadd.xlane.f32.xlu0 %v1032
        %v1034 = vpop.xlane.xlu0 %1033
        %v1035 = vsel %vm1031, %v1028, 0.0
        %1036 = vadd.xlane.f32.xlu0 %v1035
        %v1037 = vpop.xlane.xlu0 %1036
        %v1038 = vrcp.pop 32.0
        %v1039 = vmul.f32 %v1034, %v1038
        %v1040 = vmul.f32 %v1037, %v1038
        %v1041 = vsub.f32 %v1027, %v1039
        %v1042 = vsub.f32 %v1028, %v1040
        %v1043 = vmul.f32 %v1041, %v1041
        %v1044 = vmul.f32 %v1042, %v1042
        %v1045 = vsel %vm1031, %v1043, 0.0
        %1046 = vadd.xlane.f32.xlu0 %v1045
        %v1047 = vpop.xlane.xlu0 %1046
        %v1048 = vsel %vm1031, %v1044, 0.0
        %1049 = vadd.xlane.f32.xlu0 %v1048
        %v1050 = vpop.xlane.xlu0 %1049
        %v1051 = vmul.f32 %v1047, %v1038
        %v1052 = vmul.f32 %v1050, %v1038
        %v1053 = vadd.f32 %v1051, 1e-12
        %v1054 = vadd.f32 %v1052, 1e-12
        %v1055 = vrsqrt.pop %v1053
        %v1056 = vrsqrt.pop %v1054
        %v1057 = vmul.f32 %v1041, %v1055
        %v1058 = vmul.f32 %v1042, %v1056
        %v1060 = vlaneseq
        %v1061 = vshrl.u32 %v1060, 7
        %v1062 = vsub.s32 0, %v1061
        %v1063 = vrot.slane %v1029, %v1062
        %v1065 = vmul.f32 %v1057, %v1063
        %v1066 = vmul.f32 %v1058, %v1063
        %v1068 = vlaneseq
        %v1069 = vshrl.u32 %v1068, 7
        %v1070 = vsub.s32 0, %v1069
        %v1071 = vrot.slane %v1030, %v1070
        %v1073 = vadd.f32 %v1065, %v1071
        %v1074 = vadd.f32 %v1066, %v1071
        %1075 = vst.msk [vmem:[#allocation2] sm:$0xff] %vm1031, %v1073
        %1076 = vst.msk [vmem:[#allocation2 + $0x8] sm:$0xff] %vm1031, %v1074
        %v1077 = vlaneseq
        %v1078 = vshrl.u32 %v1077, 7
        %v1079 = vadd.s32 %v1078, 8
        %v1080 = vlaneseq
        %v1081 = vand.u32 %v1080, 127
        %v1082 = vsub.s32 %v1081, %v1078
        %v1083 = vsub.s32 %v1081, %v1079
        %vm1084 = vcmp.le.s32.totalorder %v1082, 4
        %vm1085 = vcmp.le.s32.totalorder %v1083, 4
        %v1086 = vsub.s32 %v1078, %v1081
        %v1087 = vsub.s32 %v1079, %v1081
        %vm1088 = vcmp.le.s32.totalorder %v1086, 4
        %vm1089 = vcmp.le.s32.totalorder %v1087, 4
        %vm1090 = vmand %vm1084, %vm1088
        %vm1091 = vmand %vm1085, %vm1089
        %vm1092 = vcmp.eq.s32.totalorder %v1078, 0
        %vm1093 = vcmp.eq.s32.totalorder %v1079, 0
        %vm1094 = vcmp.eq.s32.totalorder %v1081, 0
        %vm1095 = vmor %vm1092, %vm1094
        %vm1096 = vmor %vm1093, %vm1094
        %vm1097 = vmor %vm1090, %vm1095
        %vm1098 = vmor %vm1091, %vm1096
        %v1099 = vsel %vm1097, 0.0, -1e+09
        %v1100 = vsel %vm1098, 0.0, -1e+09
        %v1101 = vld [vmem:[%s957] sm:$0x1]
        %v1103 = vlaneseq
        %v1104 = vshrl.u32 %v1103, 7
        %v1105 = vsub.s32 0, %v1104
        %v1106 = vrot.slane %v1101, %v1105
        %v1108 = vadd.f32 %v1099, %v1106
        %v1109 = vadd.f32 %v1100, %v1106
        %vm1110 = vcmask 130048
        %1111 = vst.msk [vmem:[#allocation3] sm:$0xff] %vm1110, %v1108
        %1112 = vst.msk [vmem:[#allocation3 + $0x8] sm:$0xff] %vm1110, %v1109
      $region120: #{longformer_forward.1} parent=115 // pred_fallthru
        _
      %v1113 = vld [vmem:[#allocation2] sm:$0xff]
      %v1114 = vld [vmem:[#allocation2 + $0x8] sm:$0xff]
      %v1115 = vpack.c.bf16 %v1114, %v1113
      %v1116 = vld [vmem:[%s962] sm:$0xf]
      %v1117 = vld [vmem:[%s962 + $0x4] sm:$0xf]
      %v1118 = vld [vmem:[%s962 + $0x8] sm:$0xf]
      %v1119 = vld [vmem:[%s962 + $0xc] sm:$0xf]
      %v1120 = vld [vmem:[%s965] sm:$0x1]
      %v1122 = vlaneseq
      %v1123 = vshrl.u32 %v1122, 7
      %v1124 = vsub.s32 0, %v1123
      %v1125 = vrot.slane %v1120, %v1124
      %v1131 = vunpack.c.l.b16 %v1116
      %v1132 = vunpack.c.l.b16 %v1117
      %v1133 = vunpack.c.l.b16 %v1118
      %v1134 = vunpack.c.l.b16 %v1119
      %v1135 = vpack.c.b16 %v1132, %v1131
      %v1136 = vpack.c.b16 %v1134, %v1133
      %vm1139 = vcmask 261120
      %v1141 = vsel %vm1139, %v1115, 0
      %1143 = vmatprep.subr.bf16.mxu0 0
      %1144 = vmatpush1.bf16.msra.mxu0 %v1135
      %1145 = vmatprep.subr.bf16.mxu0 0
      %1146 = vmatpush1.bf16.msra.mxu0 %v1136
      %1147 = vmatprep.subr.bf16.mxu0 0
      %1148 = vmatpush1.bf16.msra.mxu0 0
      %1149 = vmatprep.subr.bf16.mxu0 0
      %1150 = vmatpush1.bf16.msra.mxu0 0
      %1151 = vmatprep.subr.bf16.mxu0 0
      %1152 = vmatpush1.bf16.msra.mxu0 0
      %1153 = vmatprep.subr.bf16.mxu0 0
      %1154 = vmatpush1.bf16.msra.mxu0 0
      %1155 = vmatprep.subr.bf16.mxu0 0
      %1156 = vmatpush1.bf16.msra.mxu0 0
      %1157 = vmatprep.subr.bf16.mxu0 0
      %1158 = vmatpush1.bf16.msra.mxu0 0
      %1159 = vmatprep.subr.bf16.mxu0 0
      %1160 = vmatpush1.bf16.msra.mxu0 0
      %1161 = vmatprep.subr.bf16.mxu0 0
      %1162 = vmatpush1.bf16.msra.mxu0 0
      %1163 = vmatprep.subr.bf16.mxu0 0
      %1164 = vmatpush1.bf16.msra.mxu0 0
      %1165 = vmatprep.subr.bf16.mxu0 0
      %1166 = vmatpush1.bf16.msra.mxu0 0
      %1167 = vmatprep.subr.bf16.mxu0 0
      %1168 = vmatpush1.bf16.msra.mxu0 0
      %1169 = vmatprep.subr.bf16.mxu0 0
      %1170 = vmatpush1.bf16.msra.mxu0 0
      %1171 = vmatprep.subr.bf16.mxu0 0
      %1172 = vmatpush1.bf16.msra.mxu0 0
      %1173 = vmatprep.subr.bf16.mxu0 0
      %1174 = vmatpush1.bf16.msra.mxu0 0
      %1175 = vmatprep.mubr.bf16.mxu0 0
      %1176 = vmatmul.mubr.bf16.gmra.mrb[0].mxu0 %v1141
      %v1177 = vpop.f32.mrb[0].mxu0
      %v1178 = vadd.f32 %v1125, %v1177
      %v1179 = vpop.f32.mrb[0].mxu0
      %v1180 = vpop.f32.mrb[0].mxu0
      %v1181 = vadd.f32 %v1125, %v1180
      %v1182 = vpop.f32.mrb[0].mxu0
      %1183 = vdwg.mxu0
      %v1184 = vld [vmem:[%s970] sm:$0xf]
      %v1185 = vld [vmem:[%s970 + $0x4] sm:$0xf]
      %v1186 = vld [vmem:[%s970 + $0x8] sm:$0xf]
      %v1187 = vld [vmem:[%s970 + $0xc] sm:$0xf]
      %v1188 = vld [vmem:[%s973] sm:$0x1]
      %v1190 = vlaneseq
      %v1191 = vshrl.u32 %v1190, 7
      %v1192 = vsub.s32 0, %v1191
      %v1193 = vrot.slane %v1188, %v1192
      %v1199 = vunpack.c.l.b16 %v1184
      %v1200 = vunpack.c.l.b16 %v1185
      %v1201 = vunpack.c.l.b16 %v1186
      %v1202 = vunpack.c.l.b16 %v1187
      %v1203 = vpack.c.b16 %v1200, %v1199
      %v1204 = vpack.c.b16 %v1202, %v1201
      %1207 = vmatprep.subr.bf16.mxu0 0
      %1208 = vmatpush1.bf16.msra.mxu0 %v1203
      %1209 = vmatprep.subr.bf16.mxu0 0
      %1210 = vmatpush1.bf16.msra.mxu0 %v1204
      %1211 = vmatprep.subr.bf16.mxu0 0
      %1212 = vmatpush1.bf16.msra.mxu0 0
      %1213 = vmatprep.subr.bf16.mxu0 0
      %1214 = vmatpush1.bf16.msra.mxu0 0
      %1215 = vmatprep.subr.bf16.mxu0 0
      %1216 = vmatpush1.bf16.msra.mxu0 0
      %1217 = vmatprep.subr.bf16.mxu0 0
      %1218 = vmatpush1.bf16.msra.mxu0 0
      %1219 = vmatprep.subr.bf16.mxu0 0
      %1220 = vmatpush1.bf16.msra.mxu0 0
      %1221 = vmatprep.subr.bf16.mxu0 0
      %1222 = vmatpush1.bf16.msra.mxu0 0
      %1223 = vmatprep.subr.bf16.mxu0 0
      %1224 = vmatpush1.bf16.msra.mxu0 0
      %1225 = vmatprep.subr.bf16.mxu0 0
      %1226 = vmatpush1.bf16.msra.mxu0 0
      %1227 = vmatprep.subr.bf16.mxu0 0
      %1228 = vmatpush1.bf16.msra.mxu0 0
      %1229 = vmatprep.subr.bf16.mxu0 0
      %1230 = vmatpush1.bf16.msra.mxu0 0
      %1231 = vmatprep.subr.bf16.mxu0 0
      %1232 = vmatpush1.bf16.msra.mxu0 0
      %1233 = vmatprep.subr.bf16.mxu0 0
      %1234 = vmatpush1.bf16.msra.mxu0 0
      %1235 = vmatprep.subr.bf16.mxu0 0
      %1236 = vmatpush1.bf16.msra.mxu0 0
      %1237 = vmatprep.subr.bf16.mxu0 0
      %1238 = vmatpush1.bf16.msra.mxu0 0
      %1239 = vmatprep.mubr.bf16.mxu0 0
      %1240 = vmatmul.mubr.bf16.gmra.mrb[0].mxu0 %v1141
      %v1241 = vpop.f32.mrb[0].mxu0
      %v1242 = vadd.f32 %v1193, %v1241
      %v1243 = vpop.f32.mrb[0].mxu0
      %v1244 = vpop.f32.mrb[0].mxu0
      %v1245 = vadd.f32 %v1193, %v1244
      %v1246 = vpop.f32.mrb[0].mxu0
      %1247 = vdwg.mxu0
      %v1248 = vld [vmem:[%s978] sm:$0xf]
      %v1249 = vld [vmem:[%s978 + $0x4] sm:$0xf]
      %v1250 = vld [vmem:[%s978 + $0x8] sm:$0xf]
      %v1251 = vld [vmem:[%s978 + $0xc] sm:$0xf]
      %v1252 = vld [vmem:[%s981] sm:$0x1]
      %v1254 = vlaneseq
      %v1255 = vshrl.u32 %v1254, 7
      %v1256 = vsub.s32 0, %v1255
      %v1257 = vrot.slane %v1252, %v1256
      %v1263 = vunpack.c.l.b16 %v1248
      %v1264 = vunpack.c.l.b16 %v1249
      %v1265 = vunpack.c.l.b16 %v1250
      %v1266 = vunpack.c.l.b16 %v1251
      %v1267 = vpack.c.b16 %v1264, %v1263
      %v1268 = vpack.c.b16 %v1266, %v1265
      %1271 = vmatprep.subr.bf16.mxu0 0
      %1272 = vmatpush1.bf16.msra.mxu0 %v1267
      %1273 = vmatprep.subr.bf16.mxu0 0
      %1274 = vmatpush1.bf16.msra.mxu0 %v1268
      %1275 = vmatprep.subr.bf16.mxu0 0
      %1276 = vmatpush1.bf16.msra.mxu0 0
      %1277 = vmatprep.subr.bf16.mxu0 0
      %1278 = vmatpush1.bf16.msra.mxu0 0
      %1279 = vmatprep.subr.bf16.mxu0 0
      %1280 = vmatpush1.bf16.msra.mxu0 0
      %1281 = vmatprep.subr.bf16.mxu0 0
      %1282 = vmatpush1.bf16.msra.mxu0 0
      %1283 = vmatprep.subr.bf16.mxu0 0
      %1284 = vmatpush1.bf16.msra.mxu0 0
      %1285 = vmatprep.subr.bf16.mxu0 0
      %1286 = vmatpush1.bf16.msra.mxu0 0
      %1287 = vmatprep.subr.bf16.mxu0 0
      %1288 = vmatpush1.bf16.msra.mxu0 0
      %1289 = vmatprep.subr.bf16.mxu0 0
      %1290 = vmatpush1.bf16.msra.mxu0 0
      %1291 = vmatprep.subr.bf16.mxu0 0
      %1292 = vmatpush1.bf16.msra.mxu0 0
      %1293 = vmatprep.subr.bf16.mxu0 0
      %1294 = vmatpush1.bf16.msra.mxu0 0
      %1295 = vmatprep.subr.bf16.mxu0 0
      %1296 = vmatpush1.bf16.msra.mxu0 0
      %1297 = vmatprep.subr.bf16.mxu0 0
      %1298 = vmatpush1.bf16.msra.mxu0 0
      %1299 = vmatprep.subr.bf16.mxu0 0
      %1300 = vmatpush1.bf16.msra.mxu0 0
      %1301 = vmatprep.subr.bf16.mxu0 0
      %1302 = vmatpush1.bf16.msra.mxu0 0
      %1303 = vmatprep.mubr.bf16.mxu0 0
      %1304 = vmatmul.mubr.bf16.gmra.mrb[0].mxu0 %v1141
      %v1305 = vpop.f32.mrb[0].mxu0
      %v1306 = vadd.f32 %v1257, %v1305
      %v1307 = vpop.f32.mrb[0].mxu0
      %v1308 = vpop.f32.mrb[0].mxu0
      %v1309 = vadd.f32 %v1257, %v1308
      %v1310 = vpop.f32.mrb[0].mxu0
      %1311 = vdwg.mxu0
      %1314 = vrot.lane.b32.xlu0 %v1178, 120
      %v1315 = vpop.permute.xlu0 %1314
      %1316 = vrot.lane.b32.xlu0 %v1181, 120
      %v1317 = vpop.permute.xlu0 %1316
      %1320 = vrot.lane.b32.xlu0 %v1178, 112
      %v1321 = vpop.permute.xlu0 %1320
      %1322 = vrot.lane.b32.xlu0 %v1181, 112
      %v1323 = vpop.permute.xlu0 %1322
      %1326 = vrot.lane.b32.xlu0 %v1178, 104
      %v1327 = vpop.permute.xlu0 %1326
      %1328 = vrot.lane.b32.xlu0 %v1181, 104
      %v1329 = vpop.permute.xlu0 %1328
      %v1332 = vcombine.low %v1178, %v1321
      %v1333 = vcombine.high %v1178, %v1321
      %v1335 = vunpack.c.l.s4 1983009808
      %v1336 = vunpack.c.0.s8 %v1335
      %v1337 = vlaneseq
      %v1338 = vshrl.u32 %v1337, 7
      %v1339 = vsub.s32 %v1336, %v1338
      %v1340 = vrot.slane %v1332, %v1339
      %v1342 = vunpack.c.l.s4 1983009808
      %v1343 = vunpack.c.0.s8 %v1342
      %v1344 = vlaneseq
      %v1345 = vshrl.u32 %v1344, 7
      %v1346 = vsub.s32 %v1343, %v1345
      %v1347 = vrot.slane %v1333, %v1346
      %v1348 = vcombine.low %v1315, %v1327
      %v1349 = vcombine.high %v1315, %v1327
      %v1351 = vunpack.c.l.s4 1983009808
      %v1352 = vunpack.c.0.s8 %v1351
      %v1353 = vlaneseq
      %v1354 = vshrl.u32 %v1353, 7
      %v1355 = vsub.s32 %v1352, %v1354
      %v1356 = vrot.slane %v1348, %v1355
      %v1358 = vunpack.c.l.s4 1983009808
      %v1359 = vunpack.c.0.s8 %v1358
      %v1360 = vlaneseq
      %v1361 = vshrl.u32 %v1360, 7
      %v1362 = vsub.s32 %v1359, %v1361
      %v1363 = vrot.slane %v1349, %v1362
      %v1364 = vcombine.low %v1340, %v1356
      %v1365 = vcombine.high %v1340, %v1356
      %v1367 = vunpack.c.l.s4 1934713408
      %v1368 = vunpack.c.0.s8 %v1367
      %v1369 = vlaneseq
      %v1370 = vshrl.u32 %v1369, 7
      %v1371 = vsub.s32 %v1368, %v1370
      %v1372 = vrot.slane %v1364, %v1371
      %v1374 = vunpack.c.l.s4 1934713408
      %v1375 = vunpack.c.0.s8 %v1374
      %v1376 = vlaneseq
      %v1377 = vshrl.u32 %v1376, 7
      %v1378 = vsub.s32 %v1375, %v1377
      %v1379 = vrot.slane %v1365, %v1378
      %v1380 = vcombine.low %v1347, %v1363
      %v1381 = vcombine.high %v1347, %v1363
      %v1383 = vunpack.c.l.s4 1934713408
      %v1384 = vunpack.c.0.s8 %v1383
      %v1385 = vlaneseq
      %v1386 = vshrl.u32 %v1385, 7
      %v1387 = vsub.s32 %v1384, %v1386
      %v1388 = vrot.slane %v1380, %v1387
      %v1390 = vunpack.c.l.s4 1934713408
      %v1391 = vunpack.c.0.s8 %v1390
      %v1392 = vlaneseq
      %v1393 = vshrl.u32 %v1392, 7
      %v1394 = vsub.s32 %v1391, %v1393
      %v1395 = vrot.slane %v1381, %v1394
      %v1396 = vcombine.high %v1372, 0.0
      %v1397 = vcombine.high %v1379, 0.0
      %v1398 = vcombine.high %v1388, 0.0
      %v1399 = vcombine.high %v1395, 0.0
      %v1400 = vcombine.low %v1181, %v1323
      %v1401 = vcombine.high %v1181, %v1323
      %v1403 = vunpack.c.l.s4 1983009808
      %v1404 = vunpack.c.0.s8 %v1403
      %v1405 = vlaneseq
      %v1406 = vshrl.u32 %v1405, 7
      %v1407 = vsub.s32 %v1404, %v1406
      %v1408 = vrot.slane %v1400, %v1407
      %v1410 = vunpack.c.l.s4 1983009808
      %v1411 = vunpack.c.0.s8 %v1410
      %v1412 = vlaneseq
      %v1413 = vshrl.u32 %v1412, 7
      %v1414 = vsub.s32 %v1411, %v1413
      %v1415 = vrot.slane %v1401, %v1414
      %v1416 = vcombine.low %v1317, %v1329
      %v1417 = vcombine.high %v1317, %v1329
      %v1419 = vunpack.c.l.s4 1983009808
      %v1420 = vunpack.c.0.s8 %v1419
      %v1421 = vlaneseq
      %v1422 = vshrl.u32 %v1421, 7
      %v1423 = vsub.s32 %v1420, %v1422
      %v1424 = vrot.slane %v1416, %v1423
      %v1426 = vunpack.c.l.s4 1983009808
      %v1427 = vunpack.c.0.s8 %v1426
      %v1428 = vlaneseq
      %v1429 = vshrl.u32 %v1428, 7
      %v1430 = vsub.s32 %v1427, %v1429
      %v1431 = vrot.slane %v1417, %v1430
      %v1432 = vcombine.low %v1408, %v1424
      %v1433 = vcombine.high %v1408, %v1424
      %v1435 = vunpack.c.l.s4 1934713408
      %v1436 = vunpack.c.0.s8 %v1435
      %v1437 = vlaneseq
      %v1438 = vshrl.u32 %v1437, 7
      %v1439 = vsub.s32 %v1436, %v1438
      %v1440 = vrot.slane %v1432, %v1439
      %v1442 = vunpack.c.l.s4 1934713408
      %v1443 = vunpack.c.0.s8 %v1442
      %v1444 = vlaneseq
      %v1445 = vshrl.u32 %v1444, 7
      %v1446 = vsub.s32 %v1443, %v1445
      %v1447 = vrot.slane %v1433, %v1446
      %v1448 = vcombine.low %v1415, %v1431
      %v1449 = vcombine.high %v1415, %v1431
      %v1451 = vunpack.c.l.s4 1934713408
      %v1452 = vunpack.c.0.s8 %v1451
      %v1453 = vlaneseq
      %v1454 = vshrl.u32 %v1453, 7
      %v1455 = vsub.s32 %v1452, %v1454
      %v1456 = vrot.slane %v1448, %v1455
      %v1458 = vunpack.c.l.s4 1934713408
      %v1459 = vunpack.c.0.s8 %v1458
      %v1460 = vlaneseq
      %v1461 = vshrl.u32 %v1460, 7
      %v1462 = vsub.s32 %v1459, %v1461
      %v1463 = vrot.slane %v1449, %v1462
      %v1464 = vcombine.high %v1440, 0.0
      %v1465 = vcombine.high %v1447, 0.0
      %v1466 = vcombine.high %v1456, 0.0
      %v1467 = vcombine.high %v1463, 0.0
      %v1468 = vcombine.low %v1372, %v1379
      %v1470 = vunpack.c.l.s4 1983009808
      %v1471 = vunpack.c.0.s8 %v1470
      %v1472 = vlaneseq
      %v1473 = vshrl.u32 %v1472, 7
      %v1474 = vsub.s32 %v1471, %v1473
      %v1475 = vrot.slane %v1468, %v1474
      %v1476 = vcombine.low %v1396, %v1397
      %v1478 = vunpack.c.l.s4 1983009808
      %v1479 = vunpack.c.0.s8 %v1478
      %v1480 = vlaneseq
      %v1481 = vshrl.u32 %v1480, 7
      %v1482 = vsub.s32 %v1479, %v1481
      %v1483 = vrot.slane %v1476, %v1482
      %v1484 = vcombine.low %v1388, %v1395
      %v1486 = vunpack.c.l.s4 1983009808
      %v1487 = vunpack.c.0.s8 %v1486
      %v1488 = vlaneseq
      %v1489 = vshrl.u32 %v1488, 7
      %v1490 = vsub.s32 %v1487, %v1489
      %v1491 = vrot.slane %v1484, %v1490
      %v1492 = vcombine.low %v1398, %v1399
      %v1494 = vunpack.c.l.s4 1983009808
      %v1495 = vunpack.c.0.s8 %v1494
      %v1496 = vlaneseq
      %v1497 = vshrl.u32 %v1496, 7
      %v1498 = vsub.s32 %v1495, %v1497
      %v1499 = vrot.slane %v1492, %v1498
      %v1500 = vcombine.low %v1475, %v1483
      %v1501 = vcombine.high %v1475, %v1483
      %v1503 = vunpack.c.l.s4 1934713408
      %v1504 = vunpack.c.0.s8 %v1503
      %v1505 = vlaneseq
      %v1506 = vshrl.u32 %v1505, 7
      %v1507 = vsub.s32 %v1504, %v1506
      %v1508 = vrot.slane %v1500, %v1507
      %v1510 = vunpack.c.l.s4 1934713408
      %v1511 = vunpack.c.0.s8 %v1510
      %v1512 = vlaneseq
      %v1513 = vshrl.u32 %v1512, 7
      %v1514 = vsub.s32 %v1511, %v1513
      %v1515 = vrot.slane %v1501, %v1514
      %v1516 = vcombine.low %v1491, %v1499
      %v1517 = vcombine.high %v1491, %v1499
      %v1519 = vunpack.c.l.s4 1934713408
      %v1520 = vunpack.c.0.s8 %v1519
      %v1521 = vlaneseq
      %v1522 = vshrl.u32 %v1521, 7
      %v1523 = vsub.s32 %v1520, %v1522
      %v1524 = vrot.slane %v1516, %v1523
      %v1526 = vunpack.c.l.s4 1934713408
      %v1527 = vunpack.c.0.s8 %v1526
      %v1528 = vlaneseq
      %v1529 = vshrl.u32 %v1528, 7
      %v1530 = vsub.s32 %v1527, %v1529
      %v1531 = vrot.slane %v1517, %v1530
      %v1532 = vcombine.low %v1508, %v1524
      %v1533 = vcombine.high %v1508, %v1524
      %v1534 = vcombine.low %v1515, %v1531
      %v1535 = vcombine.high %v1515, %v1531
      %v1536 = vcombine.low %v1440, %v1447
      %v1538 = vunpack.c.l.s4 1983009808
      %v1539 = vunpack.c.0.s8 %v1538
      %v1540 = vlaneseq
      %v1541 = vshrl.u32 %v1540, 7
      %v1542 = vsub.s32 %v1539, %v1541
      %v1543 = vrot.slane %v1536, %v1542
      %v1544 = vcombine.low %v1464, %v1465
      %v1546 = vunpack.c.l.s4 1983009808
      %v1547 = vunpack.c.0.s8 %v1546
      %v1548 = vlaneseq
      %v1549 = vshrl.u32 %v1548, 7
      %v1550 = vsub.s32 %v1547, %v1549
      %v1551 = vrot.slane %v1544, %v1550
      %v1552 = vcombine.low %v1456, %v1463
      %v1554 = vunpack.c.l.s4 1983009808
      %v1555 = vunpack.c.0.s8 %v1554
      %v1556 = vlaneseq
      %v1557 = vshrl.u32 %v1556, 7
      %v1558 = vsub.s32 %v1555, %v1557
      %v1559 = vrot.slane %v1552, %v1558
      %v1560 = vcombine.low %v1466, %v1467
      %v1562 = vunpack.c.l.s4 1983009808
      %v1563 = vunpack.c.0.s8 %v1562
      %v1564 = vlaneseq
      %v1565 = vshrl.u32 %v1564, 7
      %v1566 = vsub.s32 %v1563, %v1565
      %v1567 = vrot.slane %v1560, %v1566
      %v1568 = vcombine.low %v1543, %v1551
      %v1569 = vcombine.high %v1543, %v1551
      %v1571 = vunpack.c.l.s4 1934713408
      %v1572 = vunpack.c.0.s8 %v1571
      %v1573 = vlaneseq
      %v1574 = vshrl.u32 %v1573, 7
      %v1575 = vsub.s32 %v1572, %v1574
      %v1576 = vrot.slane %v1568, %v1575
      %v1578 = vunpack.c.l.s4 1934713408
      %v1579 = vunpack.c.0.s8 %v1578
      %v1580 = vlaneseq
      %v1581 = vshrl.u32 %v1580, 7
      %v1582 = vsub.s32 %v1579, %v1581
      %v1583 = vrot.slane %v1569, %v1582
      %v1584 = vcombine.low %v1559, %v1567
      %v1585 = vcombine.high %v1559, %v1567
      %v1587 = vunpack.c.l.s4 1934713408
      %v1588 = vunpack.c.0.s8 %v1587
      %v1589 = vlaneseq
      %v1590 = vshrl.u32 %v1589, 7
      %v1591 = vsub.s32 %v1588, %v1590
      %v1592 = vrot.slane %v1584, %v1591
      %v1594 = vunpack.c.l.s4 1934713408
      %v1595 = vunpack.c.0.s8 %v1594
      %v1596 = vlaneseq
      %v1597 = vshrl.u32 %v1596, 7
      %v1598 = vsub.s32 %v1595, %v1597
      %v1599 = vrot.slane %v1585, %v1598
      %v1600 = vcombine.low %v1576, %v1592
      %v1601 = vcombine.high %v1576, %v1592
      %v1602 = vcombine.low %v1583, %v1599
      %v1603 = vcombine.high %v1583, %v1599
      %v1604 = vpack.c.bf16 %v1600, %v1532
      %v1605 = vpack.c.bf16 %v1601, %v1533
      %v1606 = vpack.c.bf16 %v1602, %v1534
      %v1607 = vpack.c.bf16 %v1603, %v1535
      %1610 = vrot.lane.b32.xlu0 %v1242, 120
      %v1611 = vpop.permute.xlu0 %1610
      %1612 = vrot.lane.b32.xlu0 %v1245, 120
      %v1613 = vpop.permute.xlu0 %1612
      %1616 = vrot.lane.b32.xlu0 %v1242, 112
      %v1617 = vpop.permute.xlu0 %1616
      %1618 = vrot.lane.b32.xlu0 %v1245, 112
      %v1619 = vpop.permute.xlu0 %1618
      %1622 = vrot.lane.b32.xlu0 %v1242, 104
      %v1623 = vpop.permute.xlu0 %1622
      %1624 = vrot.lane.b32.xlu0 %v1245, 104
      %v1625 = vpop.permute.xlu0 %1624
      %v1628 = vcombine.low %v1242, %v1617
      %v1629 = vcombine.high %v1242, %v1617
      %v1631 = vunpack.c.l.s4 1983009808
      %v1632 = vunpack.c.0.s8 %v1631
      %v1633 = vlaneseq
      %v1634 = vshrl.u32 %v1633, 7
      %v1635 = vsub.s32 %v1632, %v1634
      %v1636 = vrot.slane %v1628, %v1635
      %v1638 = vunpack.c.l.s4 1983009808
      %v1639 = vunpack.c.0.s8 %v1638
      %v1640 = vlaneseq
      %v1641 = vshrl.u32 %v1640, 7
      %v1642 = vsub.s32 %v1639, %v1641
      %v1643 = vrot.slane %v1629, %v1642
      %v1644 = vcombine.low %v1611, %v1623
      %v1645 = vcombine.high %v1611, %v1623
      %v1647 = vunpack.c.l.s4 1983009808
      %v1648 = vunpack.c.0.s8 %v1647
      %v1649 = vlaneseq
      %v1650 = vshrl.u32 %v1649, 7
      %v1651 = vsub.s32 %v1648, %v1650
      %v1652 = vrot.slane %v1644, %v1651
      %v1654 = vunpack.c.l.s4 1983009808
      %v1655 = vunpack.c.0.s8 %v1654
      %v1656 = vlaneseq
      %v1657 = vshrl.u32 %v1656, 7
      %v1658 = vsub.s32 %v1655, %v1657
      %v1659 = vrot.slane %v1645, %v1658
      %v1660 = vcombine.low %v1636, %v1652
      %v1661 = vcombine.high %v1636, %v1652
      %v1663 = vunpack.c.l.s4 1934713408
      %v1664 = vunpack.c.0.s8 %v1663
      %v1665 = vlaneseq
      %v1666 = vshrl.u32 %v1665, 7
      %v1667 = vsub.s32 %v1664, %v1666
      %v1668 = vrot.slane %v1660, %v1667
      %v1670 = vunpack.c.l.s4 1934713408
      %v1671 = vunpack.c.0.s8 %v1670
      %v1672 = vlaneseq
      %v1673 = vshrl.u32 %v1672, 7
      %v1674 = vsub.s32 %v1671, %v1673
      %v1675 = vrot.slane %v1661, %v1674
      %v1676 = vcombine.low %v1643, %v1659
      %v1677 = vcombine.high %v1643, %v1659
      %v1679 = vunpack.c.l.s4 1934713408
      %v1680 = vunpack.c.0.s8 %v1679
      %v1681 = vlaneseq
      %v1682 = vshrl.u32 %v1681, 7
      %v1683 = vsub.s32 %v1680, %v1682
      %v1684 = vrot.slane %v1676, %v1683
      %v1686 = vunpack.c.l.s4 1934713408
      %v1687 = vunpack.c.0.s8 %v1686
      %v1688 = vlaneseq
      %v1689 = vshrl.u32 %v1688, 7
      %v1690 = vsub.s32 %v1687, %v1689
      %v1691 = vrot.slane %v1677, %v1690
      %v1692 = vcombine.high %v1668, 0.0
      %v1693 = vcombine.high %v1675, 0.0
      %v1694 = vcombine.high %v1684, 0.0
      %v1695 = vcombine.high %v1691, 0.0
      %v1696 = vcombine.low %v1245, %v1619
      %v1697 = vcombine.high %v1245, %v1619
      %v1699 = vunpack.c.l.s4 1983009808
      %v1700 = vunpack.c.0.s8 %v1699
      %v1701 = vlaneseq
      %v1702 = vshrl.u32 %v1701, 7
      %v1703 = vsub.s32 %v1700, %v1702
      %v1704 = vrot.slane %v1696, %v1703
      %v1706 = vunpack.c.l.s4 1983009808
      %v1707 = vunpack.c.0.s8 %v1706
      %v1708 = vlaneseq
      %v1709 = vshrl.u32 %v1708, 7
      %v1710 = vsub.s32 %v1707, %v1709
      %v1711 = vrot.slane %v1697, %v1710
      %v1712 = vcombine.low %v1613, %v1625
      %v1713 = vcombine.high %v1613, %v1625
      %v1715 = vunpack.c.l.s4 1983009808
      %v1716 = vunpack.c.0.s8 %v1715
      %v1717 = vlaneseq
      %v1718 = vshrl.u32 %v1717, 7
      %v1719 = vsub.s32 %v1716, %v1718
      %v1720 = vrot.slane %v1712, %v1719
      %v1722 = vunpack.c.l.s4 1983009808
      %v1723 = vunpack.c.0.s8 %v1722
      %v1724 = vlaneseq
      %v1725 = vshrl.u32 %v1724, 7
      %v1726 = vsub.s32 %v1723, %v1725
      %v1727 = vrot.slane %v1713, %v1726
      %v1728 = vcombine.low %v1704, %v1720
      %v1729 = vcombine.high %v1704, %v1720
      %v1731 = vunpack.c.l.s4 1934713408
      %v1732 = vunpack.c.0.s8 %v1731
      %v1733 = vlaneseq
      %v1734 = vshrl.u32 %v1733, 7
      %v1735 = vsub.s32 %v1732, %v1734
      %v1736 = vrot.slane %v1728, %v1735
      %v1738 = vunpack.c.l.s4 1934713408
      %v1739 = vunpack.c.0.s8 %v1738
      %v1740 = vlaneseq
      %v1741 = vshrl.u32 %v1740, 7
      %v1742 = vsub.s32 %v1739, %v1741
      %v1743 = vrot.slane %v1729, %v1742
      %v1744 = vcombine.low %v1711, %v1727
      %v1745 = vcombine.high %v1711, %v1727
      %v1747 = vunpack.c.l.s4 1934713408
      %v1748 = vunpack.c.0.s8 %v1747
      %v1749 = vlaneseq
      %v1750 = vshrl.u32 %v1749, 7
      %v1751 = vsub.s32 %v1748, %v1750
      %v1752 = vrot.slane %v1744, %v1751
      %v1754 = vunpack.c.l.s4 1934713408
      %v1755 = vunpack.c.0.s8 %v1754
      %v1756 = vlaneseq
      %v1757 = vshrl.u32 %v1756, 7
      %v1758 = vsub.s32 %v1755, %v1757
      %v1759 = vrot.slane %v1745, %v1758
      %v1760 = vcombine.high %v1736, 0.0
      %v1761 = vcombine.high %v1743, 0.0
      %v1762 = vcombine.high %v1752, 0.0
      %v1763 = vcombine.high %v1759, 0.0
      %v1764 = vcombine.low %v1668, %v1675
      %v1766 = vunpack.c.l.s4 1983009808
      %v1767 = vunpack.c.0.s8 %v1766
      %v1768 = vlaneseq
      %v1769 = vshrl.u32 %v1768, 7
      %v1770 = vsub.s32 %v1767, %v1769
      %v1771 = vrot.slane %v1764, %v1770
      %v1772 = vcombine.low %v1692, %v1693
      %v1774 = vunpack.c.l.s4 1983009808
      %v1775 = vunpack.c.0.s8 %v1774
      %v1776 = vlaneseq
      %v1777 = vshrl.u32 %v1776, 7
      %v1778 = vsub.s32 %v1775, %v1777
      %v1779 = vrot.slane %v1772, %v1778
      %v1780 = vcombine.low %v1684, %v1691
      %v1782 = vunpack.c.l.s4 1983009808
      %v1783 = vunpack.c.0.s8 %v1782
      %v1784 = vlaneseq
      %v1785 = vshrl.u32 %v1784, 7
      %v1786 = vsub.s32 %v1783, %v1785
      %v1787 = vrot.slane %v1780, %v1786
      %v1788 = vcombine.low %v1694, %v1695
      %v1790 = vunpack.c.l.s4 1983009808
      %v1791 = vunpack.c.0.s8 %v1790
      %v1792 = vlaneseq
      %v1793 = vshrl.u32 %v1792, 7
      %v1794 = vsub.s32 %v1791, %v1793
      %v1795 = vrot.slane %v1788, %v1794
      %v1796 = vcombine.low %v1771, %v1779
      %v1797 = vcombine.high %v1771, %v1779
      %v1799 = vunpack.c.l.s4 1934713408
      %v1800 = vunpack.c.0.s8 %v1799
      %v1801 = vlaneseq
      %v1802 = vshrl.u32 %v1801, 7
      %v1803 = vsub.s32 %v1800, %v1802
      %v1804 = vrot.slane %v1796, %v1803
      %v1806 = vunpack.c.l.s4 1934713408
      %v1807 = vunpack.c.0.s8 %v1806
      %v1808 = vlaneseq
      %v1809 = vshrl.u32 %v1808, 7
      %v1810 = vsub.s32 %v1807, %v1809
      %v1811 = vrot.slane %v1797, %v1810
      %v1812 = vcombine.low %v1787, %v1795
      %v1813 = vcombine.high %v1787, %v1795
      %v1815 = vunpack.c.l.s4 1934713408
      %v1816 = vunpack.c.0.s8 %v1815
      %v1817 = vlaneseq
      %v1818 = vshrl.u32 %v1817, 7
      %v1819 = vsub.s32 %v1816, %v1818
      %v1820 = vrot.slane %v1812, %v1819
      %v1822 = vunpack.c.l.s4 1934713408
      %v1823 = vunpack.c.0.s8 %v1822
      %v1824 = vlaneseq
      %v1825 = vshrl.u32 %v1824, 7
      %v1826 = vsub.s32 %v1823, %v1825
      %v1827 = vrot.slane %v1813, %v1826
      %v1828 = vcombine.low %v1804, %v1820
      %v1829 = vcombine.high %v1804, %v1820
      %v1830 = vcombine.low %v1811, %v1827
      %v1831 = vcombine.high %v1811, %v1827
      %v1832 = vcombine.low %v1736, %v1743
      %v1834 = vunpack.c.l.s4 1983009808
      %v1835 = vunpack.c.0.s8 %v1834
      %v1836 = vlaneseq
      %v1837 = vshrl.u32 %v1836, 7
      %v1838 = vsub.s32 %v1835, %v1837
      %v1839 = vrot.slane %v1832, %v1838
      %v1840 = vcombine.low %v1760, %v1761
      %v1842 = vunpack.c.l.s4 1983009808
      %v1843 = vunpack.c.0.s8 %v1842
      %v1844 = vlaneseq
      %v1845 = vshrl.u32 %v1844, 7
      %v1846 = vsub.s32 %v1843, %v1845
      %v1847 = vrot.slane %v1840, %v1846
      %v1848 = vcombine.low %v1752, %v1759
      %v1850 = vunpack.c.l.s4 1983009808
      %v1851 = vunpack.c.0.s8 %v1850
      %v1852 = vlaneseq
      %v1853 = vshrl.u32 %v1852, 7
      %v1854 = vsub.s32 %v1851, %v1853
      %v1855 = vrot.slane %v1848, %v1854
      %v1856 = vcombine.low %v1762, %v1763
      %v1858 = vunpack.c.l.s4 1983009808
      %v1859 = vunpack.c.0.s8 %v1858
      %v1860 = vlaneseq
      %v1861 = vshrl.u32 %v1860, 7
      %v1862 = vsub.s32 %v1859, %v1861
      %v1863 = vrot.slane %v1856, %v1862
      %v1864 = vcombine.low %v1839, %v1847
      %v1865 = vcombine.high %v1839, %v1847
      %v1867 = vunpack.c.l.s4 1934713408
      %v1868 = vunpack.c.0.s8 %v1867
      %v1869 = vlaneseq
      %v1870 = vshrl.u32 %v1869, 7
      %v1871 = vsub.s32 %v1868, %v1870
      %v1872 = vrot.slane %v1864, %v1871
      %v1874 = vunpack.c.l.s4 1934713408
      %v1875 = vunpack.c.0.s8 %v1874
      %v1876 = vlaneseq
      %v1877 = vshrl.u32 %v1876, 7
      %v1878 = vsub.s32 %v1875, %v1877
      %v1879 = vrot.slane %v1865, %v1878
      %v1880 = vcombine.low %v1855, %v1863
      %v1881 = vcombine.high %v1855, %v1863
      %v1883 = vunpack.c.l.s4 1934713408
      %v1884 = vunpack.c.0.s8 %v1883
      %v1885 = vlaneseq
      %v1886 = vshrl.u32 %v1885, 7
      %v1887 = vsub.s32 %v1884, %v1886
      %v1888 = vrot.slane %v1880, %v1887
      %v1890 = vunpack.c.l.s4 1934713408
      %v1891 = vunpack.c.0.s8 %v1890
      %v1892 = vlaneseq
      %v1893 = vshrl.u32 %v1892, 7
      %v1894 = vsub.s32 %v1891, %v1893
      %v1895 = vrot.slane %v1881, %v1894
      %v1896 = vcombine.low %v1872, %v1888
      %v1897 = vcombine.high %v1872, %v1888
      %v1898 = vcombine.low %v1879, %v1895
      %v1899 = vcombine.high %v1879, %v1895
      %v1900 = vpack.c.bf16 %v1896, %v1828
      %v1901 = vpack.c.bf16 %v1897, %v1829
      %v1902 = vpack.c.bf16 %v1898, %v1830
      %v1903 = vpack.c.bf16 %v1899, %v1831
      %1906 = vrot.lane.b32.xlu0 %v1306, 120
      %v1907 = vpop.permute.xlu0 %1906
      %1908 = vrot.lane.b32.xlu0 %v1309, 120
      %v1909 = vpop.permute.xlu0 %1908
      %1912 = vrot.lane.b32.xlu0 %v1306, 112
      %v1913 = vpop.permute.xlu0 %1912
      %1914 = vrot.lane.b32.xlu0 %v1309, 112
      %v1915 = vpop.permute.xlu0 %1914
      %1918 = vrot.lane.b32.xlu0 %v1306, 104
      %v1919 = vpop.permute.xlu0 %1918
      %1920 = vrot.lane.b32.xlu0 %v1309, 104
      %v1921 = vpop.permute.xlu0 %1920
      %v1924 = vcombine.low %v1306, %v1913
      %v1925 = vcombine.high %v1306, %v1913
      %v1927 = vunpack.c.l.s4 1983009808
      %v1928 = vunpack.c.0.s8 %v1927
      %v1929 = vlaneseq
      %v1930 = vshrl.u32 %v1929, 7
      %v1931 = vsub.s32 %v1928, %v1930
      %v1932 = vrot.slane %v1924, %v1931
      %v1934 = vunpack.c.l.s4 1983009808
      %v1935 = vunpack.c.0.s8 %v1934
      %v1936 = vlaneseq
      %v1937 = vshrl.u32 %v1936, 7
      %v1938 = vsub.s32 %v1935, %v1937
      %v1939 = vrot.slane %v1925, %v1938
      %v1940 = vcombine.low %v1907, %v1919
      %v1941 = vcombine.high %v1907, %v1919
      %v1943 = vunpack.c.l.s4 1983009808
      %v1944 = vunpack.c.0.s8 %v1943
      %v1945 = vlaneseq
      %v1946 = vshrl.u32 %v1945, 7
      %v1947 = vsub.s32 %v1944, %v1946
      %v1948 = vrot.slane %v1940, %v1947
      %v1950 = vunpack.c.l.s4 1983009808
      %v1951 = vunpack.c.0.s8 %v1950
      %v1952 = vlaneseq
      %v1953 = vshrl.u32 %v1952, 7
      %v1954 = vsub.s32 %v1951, %v1953
      %v1955 = vrot.slane %v1941, %v1954
      %v1956 = vcombine.low %v1932, %v1948
      %v1957 = vcombine.high %v1932, %v1948
      %v1959 = vunpack.c.l.s4 1934713408
      %v1960 = vunpack.c.0.s8 %v1959
      %v1961 = vlaneseq
      %v1962 = vshrl.u32 %v1961, 7
      %v1963 = vsub.s32 %v1960, %v1962
      %v1964 = vrot.slane %v1956, %v1963
      %v1966 = vunpack.c.l.s4 1934713408
      %v1967 = vunpack.c.0.s8 %v1966
      %v1968 = vlaneseq
      %v1969 = vshrl.u32 %v1968, 7
      %v1970 = vsub.s32 %v1967, %v1969
      %v1971 = vrot.slane %v1957, %v1970
      %v1972 = vcombine.low %v1939, %v1955
      %v1973 = vcombine.high %v1939, %v1955
      %v1975 = vunpack.c.l.s4 1934713408
      %v1976 = vunpack.c.0.s8 %v1975
      %v1977 = vlaneseq
      %v1978 = vshrl.u32 %v1977, 7
      %v1979 = vsub.s32 %v1976, %v1978
      %v1980 = vrot.slane %v1972, %v1979
      %v1982 = vunpack.c.l.s4 1934713408
      %v1983 = vunpack.c.0.s8 %v1982
      %v1984 = vlaneseq
      %v1985 = vshrl.u32 %v1984, 7
      %v1986 = vsub.s32 %v1983, %v1985
      %v1987 = vrot.slane %v1973, %v1986
      %v1988 = vcombine.high %v1964, 0.0
      %v1989 = vcombine.high %v1971, 0.0
      %v1990 = vcombine.high %v1980, 0.0
      %v1991 = vcombine.high %v1987, 0.0
      %v1992 = vcombine.low %v1309, %v1915
      %v1993 = vcombine.high %v1309, %v1915
      %v1995 = vunpack.c.l.s4 1983009808
      %v1996 = vunpack.c.0.s8 %v1995
      %v1997 = vlaneseq
      %v1998 = vshrl.u32 %v1997, 7
      %v1999 = vsub.s32 %v1996, %v1998
      %v2000 = vrot.slane %v1992, %v1999
      %v2002 = vunpack.c.l.s4 1983009808
      %v2003 = vunpack.c.0.s8 %v2002
      %v2004 = vlaneseq
      %v2005 = vshrl.u32 %v2004, 7
      %v2006 = vsub.s32 %v2003, %v2005
      %v2007 = vrot.slane %v1993, %v2006
      %v2008 = vcombine.low %v1909, %v1921
      %v2009 = vcombine.high %v1909, %v1921
      %v2011 = vunpack.c.l.s4 1983009808
      %v2012 = vunpack.c.0.s8 %v2011
      %v2013 = vlaneseq
      %v2014 = vshrl.u32 %v2013, 7
      %v2015 = vsub.s32 %v2012, %v2014
      %v2016 = vrot.slane %v2008, %v2015
      %v2018 = vunpack.c.l.s4 1983009808
      %v2019 = vunpack.c.0.s8 %v2018
      %v2020 = vlaneseq
      %v2021 = vshrl.u32 %v2020, 7
      %v2022 = vsub.s32 %v2019, %v2021
      %v2023 = vrot.slane %v2009, %v2022
      %v2024 = vcombine.low %v2000, %v2016
      %v2025 = vcombine.high %v2000, %v2016
      %v2027 = vunpack.c.l.s4 1934713408
      %v2028 = vunpack.c.0.s8 %v2027
      %v2029 = vlaneseq
      %v2030 = vshrl.u32 %v2029, 7
      %v2031 = vsub.s32 %v2028, %v2030
      %v2032 = vrot.slane %v2024, %v2031
      %v2034 = vunpack.c.l.s4 1934713408
      %v2035 = vunpack.c.0.s8 %v2034
      %v2036 = vlaneseq
      %v2037 = vshrl.u32 %v2036, 7
      %v2038 = vsub.s32 %v2035, %v2037
      %v2039 = vrot.slane %v2025, %v2038
      %v2040 = vcombine.low %v2007, %v2023
      %v2041 = vcombine.high %v2007, %v2023
      %v2043 = vunpack.c.l.s4 1934713408
      %v2044 = vunpack.c.0.s8 %v2043
      %v2045 = vlaneseq
      %v2046 = vshrl.u32 %v2045, 7
      %v2047 = vsub.s32 %v2044, %v2046
      %v2048 = vrot.slane %v2040, %v2047
      %v2050 = vunpack.c.l.s4 1934713408
      %v2051 = vunpack.c.0.s8 %v2050
      %v2052 = vlaneseq
      %v2053 = vshrl.u32 %v2052, 7
      %v2054 = vsub.s32 %v2051, %v2053
      %v2055 = vrot.slane %v2041, %v2054
      %v2056 = vcombine.high %v2032, 0.0
      %v2057 = vcombine.high %v2039, 0.0
      %v2058 = vcombine.high %v2048, 0.0
      %v2059 = vcombine.high %v2055, 0.0
      %v2060 = vcombine.low %v1964, %v1971
      %v2062 = vunpack.c.l.s4 1983009808
      %v2063 = vunpack.c.0.s8 %v2062
      %v2064 = vlaneseq
      %v2065 = vshrl.u32 %v2064, 7
      %v2066 = vsub.s32 %v2063, %v2065
      %v2067 = vrot.slane %v2060, %v2066
      %v2068 = vcombine.low %v1988, %v1989
      %v2070 = vunpack.c.l.s4 1983009808
      %v2071 = vunpack.c.0.s8 %v2070
      %v2072 = vlaneseq
      %v2073 = vshrl.u32 %v2072, 7
      %v2074 = vsub.s32 %v2071, %v2073
      %v2075 = vrot.slane %v2068, %v2074
      %v2076 = vcombine.low %v1980, %v1987
      %v2078 = vunpack.c.l.s4 1983009808
      %v2079 = vunpack.c.0.s8 %v2078
      %v2080 = vlaneseq
      %v2081 = vshrl.u32 %v2080, 7
      %v2082 = vsub.s32 %v2079, %v2081
      %v2083 = vrot.slane %v2076, %v2082
      %v2084 = vcombine.low %v1990, %v1991
      %v2086 = vunpack.c.l.s4 1983009808
      %v2087 = vunpack.c.0.s8 %v2086
      %v2088 = vlaneseq
      %v2089 = vshrl.u32 %v2088, 7
      %v2090 = vsub.s32 %v2087, %v2089
      %v2091 = vrot.slane %v2084, %v2090
      %v2092 = vcombine.low %v2067, %v2075
      %v2093 = vcombine.high %v2067, %v2075
      %v2095 = vunpack.c.l.s4 1934713408
      %v2096 = vunpack.c.0.s8 %v2095
      %v2097 = vlaneseq
      %v2098 = vshrl.u32 %v2097, 7
      %v2099 = vsub.s32 %v2096, %v2098
      %v2100 = vrot.slane %v2092, %v2099
      %v2102 = vunpack.c.l.s4 1934713408
      %v2103 = vunpack.c.0.s8 %v2102
      %v2104 = vlaneseq
      %v2105 = vshrl.u32 %v2104, 7
      %v2106 = vsub.s32 %v2103, %v2105
      %v2107 = vrot.slane %v2093, %v2106
      %v2108 = vcombine.low %v2083, %v2091
      %v2109 = vcombine.high %v2083, %v2091
      %v2111 = vunpack.c.l.s4 1934713408
      %v2112 = vunpack.c.0.s8 %v2111
      %v2113 = vlaneseq
      %v2114 = vshrl.u32 %v2113, 7
      %v2115 = vsub.s32 %v2112, %v2114
      %v2116 = vrot.slane %v2108, %v2115
      %v2118 = vunpack.c.l.s4 1934713408
      %v2119 = vunpack.c.0.s8 %v2118
      %v2120 = vlaneseq
      %v2121 = vshrl.u32 %v2120, 7
      %v2122 = vsub.s32 %v2119, %v2121
      %v2123 = vrot.slane %v2109, %v2122
      %v2124 = vcombine.low %v2100, %v2116
      %v2125 = vcombine.high %v2100, %v2116
      %v2126 = vcombine.low %v2107, %v2123
      %v2127 = vcombine.high %v2107, %v2123
      %v2128 = vcombine.low %v2032, %v2039
      %v2130 = vunpack.c.l.s4 1983009808
      %v2131 = vunpack.c.0.s8 %v2130
      %v2132 = vlaneseq
      %v2133 = vshrl.u32 %v2132, 7
      %v2134 = vsub.s32 %v2131, %v2133
      %v2135 = vrot.slane %v2128, %v2134
      %v2136 = vcombine.low %v2056, %v2057
      %v2138 = vunpack.c.l.s4 1983009808
      %v2139 = vunpack.c.0.s8 %v2138
      %v2140 = vlaneseq
      %v2141 = vshrl.u32 %v2140, 7
      %v2142 = vsub.s32 %v2139, %v2141
      %v2143 = vrot.slane %v2136, %v2142
      %v2144 = vcombine.low %v2048, %v2055
      %v2146 = vunpack.c.l.s4 1983009808
      %v2147 = vunpack.c.0.s8 %v2146
      %v2148 = vlaneseq
      %v2149 = vshrl.u32 %v2148, 7
      %v2150 = vsub.s32 %v2147, %v2149
      %v2151 = vrot.slane %v2144, %v2150
      %v2152 = vcombine.low %v2058, %v2059
      %v2154 = vunpack.c.l.s4 1983009808
      %v2155 = vunpack.c.0.s8 %v2154
      %v2156 = vlaneseq
      %v2157 = vshrl.u32 %v2156, 7
      %v2158 = vsub.s32 %v2155, %v2157
      %v2159 = vrot.slane %v2152, %v2158
      %v2160 = vcombine.low %v2135, %v2143
      %v2161 = vcombine.high %v2135, %v2143
      %v2163 = vunpack.c.l.s4 1934713408
      %v2164 = vunpack.c.0.s8 %v2163
      %v2165 = vlaneseq
      %v2166 = vshrl.u32 %v2165, 7
      %v2167 = vsub.s32 %v2164, %v2166
      %v2168 = vrot.slane %v2160, %v2167
      %v2170 = vunpack.c.l.s4 1934713408
      %v2171 = vunpack.c.0.s8 %v2170
      %v2172 = vlaneseq
      %v2173 = vshrl.u32 %v2172, 7
      %v2174 = vsub.s32 %v2171, %v2173
      %v2175 = vrot.slane %v2161, %v2174
      %v2176 = vcombine.low %v2151, %v2159
      %v2177 = vcombine.high %v2151, %v2159
      %v2179 = vunpack.c.l.s4 1934713408
      %v2180 = vunpack.c.0.s8 %v2179
      %v2181 = vlaneseq
      %v2182 = vshrl.u32 %v2181, 7
      %v2183 = vsub.s32 %v2180, %v2182
      %v2184 = vrot.slane %v2176, %v2183
      %v2186 = vunpack.c.l.s4 1934713408
      %v2187 = vunpack.c.0.s8 %v2186
      %v2188 = vlaneseq
      %v2189 = vshrl.u32 %v2188, 7
      %v2190 = vsub.s32 %v2187, %v2189
      %v2191 = vrot.slane %v2177, %v2190
      %v2192 = vcombine.low %v2168, %v2184
      %v2193 = vcombine.high %v2168, %v2184
      %v2194 = vcombine.low %v2175, %v2191
      %v2195 = vcombine.high %v2175, %v2191
      %v2196 = vpack.c.bf16 %v2192, %v2124
      %v2197 = vpack.c.bf16 %v2193, %v2125
      %v2198 = vpack.c.bf16 %v2194, %v2126
      %v2199 = vpack.c.bf16 %v2195, %v2127
      %v2200 = vld [vmem:[#allocation3] sm:$0xff]
      %v2201 = vld [vmem:[#allocation3 + $0x8] sm:$0xff]
      %vm2202 = vcmask 64512
      %v2204 = vsel %vm2202, %v1604, 0
      %v2207 = vsel %vm2202, %v1900, 0
      %2209 = vmatprep.subr.bf16.mxu0 0
      %2210 = vmatpush1.bf16.xpose.msra.mxu0 %v2207
      %2211 = vmatprep.subr.bf16.mxu0 0
      %2212 = vmatpush1.bf16.xpose.msra.mxu0 0
      %2213 = vmatprep.subr.bf16.mxu0 0
      %2214 = vmatpush1.bf16.xpose.msra.mxu0 0
      %2215 = vmatprep.subr.bf16.mxu0 0
      %2216 = vmatpush1.bf16.xpose.msra.mxu0 0
      %2217 = vmatprep.subr.bf16.mxu0 0
      %2218 = vmatpush1.bf16.xpose.msra.mxu0 0
      %2219 = vmatprep.subr.bf16.mxu0 0
      %2220 = vmatpush1.bf16.xpose.msra.mxu0 0
      %2221 = vmatprep.subr.bf16.mxu0 0
      %2222 = vmatpush1.bf16.xpose.msra.mxu0 0
      %2223 = vmatprep.subr.bf16.mxu0 0
      %2224 = vmatpush1.bf16.xpose.msra.mxu0 0
      %2225 = vmatprep.subr.bf16.mxu0 0
      %2226 = vmatpush1.bf16.xpose.msra.mxu0 0
      %2227 = vmatprep.subr.bf16.mxu0 0
      %2228 = vmatpush1.bf16.xpose.msra.mxu0 0
      %2229 = vmatprep.subr.bf16.mxu0 0
      %2230 = vmatpush1.bf16.xpose.msra.mxu0 0
      %2231 = vmatprep.subr.bf16.mxu0 0
      %2232 = vmatpush1.bf16.xpose.msra.mxu0 0
      %2233 = vmatprep.subr.bf16.mxu0 0
      %2234 = vmatpush1.bf16.xpose.msra.mxu0 0
      %2235 = vmatprep.subr.bf16.mxu0 0
      %2236 = vmatpush1.bf16.xpose.msra.mxu0 0
      %2237 = vmatprep.subr.bf16.mxu0 0
      %2238 = vmatpush1.bf16.xpose.msra.mxu0 0
      %2239 = vmatprep.subr.bf16.mxu0 0
      %2240 = vmatpush1.bf16.xpose.msra.mxu0 0
      %2241 = vmatprep.mubr.bf16.mxu0 0
      %2242 = vmatmul.mubr.bf16.gmra.mrb[0].mxu0 %v2204
      %v2243 = vpop.f32.mrb[0].mxu0
      %v2244 = vadd.f32 %v2200, %v2243
      %v2245 = vpop.f32.mrb[0].mxu0
      %v2246 = vpop.f32.mrb[0].mxu0
      %v2247 = vadd.f32 %v2201, %v2246
      %v2248 = vpop.f32.mrb[0].mxu0
      %2249 = vdwg.mxu0
      %v2251 = vsel %vm2202, %v1605, 0
      %v2254 = vsel %vm2202, %v1901, 0
      %2256 = vmatprep.subr.bf16.mxu0 0
      %2257 = vmatpush1.bf16.xpose.msra.mxu0 %v2254
      %2258 = vmatprep.subr.bf16.mxu0 0
      %2259 = vmatpush1.bf16.xpose.msra.mxu0 0
      %2260 = vmatprep.subr.bf16.mxu0 0
      %2261 = vmatpush1.bf16.xpose.msra.mxu0 0
      %2262 = vmatprep.subr.bf16.mxu0 0
      %2263 = vmatpush1.bf16.xpose.msra.mxu0 0
      %2264 = vmatprep.subr.bf16.mxu0 0
      %2265 = vmatpush1.bf16.xpose.msra.mxu0 0
      %2266 = vmatprep.subr.bf16.mxu0 0
      %2267 = vmatpush1.bf16.xpose.msra.mxu0 0
      %2268 = vmatprep.subr.bf16.mxu0 0
      %2269 = vmatpush1.bf16.xpose.msra.mxu0 0
      %2270 = vmatprep.subr.bf16.mxu0 0
      %2271 = vmatpush1.bf16.xpose.msra.mxu0 0
      %2272 = vmatprep.subr.bf16.mxu0 0
      %2273 = vmatpush1.bf16.xpose.msra.mxu0 0
      %2274 = vmatprep.subr.bf16.mxu0 0
      %2275 = vmatpush1.bf16.xpose.msra.mxu0 0
      %2276 = vmatprep.subr.bf16.mxu0 0
      %2277 = vmatpush1.bf16.xpose.msra.mxu0 0
      %2278 = vmatprep.subr.bf16.mxu0 0
      %2279 = vmatpush1.bf16.xpose.msra.mxu0 0
      %2280 = vmatprep.subr.bf16.mxu0 0
      %2281 = vmatpush1.bf16.xpose.msra.mxu0 0
      %2282 = vmatprep.subr.bf16.mxu0 0
      %2283 = vmatpush1.bf16.xpose.msra.mxu0 0
      %2284 = vmatprep.subr.bf16.mxu0 0
      %2285 = vmatpush1.bf16.xpose.msra.mxu0 0
      %2286 = vmatprep.subr.bf16.mxu0 0
      %2287 = vmatpush1.bf16.xpose.msra.mxu0 0
      %2288 = vmatprep.mubr.bf16.mxu0 0
      %2289 = vmatmul.mubr.bf16.gmra.mrb[0].mxu0 %v2251
      %v2290 = vpop.f32.mrb[0].mxu0
      %v2291 = vadd.f32 %v2200, %v2290
      %v2292 = vpop.f32.mrb[0].mxu0
      %v2293 = vpop.f32.mrb[0].mxu0
      %v2294 = vadd.f32 %v2201, %v2293
      %v2295 = vpop.f32.mrb[0].mxu0
      %2296 = vdwg.mxu0
      %v2298 = vsel %vm2202, %v1606, 0
      %v2301 = vsel %vm2202, %v1902, 0
      %2303 = vmatprep.subr.bf16.mxu0 0
      %2304 = vmatpush1.bf16.xpose.msra.mxu0 %v2301
      %2305 = vmatprep.subr.bf16.mxu0 0
      %2306 = vmatpush1.bf16.xpose.msra.mxu0 0
      %2307 = vmatprep.subr.bf16.mxu0 0
      %2308 = vmatpush1.bf16.xpose.msra.mxu0 0
      %2309 = vmatprep.subr.bf16.mxu0 0
      %2310 = vmatpush1.bf16.xpose.msra.mxu0 0
      %2311 = vmatprep.subr.bf16.mxu0 0
      %2312 = vmatpush1.bf16.xpose.msra.mxu0 0
      %2313 = vmatprep.subr.bf16.mxu0 0
      %2314 = vmatpush1.bf16.xpose.msra.mxu0 0
      %2315 = vmatprep.subr.bf16.mxu0 0
      %2316 = vmatpush1.bf16.xpose.msra.mxu0 0
      %2317 = vmatprep.subr.bf16.mxu0 0
      %2318 = vmatpush1.bf16.xpose.msra.mxu0 0
      %2319 = vmatprep.subr.bf16.mxu0 0
      %2320 = vmatpush1.bf16.xpose.msra.mxu0 0
      %2321 = vmatprep.subr.bf16.mxu0 0
      %2322 = vmatpush1.bf16.xpose.msra.mxu0 0
      %2323 = vmatprep.subr.bf16.mxu0 0
      %2324 = vmatpush1.bf16.xpose.msra.mxu0 0
      %2325 = vmatprep.subr.bf16.mxu0 0
      %2326 = vmatpush1.bf16.xpose.msra.mxu0 0
      %2327 = vmatprep.subr.bf16.mxu0 0
      %2328 = vmatpush1.bf16.xpose.msra.mxu0 0
      %2329 = vmatprep.subr.bf16.mxu0 0
      %2330 = vmatpush1.bf16.xpose.msra.mxu0 0
      %2331 = vmatprep.subr.bf16.mxu0 0
      %2332 = vmatpush1.bf16.xpose.msra.mxu0 0
      %2333 = vmatprep.subr.bf16.mxu0 0
      %2334 = vmatpush1.bf16.xpose.msra.mxu0 0
      %2335 = vmatprep.mubr.bf16.mxu0 0
      %2336 = vmatmul.mubr.bf16.gmra.mrb[0].mxu0 %v2298
      %v2337 = vpop.f32.mrb[0].mxu0
      %v2338 = vadd.f32 %v2200, %v2337
      %v2339 = vpop.f32.mrb[0].mxu0
      %v2340 = vpop.f32.mrb[0].mxu0
      %v2341 = vadd.f32 %v2201, %v2340
      %v2342 = vpop.f32.mrb[0].mxu0
      %2343 = vdwg.mxu0
      %v2345 = vsel %vm2202, %v1607, 0
      %v2348 = vsel %vm2202, %v1903, 0
      %2350 = vmatprep.subr.bf16.mxu0 0
      %2351 = vmatpush1.bf16.xpose.msra.mxu0 %v2348
      %2352 = vmatprep.subr.bf16.mxu0 0
      %2353 = vmatpush1.bf16.xpose.msra.mxu0 0
      %2354 = vmatprep.subr.bf16.mxu0 0
      %2355 = vmatpush1.bf16.xpose.msra.mxu0 0
      %2356 = vmatprep.subr.bf16.mxu0 0
      %2357 = vmatpush1.bf16.xpose.msra.mxu0 0
      %2358 = vmatprep.subr.bf16.mxu0 0
      %2359 = vmatpush1.bf16.xpose.msra.mxu0 0
      %2360 = vmatprep.subr.bf16.mxu0 0
      %2361 = vmatpush1.bf16.xpose.msra.mxu0 0
      %2362 = vmatprep.subr.bf16.mxu0 0
      %2363 = vmatpush1.bf16.xpose.msra.mxu0 0
      %2364 = vmatprep.subr.bf16.mxu0 0
      %2365 = vmatpush1.bf16.xpose.msra.mxu0 0
      %2366 = vmatprep.subr.bf16.mxu0 0
      %2367 = vmatpush1.bf16.xpose.msra.mxu0 0
      %2368 = vmatprep.subr.bf16.mxu0 0
      %2369 = vmatpush1.bf16.xpose.msra.mxu0 0
      %2370 = vmatprep.subr.bf16.mxu0 0
      %2371 = vmatpush1.bf16.xpose.msra.mxu0 0
      %2372 = vmatprep.subr.bf16.mxu0 0
      %2373 = vmatpush1.bf16.xpose.msra.mxu0 0
      %2374 = vmatprep.subr.bf16.mxu0 0
      %2375 = vmatpush1.bf16.xpose.msra.mxu0 0
      %2376 = vmatprep.subr.bf16.mxu0 0
      %2377 = vmatpush1.bf16.xpose.msra.mxu0 0
      %2378 = vmatprep.subr.bf16.mxu0 0
      %2379 = vmatpush1.bf16.xpose.msra.mxu0 0
      %2380 = vmatprep.subr.bf16.mxu0 0
      %2381 = vmatpush1.bf16.xpose.msra.mxu0 0
      %2382 = vmatprep.mubr.bf16.mxu0 0
      %2383 = vmatmul.mubr.bf16.gmra.mrb[0].mxu0 %v2345
      %v2384 = vpop.f32.mrb[0].mxu0
      %v2385 = vadd.f32 %v2200, %v2384
      %v2386 = vpop.f32.mrb[0].mxu0
      %v2387 = vpop.f32.mrb[0].mxu0
      %v2388 = vadd.f32 %v2201, %v2387
      %v2389 = vpop.f32.mrb[0].mxu0
      %2390 = vdwg.mxu0
      %vm2391 = vcmask 130048
      %v2392 = vsel %vm2391, %v2244, -inf
      %2393 = vmax.xlane.f32.xlu0 %v2392
      %v2394 = vpop.xlane.xlu0 %2393
      %v2395 = vsel %vm2391, %v2247, -inf
      %2396 = vmax.xlane.f32.xlu0 %v2395
      %v2397 = vpop.xlane.xlu0 %2396
      %v2398 = vsel %vm2391, %v2291, -inf
      %2399 = vmax.xlane.f32.xlu0 %v2398
      %v2400 = vpop.xlane.xlu0 %2399
      %v2401 = vsel %vm2391, %v2294, -inf
      %2402 = vmax.xlane.f32.xlu0 %v2401
      %v2403 = vpop.xlane.xlu0 %2402
      %v2404 = vsel %vm2391, %v2338, -inf
      %2405 = vmax.xlane.f32.xlu0 %v2404
      %v2406 = vpop.xlane.xlu0 %2405
      %v2407 = vsel %vm2391, %v2341, -inf
      %2408 = vmax.xlane.f32.xlu0 %v2407
      %v2409 = vpop.xlane.xlu0 %2408
      %v2410 = vsel %vm2391, %v2385, -inf
      %2411 = vmax.xlane.f32.xlu0 %v2410
      %v2412 = vpop.xlane.xlu0 %2411
      %v2413 = vsel %vm2391, %v2388, -inf
      %2414 = vmax.xlane.f32.xlu0 %v2413
      %v2415 = vpop.xlane.xlu0 %2414
      %v2416 = vsub.f32 %v2244, %v2394
      %v2417 = vsub.f32 %v2247, %v2397
      %v2418 = vsub.f32 %v2291, %v2400
      %v2419 = vsub.f32 %v2294, %v2403
      %v2420 = vsub.f32 %v2338, %v2406
      %v2421 = vsub.f32 %v2341, %v2409
      %v2422 = vsub.f32 %v2385, %v2412
      %v2423 = vsub.f32 %v2388, %v2415
      %v2424 = vmul.f32 %v2416, 1.442695
      %v2425 = vpow.pop %v2424
      %v2426 = vmul.f32 %v2417, 1.442695
      %v2427 = vpow.pop %v2426
      %v2428 = vmul.f32 %v2418, 1.442695
      %v2429 = vpow.pop %v2428
      %v2430 = vmul.f32 %v2419, 1.442695
      %v2431 = vpow.pop %v2430
      %v2432 = vmul.f32 %v2420, 1.442695
      %v2433 = vpow.pop %v2432
      %v2434 = vmul.f32 %v2421, 1.442695
      %v2435 = vpow.pop %v2434
      %v2436 = vmul.f32 %v2422, 1.442695
      %v2437 = vpow.pop %v2436
      %v2438 = vmul.f32 %v2423, 1.442695
      %v2439 = vpow.pop %v2438
      %v2440 = vsel %vm2391, %v2425, 0.0
      %2441 = vadd.xlane.f32.xlu0 %v2440
      %v2442 = vpop.xlane.xlu0 %2441
      %v2443 = vsel %vm2391, %v2427, 0.0
      %2444 = vadd.xlane.f32.xlu0 %v2443
      %v2445 = vpop.xlane.xlu0 %2444
      %v2446 = vsel %vm2391, %v2429, 0.0
      %2447 = vadd.xlane.f32.xlu0 %v2446
      %v2448 = vpop.xlane.xlu0 %2447
      %v2449 = vsel %vm2391, %v2431, 0.0
      %2450 = vadd.xlane.f32.xlu0 %v2449
      %v2451 = vpop.xlane.xlu0 %2450
      %v2452 = vsel %vm2391, %v2433, 0.0
      %2453 = vadd.xlane.f32.xlu0 %v2452
      %v2454 = vpop.xlane.xlu0 %2453
      %v2455 = vsel %vm2391, %v2435, 0.0
      %2456 = vadd.xlane.f32.xlu0 %v2455
      %v2457 = vpop.xlane.xlu0 %2456
      %v2458 = vsel %vm2391, %v2437, 0.0
      %2459 = vadd.xlane.f32.xlu0 %v2458
      %v2460 = vpop.xlane.xlu0 %2459
      %v2461 = vsel %vm2391, %v2439, 0.0
      %2462 = vadd.xlane.f32.xlu0 %v2461
      %v2463 = vpop.xlane.xlu0 %2462
      %v2464 = vrcp.pop %v2442
      %v2465 = vrcp.pop %v2445
      %v2466 = vrcp.pop %v2448
      %v2467 = vrcp.pop %v2451
      %v2468 = vrcp.pop %v2454
      %v2469 = vrcp.pop %v2457
      %v2470 = vrcp.pop %v2460
      %v2471 = vrcp.pop %v2463
      %v2472 = vmul.f32 %v2425, %v2464
      %v2473 = vmul.f32 %v2427, %v2465
      %v2474 = vmul.f32 %v2429, %v2466
      %v2475 = vmul.f32 %v2431, %v2467
      %v2476 = vmul.f32 %v2433, %v2468
      %v2477 = vmul.f32 %v2435, %v2469
      %v2478 = vmul.f32 %v2437, %v2470
      %v2479 = vmul.f32 %v2439, %v2471
      %v2480 = vpack.c.bf16 %v2473, %v2472
      %v2481 = vpack.c.bf16 %v2475, %v2474
      %v2482 = vpack.c.bf16 %v2477, %v2476
      %v2483 = vpack.c.bf16 %v2479, %v2478
      %v2485 = vsel %vm2391, %v2480, 0
      %2487 = vmatprep.subr.bf16.mxu0 0
      %2488 = vmatpush1.bf16.msra.mxu0 %v2196
      %2489 = vmatprep.subr.bf16.mxu0 0
      %2490 = vmatpush1.bf16.msra.mxu0 0
      %2491 = vmatprep.subr.bf16.mxu0 0
      %2492 = vmatpush1.bf16.msra.mxu0 0
      %2493 = vmatprep.subr.bf16.mxu0 0
      %2494 = vmatpush1.bf16.msra.mxu0 0
      %2495 = vmatprep.subr.bf16.mxu0 0
      %2496 = vmatpush1.bf16.msra.mxu0 0
      %2497 = vmatprep.subr.bf16.mxu0 0
      %2498 = vmatpush1.bf16.msra.mxu0 0
      %2499 = vmatprep.subr.bf16.mxu0 0
      %2500 = vmatpush1.bf16.msra.mxu0 0
      %2501 = vmatprep.subr.bf16.mxu0 0
      %2502 = vmatpush1.bf16.msra.mxu0 0
      %2503 = vmatprep.subr.bf16.mxu0 0
      %2504 = vmatpush1.bf16.msra.mxu0 0
      %2505 = vmatprep.subr.bf16.mxu0 0
      %2506 = vmatpush1.bf16.msra.mxu0 0
      %2507 = vmatprep.subr.bf16.mxu0 0
      %2508 = vmatpush1.bf16.msra.mxu0 0
      %2509 = vmatprep.subr.bf16.mxu0 0
      %2510 = vmatpush1.bf16.msra.mxu0 0
      %2511 = vmatprep.subr.bf16.mxu0 0
      %2512 = vmatpush1.bf16.msra.mxu0 0
      %2513 = vmatprep.subr.bf16.mxu0 0
      %2514 = vmatpush1.bf16.msra.mxu0 0
      %2515 = vmatprep.subr.bf16.mxu0 0
      %2516 = vmatpush1.bf16.msra.mxu0 0
      %2517 = vmatprep.subr.bf16.mxu0 0
      %2518 = vmatpush1.bf16.msra.mxu0 0
      %2519 = vmatprep.mubr.bf16.mxu0 0
      %2520 = vmatmul.mubr.bf16.gmra.mrb[0].mxu0 %v2485
      %v2521 = vpop.f32.mrb[0].mxu0
      %v2522 = vadd.f32 0.0, %v2521
      %v2523 = vpop.f32.mrb[0].mxu0
      %v2524 = vpop.f32.mrb[0].mxu0
      %v2525 = vadd.f32 0.0, %v2524
      %v2526 = vpop.f32.mrb[0].mxu0
      %2527 = vdwg.mxu0
      %v2529 = vsel %vm2391, %v2481, 0
      %2531 = vmatprep.subr.bf16.mxu0 0
      %2532 = vmatpush1.bf16.msra.mxu0 %v2197
      %2533 = vmatprep.subr.bf16.mxu0 0
      %2534 = vmatpush1.bf16.msra.mxu0 0
      %2535 = vmatprep.subr.bf16.mxu0 0
      %2536 = vmatpush1.bf16.msra.mxu0 0
      %2537 = vmatprep.subr.bf16.mxu0 0
      %2538 = vmatpush1.bf16.msra.mxu0 0
      %2539 = vmatprep.subr.bf16.mxu0 0
      %2540 = vmatpush1.bf16.msra.mxu0 0
      %2541 = vmatprep.subr.bf16.mxu0 0
      %2542 = vmatpush1.bf16.msra.mxu0 0
      %2543 = vmatprep.subr.bf16.mxu0 0
      %2544 = vmatpush1.bf16.msra.mxu0 0
      %2545 = vmatprep.subr.bf16.mxu0 0
      %2546 = vmatpush1.bf16.msra.mxu0 0
      %2547 = vmatprep.subr.bf16.mxu0 0
      %2548 = vmatpush1.bf16.msra.mxu0 0
      %2549 = vmatprep.subr.bf16.mxu0 0
      %2550 = vmatpush1.bf16.msra.mxu0 0
      %2551 = vmatprep.subr.bf16.mxu0 0
      %2552 = vmatpush1.bf16.msra.mxu0 0
      %2553 = vmatprep.subr.bf16.mxu0 0
      %2554 = vmatpush1.bf16.msra.mxu0 0
      %2555 = vmatprep.subr.bf16.mxu0 0
      %2556 = vmatpush1.bf16.msra.mxu0 0
      %2557 = vmatprep.subr.bf16.mxu0 0
      %2558 = vmatpush1.bf16.msra.mxu0 0
      %2559 = vmatprep.subr.bf16.mxu0 0
      %2560 = vmatpush1.bf16.msra.mxu0 0
      %2561 = vmatprep.subr.bf16.mxu0 0
      %2562 = vmatpush1.bf16.msra.mxu0 0
      %2563 = vmatprep.mubr.bf16.mxu0 0
      %2564 = vmatmul.mubr.bf16.gmra.mrb[0].mxu0 %v2529
      %v2565 = vpop.f32.mrb[0].mxu0
      %v2566 = vadd.f32 0.0, %v2565
      %v2567 = vpop.f32.mrb[0].mxu0
      %v2568 = vpop.f32.mrb[0].mxu0
      %v2569 = vadd.f32 0.0, %v2568
      %v2570 = vpop.f32.mrb[0].mxu0
      %2571 = vdwg.mxu0
      %v2573 = vsel %vm2391, %v2482, 0
      %2575 = vmatprep.subr.bf16.mxu0 0
      %2576 = vmatpush1.bf16.msra.mxu0 %v2198
      %2577 = vmatprep.subr.bf16.mxu0 0
      %2578 = vmatpush1.bf16.msra.mxu0 0
      %2579 = vmatprep.subr.bf16.mxu0 0
      %2580 = vmatpush1.bf16.msra.mxu0 0
      %2581 = vmatprep.subr.bf16.mxu0 0
      %2582 = vmatpush1.bf16.msra.mxu0 0
      %2583 = vmatprep.subr.bf16.mxu0 0
      %2584 = vmatpush1.bf16.msra.mxu0 0
      %2585 = vmatprep.subr.bf16.mxu0 0
      %2586 = vmatpush1.bf16.msra.mxu0 0
      %2587 = vmatprep.subr.bf16.mxu0 0
      %2588 = vmatpush1.bf16.msra.mxu0 0
      %2589 = vmatprep.subr.bf16.mxu0 0
      %2590 = vmatpush1.bf16.msra.mxu0 0
      %2591 = vmatprep.subr.bf16.mxu0 0
      %2592 = vmatpush1.bf16.msra.mxu0 0
      %2593 = vmatprep.subr.bf16.mxu0 0
      %2594 = vmatpush1.bf16.msra.mxu0 0
      %2595 = vmatprep.subr.bf16.mxu0 0
      %2596 = vmatpush1.bf16.msra.mxu0 0
      %2597 = vmatprep.subr.bf16.mxu0 0
      %2598 = vmatpush1.bf16.msra.mxu0 0
      %2599 = vmatprep.subr.bf16.mxu0 0
      %2600 = vmatpush1.bf16.msra.mxu0 0
      %2601 = vmatprep.subr.bf16.mxu0 0
      %2602 = vmatpush1.bf16.msra.mxu0 0
      %2603 = vmatprep.subr.bf16.mxu0 0
      %2604 = vmatpush1.bf16.msra.mxu0 0
      %2605 = vmatprep.subr.bf16.mxu0 0
      %2606 = vmatpush1.bf16.msra.mxu0 0
      %2607 = vmatprep.mubr.bf16.mxu0 0
      %2608 = vmatmul.mubr.bf16.gmra.mrb[0].mxu0 %v2573
      %v2609 = vpop.f32.mrb[0].mxu0
      %v2610 = vadd.f32 0.0, %v2609
      %v2611 = vpop.f32.mrb[0].mxu0
      %v2612 = vpop.f32.mrb[0].mxu0
      %v2613 = vadd.f32 0.0, %v2612
      %v2614 = vpop.f32.mrb[0].mxu0
      %2615 = vdwg.mxu0
      %v2617 = vsel %vm2391, %v2483, 0
      %2619 = vmatprep.subr.bf16.mxu0 0
      %2620 = vmatpush1.bf16.msra.mxu0 %v2199
      %2621 = vmatprep.subr.bf16.mxu0 0
      %2622 = vmatpush1.bf16.msra.mxu0 0
      %2623 = vmatprep.subr.bf16.mxu0 0
      %2624 = vmatpush1.bf16.msra.mxu0 0
      %2625 = vmatprep.subr.bf16.mxu0 0
      %2626 = vmatpush1.bf16.msra.mxu0 0
      %2627 = vmatprep.subr.bf16.mxu0 0
      %2628 = vmatpush1.bf16.msra.mxu0 0
      %2629 = vmatprep.subr.bf16.mxu0 0
      %2630 = vmatpush1.bf16.msra.mxu0 0
      %2631 = vmatprep.subr.bf16.mxu0 0
      %2632 = vmatpush1.bf16.msra.mxu0 0
      %2633 = vmatprep.subr.bf16.mxu0 0
      %2634 = vmatpush1.bf16.msra.mxu0 0
      %2635 = vmatprep.subr.bf16.mxu0 0
      %2636 = vmatpush1.bf16.msra.mxu0 0
      %2637 = vmatprep.subr.bf16.mxu0 0
      %2638 = vmatpush1.bf16.msra.mxu0 0
      %2639 = vmatprep.subr.bf16.mxu0 0
      %2640 = vmatpush1.bf16.msra.mxu0 0
      %2641 = vmatprep.subr.bf16.mxu0 0
      %2642 = vmatpush1.bf16.msra.mxu0 0
      %2643 = vmatprep.subr.bf16.mxu0 0
      %2644 = vmatpush1.bf16.msra.mxu0 0
      %2645 = vmatprep.subr.bf16.mxu0 0
      %2646 = vmatpush1.bf16.msra.mxu0 0
      %2647 = vmatprep.subr.bf16.mxu0 0
      %2648 = vmatpush1.bf16.msra.mxu0 0
      %2649 = vmatprep.subr.bf16.mxu0 0
      %2650 = vmatpush1.bf16.msra.mxu0 0
      %2651 = vmatprep.mubr.bf16.mxu0 0
      %2652 = vmatmul.mubr.bf16.gmra.mrb[0].mxu0 %v2617
      %v2653 = vpop.f32.mrb[0].mxu0
      %v2654 = vadd.f32 0.0, %v2653
      %v2655 = vpop.f32.mrb[0].mxu0
      %v2656 = vpop.f32.mrb[0].mxu0
      %v2657 = vadd.f32 0.0, %v2656
      %v2658 = vpop.f32.mrb[0].mxu0
      %2659 = vdwg.mxu0
      %v2660 = vpack.c.bf16 %v2525, %v2522
      %v2661 = vpack.c.bf16 %v2569, %v2566
      %v2662 = vpack.c.bf16 %v2613, %v2610
      %v2663 = vpack.c.bf16 %v2657, %v2654
      %v2664 = vld [vmem:[%s986] sm:$0xf]
      %v2665 = vld [vmem:[%s986 + $0x4] sm:$0xf]
      %v2666 = vld [vmem:[%s986 + $0x8] sm:$0xf]
      %v2667 = vld [vmem:[%s986 + $0xc] sm:$0xf]
      %v2669 = vsel %vm2202, %v2660, 0
      %vm2671 = vcmask 1043456
      %v2673 = vsel %vm2671, %v2664, 0
      %2675 = vmatprep.subr.bf16.mxu0 0
      %2676 = vmatpush1.bf16.msra.mxu0 %v2673
      %2677 = vmatprep.subr.bf16.mxu0 0
      %2678 = vmatpush1.bf16.msra.mxu0 0
      %2679 = vmatprep.subr.bf16.mxu0 0
      %2680 = vmatpush1.bf16.msra.mxu0 0
      %2681 = vmatprep.subr.bf16.mxu0 0
      %2682 = vmatpush1.bf16.msra.mxu0 0
      %2683 = vmatprep.subr.bf16.mxu0 0
      %2684 = vmatpush1.bf16.msra.mxu0 0
      %2685 = vmatprep.subr.bf16.mxu0 0
      %2686 = vmatpush1.bf16.msra.mxu0 0
      %2687 = vmatprep.subr.bf16.mxu0 0
      %2688 = vmatpush1.bf16.msra.mxu0 0
      %2689 = vmatprep.subr.bf16.mxu0 0
      %2690 = vmatpush1.bf16.msra.mxu0 0
      %2691 = vmatprep.subr.bf16.mxu0 0
      %2692 = vmatpush1.bf16.msra.mxu0 0
      %2693 = vmatprep.subr.bf16.mxu0 0
      %2694 = vmatpush1.bf16.msra.mxu0 0
      %2695 = vmatprep.subr.bf16.mxu0 0
      %2696 = vmatpush1.bf16.msra.mxu0 0
      %2697 = vmatprep.subr.bf16.mxu0 0
      %2698 = vmatpush1.bf16.msra.mxu0 0
      %2699 = vmatprep.subr.bf16.mxu0 0
      %2700 = vmatpush1.bf16.msra.mxu0 0
      %2701 = vmatprep.subr.bf16.mxu0 0
      %2702 = vmatpush1.bf16.msra.mxu0 0
      %2703 = vmatprep.subr.bf16.mxu0 0
      %2704 = vmatpush1.bf16.msra.mxu0 0
      %2705 = vmatprep.subr.bf16.mxu0 0
      %2706 = vmatpush1.bf16.msra.mxu0 0
      %2707 = vmatprep.mubr.bf16.mxu0 0
      %2708 = vmatmul.mubr.bf16.gmra.mrb[0].mxu0 %v2669
      %v2709 = vpop.f32.mrb[0].mxu0
      %v2710 = vadd.f32 0.0, %v2709
      %v2711 = vpop.f32.mrb[0].mxu0
      %v2712 = vpop.f32.mrb[0].mxu0
      %v2713 = vadd.f32 0.0, %v2712
      %v2714 = vpop.f32.mrb[0].mxu0
      %2715 = vdwg.mxu0
      %v2717 = vsel %vm2202, %v2661, 0
      %v2720 = vsel %vm2671, %v2665, 0
      %2722 = vmatprep.subr.bf16.mxu0 0
      %2723 = vmatpush1.bf16.msra.mxu0 %v2720
      %2724 = vmatprep.subr.bf16.mxu0 0
      %2725 = vmatpush1.bf16.msra.mxu0 0
      %2726 = vmatprep.subr.bf16.mxu0 0
      %2727 = vmatpush1.bf16.msra.mxu0 0
      %2728 = vmatprep.subr.bf16.mxu0 0
      %2729 = vmatpush1.bf16.msra.mxu0 0
      %2730 = vmatprep.subr.bf16.mxu0 0
      %2731 = vmatpush1.bf16.msra.mxu0 0
      %2732 = vmatprep.subr.bf16.mxu0 0
      %2733 = vmatpush1.bf16.msra.mxu0 0
      %2734 = vmatprep.subr.bf16.mxu0 0
      %2735 = vmatpush1.bf16.msra.mxu0 0
      %2736 = vmatprep.subr.bf16.mxu0 0
      %2737 = vmatpush1.bf16.msra.mxu0 0
      %2738 = vmatprep.subr.bf16.mxu0 0
      %2739 = vmatpush1.bf16.msra.mxu0 0
      %2740 = vmatprep.subr.bf16.mxu0 0
      %2741 = vmatpush1.bf16.msra.mxu0 0
      %2742 = vmatprep.subr.bf16.mxu0 0
      %2743 = vmatpush1.bf16.msra.mxu0 0
      %2744 = vmatprep.subr.bf16.mxu0 0
      %2745 = vmatpush1.bf16.msra.mxu0 0
      %2746 = vmatprep.subr.bf16.mxu0 0
      %2747 = vmatpush1.bf16.msra.mxu0 0
      %2748 = vmatprep.subr.bf16.mxu0 0
      %2749 = vmatpush1.bf16.msra.mxu0 0
      %2750 = vmatprep.subr.bf16.mxu0 0
      %2751 = vmatpush1.bf16.msra.mxu0 0
      %2752 = vmatprep.subr.bf16.mxu0 0
      %2753 = vmatpush1.bf16.msra.mxu0 0
      %2754 = vmatprep.mubr.bf16.mxu0 0
      %2755 = vmatmul.mubr.bf16.gmra.mrb[0].mxu0 %v2717
      %v2756 = vpop.f32.mrb[0].mxu0
      %v2757 = vadd.f32 0.0, %v2756
      %v2758 = vpop.f32.mrb[0].mxu0
      %v2759 = vpop.f32.mrb[0].mxu0
      %v2760 = vadd.f32 0.0, %v2759
      %v2761 = vpop.f32.mrb[0].mxu0
      %2762 = vdwg.mxu0
      %v2764 = vsel %vm2202, %v2662, 0
      %v2767 = vsel %vm2671, %v2666, 0
      %2769 = vmatprep.subr.bf16.mxu0 0
      %2770 = vmatpush1.bf16.msra.mxu0 %v2767
      %2771 = vmatprep.subr.bf16.mxu0 0
      %2772 = vmatpush1.bf16.msra.mxu0 0
      %2773 = vmatprep.subr.bf16.mxu0 0
      %2774 = vmatpush1.bf16.msra.mxu0 0
      %2775 = vmatprep.subr.bf16.mxu0 0
      %2776 = vmatpush1.bf16.msra.mxu0 0
      %2777 = vmatprep.subr.bf16.mxu0 0
      %2778 = vmatpush1.bf16.msra.mxu0 0
      %2779 = vmatprep.subr.bf16.mxu0 0
      %2780 = vmatpush1.bf16.msra.mxu0 0
      %2781 = vmatprep.subr.bf16.mxu0 0
      %2782 = vmatpush1.bf16.msra.mxu0 0
      %2783 = vmatprep.subr.bf16.mxu0 0
      %2784 = vmatpush1.bf16.msra.mxu0 0
      %2785 = vmatprep.subr.bf16.mxu0 0
      %2786 = vmatpush1.bf16.msra.mxu0 0
      %2787 = vmatprep.subr.bf16.mxu0 0
      %2788 = vmatpush1.bf16.msra.mxu0 0
      %2789 = vmatprep.subr.bf16.mxu0 0
      %2790 = vmatpush1.bf16.msra.mxu0 0
      %2791 = vmatprep.subr.bf16.mxu0 0
      %2792 = vmatpush1.bf16.msra.mxu0 0
      %2793 = vmatprep.subr.bf16.mxu0 0
      %2794 = vmatpush1.bf16.msra.mxu0 0
      %2795 = vmatprep.subr.bf16.mxu0 0
      %2796 = vmatpush1.bf16.msra.mxu0 0
      %2797 = vmatprep.subr.bf16.mxu0 0
      %2798 = vmatpush1.bf16.msra.mxu0 0
      %2799 = vmatprep.subr.bf16.mxu0 0
      %2800 = vmatpush1.bf16.msra.mxu0 0
      %2801 = vmatprep.mubr.bf16.mxu0 0
      %2802 = vmatmul.mubr.bf16.gmra.mrb[0].mxu0 %v2764
      %v2803 = vpop.f32.mrb[0].mxu0
      %v2804 = vadd.f32 0.0, %v2803
      %v2805 = vpop.f32.mrb[0].mxu0
      %v2806 = vpop.f32.mrb[0].mxu0
      %v2807 = vadd.f32 0.0, %v2806
      %v2808 = vpop.f32.mrb[0].mxu0
      %2809 = vdwg.mxu0
      %v2811 = vsel %vm2202, %v2663, 0
      %v2814 = vsel %vm2671, %v2667, 0
      %2816 = vmatprep.subr.bf16.mxu0 0
      %2817 = vmatpush1.bf16.msra.mxu0 %v2814
      %2818 = vmatprep.subr.bf16.mxu0 0
      %2819 = vmatpush1.bf16.msra.mxu0 0
      %2820 = vmatprep.subr.bf16.mxu0 0
      %2821 = vmatpush1.bf16.msra.mxu0 0
      %2822 = vmatprep.subr.bf16.mxu0 0
      %2823 = vmatpush1.bf16.msra.mxu0 0
      %2824 = vmatprep.subr.bf16.mxu0 0
      %2825 = vmatpush1.bf16.msra.mxu0 0
      %2826 = vmatprep.subr.bf16.mxu0 0
      %2827 = vmatpush1.bf16.msra.mxu0 0
      %2828 = vmatprep.subr.bf16.mxu0 0
      %2829 = vmatpush1.bf16.msra.mxu0 0
      %2830 = vmatprep.subr.bf16.mxu0 0
      %2831 = vmatpush1.bf16.msra.mxu0 0
      %2832 = vmatprep.subr.bf16.mxu0 0
      %2833 = vmatpush1.bf16.msra.mxu0 0
      %2834 = vmatprep.subr.bf16.mxu0 0
      %2835 = vmatpush1.bf16.msra.mxu0 0
      %2836 = vmatprep.subr.bf16.mxu0 0
      %2837 = vmatpush1.bf16.msra.mxu0 0
      %2838 = vmatprep.subr.bf16.mxu0 0
      %2839 = vmatpush1.bf16.msra.mxu0 0
      %2840 = vmatprep.subr.bf16.mxu0 0
      %2841 = vmatpush1.bf16.msra.mxu0 0
      %2842 = vmatprep.subr.bf16.mxu0 0
      %2843 = vmatpush1.bf16.msra.mxu0 0
      %2844 = vmatprep.subr.bf16.mxu0 0
      %2845 = vmatpush1.bf16.msra.mxu0 0
      %2846 = vmatprep.subr.bf16.mxu0 0
      %2847 = vmatpush1.bf16.msra.mxu0 0
      %2848 = vmatprep.mubr.bf16.mxu0 0
      %2849 = vmatmul.mubr.bf16.gmra.mrb[0].mxu0 %v2811
      %v2850 = vpop.f32.mrb[0].mxu0
      %v2851 = vadd.f32 0.0, %v2850
      %v2852 = vpop.f32.mrb[0].mxu0
      %v2853 = vpop.f32.mrb[0].mxu0
      %v2854 = vadd.f32 0.0, %v2853
      %v2855 = vpop.f32.mrb[0].mxu0
      %2856 = vdwg.mxu0
      %v2857 = vsel %vm1139, %v2710, 0.0
      %v2858 = vsel %vm1139, %v2757, 0.0
      %v2859 = vadd.f32 %v2857, %v2858
      %v2860 = vsel %vm1139, %v2804, 0.0
      %v2861 = vadd.f32 %v2859, %v2860
      %v2862 = vsel %vm1139, %v2851, 0.0
      %v2863 = vadd.f32 %v2861, %v2862
      %v2864 = vsel %vm1139, %v2713, 0.0
      %v2865 = vsel %vm1139, %v2760, 0.0
      %v2866 = vadd.f32 %v2864, %v2865
      %v2867 = vsel %vm1139, %v2807, 0.0
      %v2868 = vadd.f32 %v2866, %v2867
      %v2869 = vsel %vm1139, %v2854, 0.0
      %v2870 = vadd.f32 %v2868, %v2869
      %v2871 = vld [vmem:[%s989] sm:$0x1]
      %v2873 = vlaneseq
      %v2874 = vshrl.u32 %v2873, 7
      %v2875 = vsub.s32 0, %v2874
      %v2876 = vrot.slane %v2871, %v2875
      %v2878 = vadd.f32 %v2863, %v2876
      %v2879 = vadd.f32 %v2870, %v2876
      %v2880 = vadd.f32 %v2878, %v1113
      %v2881 = vadd.f32 %v2879, %v1114
      %v2882 = vld [vmem:[%s992] sm:$0x1]
      %v2883 = vld [vmem:[%s995] sm:$0x1]
      %v2884 = vsel %vm1139, %v2880, 0.0
      %2885 = vadd.xlane.f32.xlu0 %v2884
      %v2886 = vpop.xlane.xlu0 %2885
      %v2887 = vsel %vm1139, %v2881, 0.0
      %2888 = vadd.xlane.f32.xlu0 %v2887
      %v2889 = vpop.xlane.xlu0 %2888
      %v2890 = vrcp.pop 32.0
      %v2891 = vmul.f32 %v2886, %v2890
      %v2892 = vmul.f32 %v2889, %v2890
      %v2893 = vsub.f32 %v2880, %v2891
      %v2894 = vsub.f32 %v2881, %v2892
      %v2895 = vmul.f32 %v2893, %v2893
      %v2896 = vmul.f32 %v2894, %v2894
      %v2897 = vsel %vm1139, %v2895, 0.0
      %2898 = vadd.xlane.f32.xlu0 %v2897
      %v2899 = vpop.xlane.xlu0 %2898
      %v2900 = vsel %vm1139, %v2896, 0.0
      %2901 = vadd.xlane.f32.xlu0 %v2900
      %v2902 = vpop.xlane.xlu0 %2901
      %v2903 = vmul.f32 %v2899, %v2890
      %v2904 = vmul.f32 %v2902, %v2890
      %v2905 = vadd.f32 %v2903, 1e-12
      %v2906 = vadd.f32 %v2904, 1e-12
      %v2907 = vrsqrt.pop %v2905
      %v2908 = vrsqrt.pop %v2906
      %v2909 = vmul.f32 %v2893, %v2907
      %v2910 = vmul.f32 %v2894, %v2908
      %v2912 = vlaneseq
      %v2913 = vshrl.u32 %v2912, 7
      %v2914 = vsub.s32 0, %v2913
      %v2915 = vrot.slane %v2882, %v2914
      %v2917 = vmul.f32 %v2909, %v2915
      %v2918 = vmul.f32 %v2910, %v2915
      %v2920 = vlaneseq
      %v2921 = vshrl.u32 %v2920, 7
      %v2922 = vsub.s32 0, %v2921
      %v2923 = vrot.slane %v2883, %v2922
      %v2925 = vadd.f32 %v2917, %v2923
      %v2926 = vadd.f32 %v2918, %v2923
      %v2927 = vpack.c.bf16 %v2926, %v2925
      %v2928 = vld [vmem:[%s1000] sm:$0xf]
      %v2929 = vld [vmem:[%s1000 + $0x4] sm:$0xf]
      %v2930 = vld [vmem:[%s1000 + $0x8] sm:$0xf]
      %v2931 = vld [vmem:[%s1000 + $0xc] sm:$0xf]
      %v2932 = vld [vmem:[%s1003] sm:$0x1]
      %v2934 = vlaneseq
      %v2935 = vshrl.u32 %v2934, 7
      %v2936 = vsub.s32 0, %v2935
      %v2937 = vrot.slane %v2932, %v2936
      %v2943 = vunpack.c.l.b16 %v2928
      %v2944 = vunpack.c.l.b16 %v2929
      %v2945 = vunpack.c.l.b16 %v2930
      %v2946 = vunpack.c.l.b16 %v2931
      %v2947 = vpack.c.b16 %v2944, %v2943
      %v2948 = vpack.c.b16 %v2946, %v2945
      %v2952 = vsel %vm1139, %v2927, 0
      %2954 = vmatprep.subr.bf16.mxu0 0
      %2955 = vmatpush1.bf16.msra.mxu0 %v2947
      %2956 = vmatprep.subr.bf16.mxu0 0
      %2957 = vmatpush1.bf16.msra.mxu0 %v2948
      %2958 = vmatprep.subr.bf16.mxu0 0
      %2959 = vmatpush1.bf16.msra.mxu0 0
      %2960 = vmatprep.subr.bf16.mxu0 0
      %2961 = vmatpush1.bf16.msra.mxu0 0
      %2962 = vmatprep.subr.bf16.mxu0 0
      %2963 = vmatpush1.bf16.msra.mxu0 0
      %2964 = vmatprep.subr.bf16.mxu0 0
      %2965 = vmatpush1.bf16.msra.mxu0 0
      %2966 = vmatprep.subr.bf16.mxu0 0
      %2967 = vmatpush1.bf16.msra.mxu0 0
      %2968 = vmatprep.subr.bf16.mxu0 0
      %2969 = vmatpush1.bf16.msra.mxu0 0
      %2970 = vmatprep.subr.bf16.mxu0 0
      %2971 = vmatpush1.bf16.msra.mxu0 0
      %2972 = vmatprep.subr.bf16.mxu0 0
      %2973 = vmatpush1.bf16.msra.mxu0 0
      %2974 = vmatprep.subr.bf16.mxu0 0
      %2975 = vmatpush1.bf16.msra.mxu0 0
      %2976 = vmatprep.subr.bf16.mxu0 0
      %2977 = vmatpush1.bf16.msra.mxu0 0
      %2978 = vmatprep.subr.bf16.mxu0 0
      %2979 = vmatpush1.bf16.msra.mxu0 0
      %2980 = vmatprep.subr.bf16.mxu0 0
      %2981 = vmatpush1.bf16.msra.mxu0 0
      %2982 = vmatprep.subr.bf16.mxu0 0
      %2983 = vmatpush1.bf16.msra.mxu0 0
      %2984 = vmatprep.subr.bf16.mxu0 0
      %2985 = vmatpush1.bf16.msra.mxu0 0
      %2986 = vmatprep.mubr.bf16.mxu0 0
      %2987 = vmatmul.mubr.bf16.gmra.mrb[0].mxu0 %v2952
      %v2988 = vpop.f32.mrb[0].mxu0
      %v2989 = vadd.f32 %v2937, %v2988
      %v2990 = vpop.f32.mrb[0].mxu0
      %v2991 = vpop.f32.mrb[0].mxu0
      %v2992 = vadd.f32 %v2937, %v2991
      %v2993 = vpop.f32.mrb[0].mxu0
      %2994 = vdwg.mxu0
      %v2995 = vmul.f32 %v2989, 0.5
      %v2996 = vmul.f32 %v2992, 0.5
      %v2997 = vmul.f32 %v2989, 0.044715
      %v2998 = vmul.f32 %v2992, 0.044715
      %v2999 = vmul.f32 %v2997, %v2989
      %v3000 = vmul.f32 %v2998, %v2992
      %v3001 = vmul.f32 %v2999, %v2989
      %v3002 = vmul.f32 %v3000, %v2992
      %v3003 = vadd.f32 %v2989, %v3001
      %v3004 = vadd.f32 %v2992, %v3002
      %v3005 = vmul.f32 %v3003, 0.7978846
      %v3006 = vmul.f32 %v3004, 0.7978846
      %v3007 = vtanh.pop %v3005
      %v3008 = vtanh.pop %v3006
      %v3009 = vadd.f32 %v3007, 1.0
      %v3010 = vadd.f32 %v3008, 1.0
      %v3011 = vmul.f32 %v2995, %v3009
      %v3012 = vmul.f32 %v2996, %v3010
      %v3013 = vpack.c.bf16 %v3012, %v3011
      %v3014 = vld [vmem:[%s1008] sm:$0xf]
      %v3015 = vld [vmem:[%s1008 + $0x4] sm:$0xf]
      %v3016 = vld [vmem:[%s1008 + $0x8] sm:$0xf]
      %v3017 = vld [vmem:[%s1008 + $0xc] sm:$0xf]
      %v3018 = vld [vmem:[%s1008 + $0x10] sm:$0xf]
      %v3019 = vld [vmem:[%s1008 + $0x14] sm:$0xf]
      %v3020 = vld [vmem:[%s1008 + $0x18] sm:$0xf]
      %v3021 = vld [vmem:[%s1008 + $0x1c] sm:$0xf]
      %v3022 = vld [vmem:[%s1011] sm:$0x1]
      %v3024 = vlaneseq
      %v3025 = vshrl.u32 %v3024, 7
      %v3026 = vsub.s32 0, %v3025
      %v3027 = vrot.slane %v3022, %v3026
      %v3037 = vunpack.c.l.b16 %v3014
      %v3038 = vunpack.c.l.b16 %v3015
      %v3039 = vunpack.c.l.b16 %v3016
      %v3040 = vunpack.c.l.b16 %v3017
      %v3041 = vunpack.c.l.b16 %v3018
      %v3042 = vunpack.c.l.b16 %v3019
      %v3043 = vunpack.c.l.b16 %v3020
      %v3044 = vunpack.c.l.b16 %v3021
      %v3045 = vpack.c.b16 %v3038, %v3037
      %v3046 = vpack.c.b16 %v3040, %v3039
      %v3047 = vpack.c.b16 %v3042, %v3041
      %v3048 = vpack.c.b16 %v3044, %v3043
      %vm3053 = vcmask 523264
      %v3055 = vsel %vm3053, %v3013, 0
      %3057 = vmatprep.subr.bf16.mxu0 0
      %3058 = vmatpush1.bf16.msra.mxu0 %v3045
      %3059 = vmatprep.subr.bf16.mxu0 0
      %3060 = vmatpush1.bf16.msra.mxu0 %v3046
      %3061 = vmatprep.subr.bf16.mxu0 0
      %3062 = vmatpush1.bf16.msra.mxu0 %v3047
      %3063 = vmatprep.subr.bf16.mxu0 0
      %3064 = vmatpush1.bf16.msra.mxu0 %v3048
      %3065 = vmatprep.subr.bf16.mxu0 0
      %3066 = vmatpush1.bf16.msra.mxu0 0
      %3067 = vmatprep.subr.bf16.mxu0 0
      %3068 = vmatpush1.bf16.msra.mxu0 0
      %3069 = vmatprep.subr.bf16.mxu0 0
      %3070 = vmatpush1.bf16.msra.mxu0 0
      %3071 = vmatprep.subr.bf16.mxu0 0
      %3072 = vmatpush1.bf16.msra.mxu0 0
      %3073 = vmatprep.subr.bf16.mxu0 0
      %3074 = vmatpush1.bf16.msra.mxu0 0
      %3075 = vmatprep.subr.bf16.mxu0 0
      %3076 = vmatpush1.bf16.msra.mxu0 0
      %3077 = vmatprep.subr.bf16.mxu0 0
      %3078 = vmatpush1.bf16.msra.mxu0 0
      %3079 = vmatprep.subr.bf16.mxu0 0
      %3080 = vmatpush1.bf16.msra.mxu0 0
      %3081 = vmatprep.subr.bf16.mxu0 0
      %3082 = vmatpush1.bf16.msra.mxu0 0
      %3083 = vmatprep.subr.bf16.mxu0 0
      %3084 = vmatpush1.bf16.msra.mxu0 0
      %3085 = vmatprep.subr.bf16.mxu0 0
      %3086 = vmatpush1.bf16.msra.mxu0 0
      %3087 = vmatprep.subr.bf16.mxu0 0
      %3088 = vmatpush1.bf16.msra.mxu0 0
      %3089 = vmatprep.mubr.bf16.mxu0 0
      %3090 = vmatmul.mubr.bf16.gmra.mrb[0].mxu0 %v3055
      %v3091 = vpop.f32.mrb[0].mxu0
      %v3092 = vadd.f32 %v3027, %v3091
      %v3093 = vpop.f32.mrb[0].mxu0
      %v3094 = vpop.f32.mrb[0].mxu0
      %v3095 = vadd.f32 %v3027, %v3094
      %v3096 = vpop.f32.mrb[0].mxu0
      %3097 = vdwg.mxu0
      %v3098 = vadd.f32 %v3092, %v2925
      %v3099 = vadd.f32 %v3095, %v2926
      %v3100 = vld [vmem:[%s1014] sm:$0x1]
      %v3101 = vld [vmem:[%s1017] sm:$0x1]
      %v3102 = vsel %vm1139, %v3098, 0.0
      %3103 = vadd.xlane.f32.xlu0 %v3102
      %v3104 = vpop.xlane.xlu0 %3103
      %v3105 = vsel %vm1139, %v3099, 0.0
      %3106 = vadd.xlane.f32.xlu0 %v3105
      %v3107 = vpop.xlane.xlu0 %3106
      %v3108 = vmul.f32 %v3104, %v2890
      %v3109 = vmul.f32 %v3107, %v2890
      %v3110 = vsub.f32 %v3098, %v3108
      %v3111 = vsub.f32 %v3099, %v3109
      %v3112 = vmul.f32 %v3110, %v3110
      %v3113 = vmul.f32 %v3111, %v3111
      %v3114 = vsel %vm1139, %v3112, 0.0
      %3115 = vadd.xlane.f32.xlu0 %v3114
      %v3116 = vpop.xlane.xlu0 %3115
      %v3117 = vsel %vm1139, %v3113, 0.0
      %3118 = vadd.xlane.f32.xlu0 %v3117
      %v3119 = vpop.xlane.xlu0 %3118
      %v3120 = vmul.f32 %v3116, %v2890
      %v3121 = vmul.f32 %v3119, %v2890
      %v3122 = vadd.f32 %v3120, 1e-12
      %v3123 = vadd.f32 %v3121, 1e-12
      %v3124 = vrsqrt.pop %v3122
      %v3125 = vrsqrt.pop %v3123
      %v3126 = vmul.f32 %v3110, %v3124
      %v3127 = vmul.f32 %v3111, %v3125
      %v3129 = vlaneseq
      %v3130 = vshrl.u32 %v3129, 7
      %v3131 = vsub.s32 0, %v3130
      %v3132 = vrot.slane %v3100, %v3131
      %v3134 = vmul.f32 %v3126, %v3132
      %v3135 = vmul.f32 %v3127, %v3132
      %v3137 = vlaneseq
      %v3138 = vshrl.u32 %v3137, 7
      %v3139 = vsub.s32 0, %v3138
      %v3140 = vrot.slane %v3101, %v3139
      %v3142 = vadd.f32 %v3134, %v3140
      %v3143 = vadd.f32 %v3135, %v3140
      %3144 = vst.msk [vmem:[#allocation2] sm:$0xff] %vm1139, %v3142
      %3145 = vst.msk [vmem:[#allocation2 + $0x8] sm:$0xff] %vm1139, %v3143
      %p3146 = scmp.eq.s32.totalorder %s40, 1
      // Predicated region
      $region121: #{longformer_forward.1} parent=115 // pred_check
        %p3147 = pneg %p3146
      $region122: #{longformer_forward.1} parent=115 // pred_check_branch
        %3149 = sbr.rel (%p3147) target = $region124
      $region123: #{longformer_forward.1} parent=115 // pred_region
        %v3150 = vld [vmem:[%s20] sm:$0xff]
        %v3151 = vld [vmem:[%s20 + $0x8] sm:$0xff]
        %v3152 = vld [vmem:[%s20 + $0x10] sm:$0xff]
        %v3153 = vld [vmem:[%s20 + $0x18] sm:$0xff]
        %v3154 = vld [vmem:[%s21] sm:$0x1]
        %v3156 = vlaneseq
        %v3157 = vshrl.u32 %v3156, 7
        %v3158 = vsub.s32 0, %v3157
        %v3159 = vrot.slane %v3154, %v3158
        %v3162 = vsel %vm1139, %v3142, 0
        %3164 = vmatprep.subr.mxu0 0.0
        %3165 = vmatpush1.msra.mxu0 %v3150
        %3166 = vmatprep.subr.mxu0 0.0
        %3167 = vmatpush1.msra.mxu0 %v3151
        %3168 = vmatprep.subr.mxu0 0.0
        %3169 = vmatpush1.msra.mxu0 %v3152
        %3170 = vmatprep.subr.mxu0 0.0
        %3171 = vmatpush1.msra.mxu0 %v3153
        %3172 = vmatprep.subr.mxu0 0.0
        %3173 = vmatpush1.msra.mxu0 0.0
        %3174 = vmatprep.subr.mxu0 0.0
        %3175 = vmatpush1.msra.mxu0 0.0
        %3176 = vmatprep.subr.mxu0 0.0
        %3177 = vmatpush1.msra.mxu0 0.0
        %3178 = vmatprep.subr.mxu0 0.0
        %3179 = vmatpush1.msra.mxu0 0.0
        %3180 = vmatprep.subr.mxu0 0.0
        %3181 = vmatpush1.msra.mxu0 0.0
        %3182 = vmatprep.subr.mxu0 0.0
        %3183 = vmatpush1.msra.mxu0 0.0
        %3184 = vmatprep.subr.mxu0 0.0
        %3185 = vmatpush1.msra.mxu0 0.0
        %3186 = vmatprep.subr.mxu0 0.0
        %3187 = vmatpush1.msra.mxu0 0.0
        %3188 = vmatprep.subr.mxu0 0.0
        %3189 = vmatpush1.msra.mxu0 0.0
        %3190 = vmatprep.subr.mxu0 0.0
        %3191 = vmatpush1.msra.mxu0 0.0
        %3192 = vmatprep.subr.mxu0 0.0
        %3193 = vmatpush1.msra.mxu0 0.0
        %3194 = vmatprep.subr.mxu0 0.0
        %3195 = vmatpush1.msra.mxu0 0.0
        %3196 = vmatprep.subr.mxu0 0.0
        %3197 = vmatpush1.msra.mxu0 0.0
        %3198 = vmatprep.subr.mxu0 0.0
        %3199 = vmatpush1.msra.mxu0 0.0
        %3200 = vmatprep.subr.mxu0 0.0
        %3201 = vmatpush1.msra.mxu0 0.0
        %3202 = vmatprep.subr.mxu0 0.0
        %3203 = vmatpush1.msra.mxu0 0.0
        %3204 = vmatprep.subr.mxu0 0.0
        %3205 = vmatpush1.msra.mxu0 0.0
        %3206 = vmatprep.subr.mxu0 0.0
        %3207 = vmatpush1.msra.mxu0 0.0
        %3208 = vmatprep.subr.mxu0 0.0
        %3209 = vmatpush1.msra.mxu0 0.0
        %3210 = vmatprep.subr.mxu0 0.0
        %3211 = vmatpush1.msra.mxu0 0.0
        %3212 = vmatprep.subr.mxu0 0.0
        %3213 = vmatpush1.msra.mxu0 0.0
        %3214 = vmatprep.subr.mxu0 0.0
        %3215 = vmatpush1.msra.mxu0 0.0
        %3216 = vmatprep.subr.mxu0 0.0
        %3217 = vmatpush1.msra.mxu0 0.0
        %3218 = vmatprep.subr.mxu0 0.0
        %3219 = vmatpush1.msra.mxu0 0.0
        %3220 = vmatprep.subr.mxu0 0.0
        %3221 = vmatpush1.msra.mxu0 0.0
        %3222 = vmatprep.subr.mxu0 0.0
        %3223 = vmatpush1.msra.mxu0 0.0
        %3224 = vmatprep.subr.mxu0 0.0
        %3225 = vmatpush1.msra.mxu0 0.0
        %3226 = vmatprep.subr.mxu0 0.0
        %3227 = vmatpush1.msra.mxu0 0.0
        %3228 = vmatprep.mubr.f32.mxu0 0.0
        %3229 = vmatmul.mubr.f32.gmra.mrb[0].mxu0 %v3162
        %v3230 = vpop.f32.mrb[0].mxu0
        %v3231 = vadd.f32 %v3159, %v3230
        %v3232 = vpop.f32.mrb[0].mxu0
        %3233 = vdwg.mxu0
        %v3234 = vtanh.pop %v3231
        %v3235 = vld [vmem:[%s22] sm:$0xff]
        %v3236 = vld [vmem:[%s22 + $0x8] sm:$0xff]
        %v3237 = vld [vmem:[%s22 + $0x10] sm:$0xff]
        %v3238 = vld [vmem:[%s22 + $0x18] sm:$0xff]
        %v3239 = vld [vmem:[%s23] sm:$0x1]
        %v3241 = vlaneseq
        %v3242 = vshrl.u32 %v3241, 7
        %v3243 = vsub.s32 0, %v3242
        %v3244 = vrot.slane %v3239, %v3243
        %v3247 = vsel %vm1139, %v3234, 0
        %3249 = vmatprep.subr.mxu0 0.0
        %3250 = vmatpush1.msra.mxu0 %v3235
        %3251 = vmatprep.subr.mxu0 0.0
        %3252 = vmatpush1.msra.mxu0 %v3236
        %3253 = vmatprep.subr.mxu0 0.0
        %3254 = vmatpush1.msra.mxu0 %v3237
        %3255 = vmatprep.subr.mxu0 0.0
        %3256 = vmatpush1.msra.mxu0 %v3238
        %3257 = vmatprep.subr.mxu0 0.0
        %3258 = vmatpush1.msra.mxu0 0.0
        %3259 = vmatprep.subr.mxu0 0.0
        %3260 = vmatpush1.msra.mxu0 0.0
        %3261 = vmatprep.subr.mxu0 0.0
        %3262 = vmatpush1.msra.mxu0 0.0
        %3263 = vmatprep.subr.mxu0 0.0
        %3264 = vmatpush1.msra.mxu0 0.0
        %3265 = vmatprep.subr.mxu0 0.0
        %3266 = vmatpush1.msra.mxu0 0.0
        %3267 = vmatprep.subr.mxu0 0.0
        %3268 = vmatpush1.msra.mxu0 0.0
        %3269 = vmatprep.subr.mxu0 0.0
        %3270 = vmatpush1.msra.mxu0 0.0
        %3271 = vmatprep.subr.mxu0 0.0
        %3272 = vmatpush1.msra.mxu0 0.0
        %3273 = vmatprep.subr.mxu0 0.0
        %3274 = vmatpush1.msra.mxu0 0.0
        %3275 = vmatprep.subr.mxu0 0.0
        %3276 = vmatpush1.msra.mxu0 0.0
        %3277 = vmatprep.subr.mxu0 0.0
        %3278 = vmatpush1.msra.mxu0 0.0
        %3279 = vmatprep.subr.mxu0 0.0
        %3280 = vmatpush1.msra.mxu0 0.0
        %3281 = vmatprep.subr.mxu0 0.0
        %3282 = vmatpush1.msra.mxu0 0.0
        %3283 = vmatprep.subr.mxu0 0.0
        %3284 = vmatpush1.msra.mxu0 0.0
        %3285 = vmatprep.subr.mxu0 0.0
        %3286 = vmatpush1.msra.mxu0 0.0
        %3287 = vmatprep.subr.mxu0 0.0
        %3288 = vmatpush1.msra.mxu0 0.0
        %3289 = vmatprep.subr.mxu0 0.0
        %3290 = vmatpush1.msra.mxu0 0.0
        %3291 = vmatprep.subr.mxu0 0.0
        %3292 = vmatpush1.msra.mxu0 0.0
        %3293 = vmatprep.subr.mxu0 0.0
        %3294 = vmatpush1.msra.mxu0 0.0
        %3295 = vmatprep.subr.mxu0 0.0
        %3296 = vmatpush1.msra.mxu0 0.0
        %3297 = vmatprep.subr.mxu0 0.0
        %3298 = vmatpush1.msra.mxu0 0.0
        %3299 = vmatprep.subr.mxu0 0.0
        %3300 = vmatpush1.msra.mxu0 0.0
        %3301 = vmatprep.subr.mxu0 0.0
        %3302 = vmatpush1.msra.mxu0 0.0
        %3303 = vmatprep.subr.mxu0 0.0
        %3304 = vmatpush1.msra.mxu0 0.0
        %3305 = vmatprep.subr.mxu0 0.0
        %3306 = vmatpush1.msra.mxu0 0.0
        %3307 = vmatprep.subr.mxu0 0.0
        %3308 = vmatpush1.msra.mxu0 0.0
        %3309 = vmatprep.subr.mxu0 0.0
        %3310 = vmatpush1.msra.mxu0 0.0
        %3311 = vmatprep.subr.mxu0 0.0
        %3312 = vmatpush1.msra.mxu0 0.0
        %3313 = vmatprep.mubr.f32.mxu0 0.0
        %3314 = vmatmul.mubr.f32.gmra.mrb[0].mxu0 %v3247
        %v3315 = vpop.f32.mrb[0].mxu0
        %v3316 = vadd.f32 %v3244, %v3315
        %v3317 = vpop.f32.mrb[0].mxu0
        %3318 = vdwg.mxu0
        %3319 = vst [vmem:[%s1021] sm:$0xff] %v3316
      $region124: #{longformer_forward.1} parent=115 // pred_fallthru
        _
      %p3320 = scmp.lt.s32.totalorder %s39, 1
      %s3321 = scalar_select %p3320, %s39, 1
      %s3322 = smul.addr %s3321, 8
      %s3323 = scalar_lea.vmem %s24, %s3322
      // Predicated region
      $region125: #{longformer_forward.1} parent=115 // pred_check
        %p3324 = pneg %p659
      $region126: #{longformer_forward.1} parent=115 // pred_check_branch
        %3326 = sbr.rel (%p3324) target = $region128
      $region127: #{longformer_forward.1} parent=115 // pred_region
        _
      $region128: #{longformer_forward.1} parent=115 // pred_fallthru
        _
    $region116: #{longformer_forward.1} parent=5 // pred_fallthru
      _
    %p3327 = scmp.le.s32.totalorder 2, %s30
    // Predicated region
    $region129: #{longformer_forward.1} parent=5 // pred_check
      %p3328 = pneg %p3327
    $region130: #{longformer_forward.1} parent=5 // pred_check_branch
      %3330 = sbr.rel (%p3328) target = $region132
    $region131: #{longformer_forward.1} parent=5 // pred_region
      %s3331 = ssub.s32 %s30, 2
      // Predicated region
      $region133: #{longformer_forward.1} parent=131 // pred_check
        %p3332 = pneg %p665
      $region134: #{longformer_forward.1} parent=131 // pred_check_branch
        %3334 = sbr.rel (%p3332) target = $region136
      $region135: #{longformer_forward.1} parent=131 // pred_region
        %p3335 = scmp.lt.s32.totalorder %s41, 1
        %s3336 = scalar_select %p3335, %s41, 1
        %s3337 = smul.addr %s3336, 8
        %s3338 = scalar_lea.vmem %s24, %s3337
      $region136: #{longformer_forward.1} parent=131 // pred_fallthru
        _
    $region132: #{longformer_forward.1} parent=5 // pred_fallthru
      _
  $region6: #{longformer_forward.1} parent=0 // loop_footer
    %s34 = sadd.s32 1, %s30
  $region7: #{longformer_forward.1} parent=0 // loop_footer_branch
    %29 = sbr.rel target = $region3
  $region8: #{longformer_forward.1} parent=0 // loop_exit
    _

</llo_original>
